<compile_context>
chip_gen: v6e
topology: v6e:2x2x1
jax: 0.10.0
libtpu: 0.0.40
codegen_flags: <defaults>
</compile_context>

<pallas_src>
import jax
import jax.numpy as jnp
from jax import lax
from jax.experimental import pallas as pl
from jax.experimental.pallas import tpu as pltpu


# ------------------------------ fused Pallas kernel ------------------------------------
def _fused_transition_kernel(x_ref, bn_ref, w1_ref, wdw_ref, bdw_ref, o_ref, ysc, nsc):
    # Lane-packed shapes:
    #   x_ref : (1, 4, Ho, Wo*Cin)   stride-2 phases of the input (phase = 2*pr + pc)
    #   bn_ref: (2, Wo*Cin)          [scale; shift] of folded eval BN, tiled Wo times
    #   w1_ref: (Wo*Cin, Wo*C)       block-diagonal 1x1 conv weight  kron(I_Wo, w1)
    #   wdw_ref: (11, 9, Wo*C)       depthwise 3x3 filters, tap-major, tiled Wo times
    #   bdw_ref: (11, Wo*C)          depthwise biases, tiled Wo times
    #   o_ref : (1, Ho, Wo*C)
    #   ysc   : (4, Ho+1, (Wo+1)*C)  padded stride-2 phase planes of y (top/left halo)
    #   nsc   : (2, Ho+2, (Wo+2)*C)  zero-padded nodes for the stride-1 node gates
    _, Ho, WC = o_ref.shape
    C = ysc.shape[2] - WC                       # (Wo+1)*C - Wo*C

    # ---- 1) BN + ReLU + 1x1 conv: one MXU matmul covering all 4 stride-2 phases -----
    xn = jnp.maximum(x_ref[0] * bn_ref[0:1, :] + bn_ref[1:2, :], 0.0)   # (4, Ho, Wo*Cin)
    y4 = jnp.dot(xn.reshape(4 * Ho, xn.shape[-1]), w1_ref[...],
                 preferred_element_type=jnp.float32)                    # (4*Ho, Wo*C)
    y4 = y4.reshape(4, Ho, WC)

    # ---- 2) halo <- -inf (identity of max), then scatter the phases into ysc --------
    for q in (0, 1):                            # padded ypad row 0 lives in row-phase 0
        ysc[q, 0:1, :] = jnp.full((1, WC + C), -jnp.inf, dtype=jnp.float32)
    for q in (0, 2):                            # padded ypad col 0 lives in col-phase 0
        ysc[q, :, 0:C] = jnp.full((Ho + 1, C), -jnp.inf, dtype=jnp.float32)
    for pr in range(2):
        for pc in range(2):
            # unpadded phase (pr,pc) lands in padded phase (1-pr,1-pc) at offset (pr,pc)
            ysc[2 * (1 - pr) + (1 - pc), pr:pr + Ho,
                pc * C:pc * C + WC] = y4[2 * pr + pc]

    taps = [(kh, kw) for kh in range(3) for kw in range(3)]

    def tap(kh, kw):        # tap(kh,kw)[oh, ow*C+c] = ypad[2*oh+kh, 2*ow+kw, c]
        return ysc[2 * (kh % 2) + (kw % 2),
                   kh // 2: kh // 2 + Ho,
                   (kw // 2) * C: (kw // 2) * C + WC]

    # ---- 3) MaxPool2d(3, 2, 1): max over the 9 taps while the halo is -inf ----------
    mx = tap(0, 0)
    for (kh, kw) in taps[1:]:
        mx = jnp.maximum(mx, tap(kh, kw))

    # ---- 4) switch the halo to 0 for the depthwise convolutions ---------------------
    # (kept strictly AFTER all maxpool tap reads; ordering guaranteed by ref program order)
    for q in (0, 1):
        ysc[q, 0:1, :] = jnp.zeros((1, WC + C), jnp.float32)
    for q in (0, 2):
        ysc[q, :, 0:C] = jnp.zeros((Ho + 1, C), jnp.float32)

    # ---- 5) 9 stride-2 depthwise 3x3 convs, tap-major (accumulators stay in vregs) --
    #   filter 0: max gate | 1..4: leaf gates | 5..8: leaf convs
    accs = [bdw_ref[f:f + 1, :] for f in range(9)]        # seed with bias (broadcasts)
    for t, (kh, kw) in enumerate(taps):
        tp = tap(kh, kw)                                   # load each tap exactly once
        for f in range(9):
            accs[f] = accs[f] + tp * wdw_ref[f, t:t + 1, :]

    out = mx * accs[0]                                     # max_out * max_gate
    n0 = accs[1] * accs[5] + accs[2] * accs[6]             # leaves 0+1
    n1 = accs[3] * accs[7] + accs[4] * accs[8]             # leaves 2+3

    # ---- 6) stride-1 3x3 depthwise gates on the two nodes ---------------------------
    zrow = jnp.zeros((1, WC + 2 * C), jnp.float32)
    zcol = jnp.zeros((Ho, C), jnp.float32)
    for i, nd in ((0, n0), (1, n1)):                       # halo strips only, no full fill
        nsc[i, 0:1, :] = zrow
        nsc[i, Ho + 1:Ho + 2, :] = zrow
        nsc[i, 1:Ho + 1, 0:C] = zcol
        nsc[i, 1:Ho + 1, WC + C:WC + 2 * C] = zcol
        nsc[i, 1:Ho + 1, C:C + WC] = nd

    g0 = bdw_ref[9:10, :]
    g1 = bdw_ref[10:11, :]
    for t, (kh, kw) in enumerate(taps):
        g0 = g0 + nsc[0, kh:kh + Ho, kw * C: kw * C + WC] * wdw_ref[9, t:t + 1, :]
        g1 = g1 + nsc[1, kh:kh + Ho, kw * C: kw * C + WC] * wdw_ref[10, t:t + 1, :]

    o_ref[0] = out + n0 * g0 + n1 * g1


# ------------------------------ host-side wrapper ---------------------------------------
def transition_forward(x_nchw, p, eps=1e-5):
    N, Cin, H, W = x_nchw.shape
    C = p["conv_w"].shape[0]
    assert H % 2 == 0 and W % 2 == 0
    Ho, Wo = H // 2, W // 2

    # fold BatchNorm (eval statistics) into scale/shift, tiled Wo x to match lane packing
    scale = p["bn_gamma"] / jnp.sqrt(p["bn_var"] + eps)
    shift = p["bn_beta"] - p["bn_mean"] * scale
    bn = jnp.stack([jnp.tile(scale, Wo), jnp.tile(shift, Wo)], axis=0)     # (2, Wo*Cin)

    # 1x1 conv as a lane-packed block-diagonal matmul weight: kron(I_Wo, w1)
    w1 = jnp.transpose(p["conv_w"][:, :, 0, 0], (1, 0))                    # (Cin, C)
    w1_block = jnp.kron(jnp.eye(Wo, dtype=jnp.float32), w1)                # (Wo*Cin, Wo*C)

    def fold(w4):      # (C,1,3,3) -> (9, Wo*C): tap-major rows, tiled Wo times on lanes
        return jnp.tile(jnp.transpose(w4[:, 0].reshape(C, 9), (1, 0)), (1, Wo))

    # pack the 11 depthwise filters / biases:
    #   0: maxgate(mb) | 1..4: pgates 0..3 (gbs 0..3) | 5..8: pconvs 0..3 (pbs 0..3)
    #   9..10: pgates 4..5 (gbs 4..5)  -- the stride-1 node gates
    wdw = jnp.stack(
        [fold(p["maxgate"])]
        + [fold(p["pgates"][..., f]) for f in range(4)]
        + [fold(p["pconvs"][..., f]) for f in range(4)]
        + [fold(p["pgates"][..., 4]), fold(p["pgates"][..., 5])], axis=0)  # (11,9,Wo*C)
    bdw = jnp.stack(
        [p["mb"]]
        + [p["gbs"][:, f] for f in range(4)]
        + [p["pbs"][:, f] for f in range(4)]
        + [p["gbs"][:, 4], p["gbs"][:, 5]], axis=0)                        # (11, C)
    bdw = jnp.tile(bdw, (1, Wo))                                           # (11, Wo*C)

    # stride-2 even/odd phase split + lane packing of the input (pure index plumbing)
    x_nhwc = jnp.transpose(x_nchw, (0, 2, 3, 1)).astype(jnp.float32)
    x_ph = (x_nhwc.reshape(N, Ho, 2, Wo, 2, Cin)
            .transpose(0, 2, 4, 1, 3, 5)
            .reshape(N, 4, Ho, Wo * Cin))

    flops = int(N * (3 * H * W * Cin + 2 * 4 * Ho * Wo * Cin * C
                     + Ho * Wo * C * (11 * 18 + 8 + 16)))
    bytes_accessed = int(4 * (x_ph.size + N * Ho * Wo * C
                              + bn.size + w1_block.size + wdw.size + bdw.size))

    out_packed = pl.pallas_call(
        _fused_transition_kernel,
        out_shape=jax.ShapeDtypeStruct((N, Ho, Wo * C), jnp.float32),
        grid_spec=pltpu.PrefetchScalarGridSpec(
            num_scalar_prefetch=0,
            grid=(N,),
            in_specs=[
                pl.BlockSpec((1, 4, Ho, Wo * Cin), lambda n: (n, 0, 0, 0)),
                pl.BlockSpec((2, Wo * Cin), lambda n: (0, 0)),
                pl.BlockSpec((Wo * Cin, Wo * C), lambda n: (0, 0)),
                pl.BlockSpec((11, 9, Wo * C), lambda n: (0, 0, 0)),
                pl.BlockSpec((11, Wo * C), lambda n: (0, 0)),
            ],
            out_specs=pl.BlockSpec((1, Ho, Wo * C), lambda n: (n, 0, 0)),
            scratch_shapes=[
                pltpu.VMEM((4, Ho + 1, (Wo + 1) * C), jnp.float32),
                pltpu.VMEM((2, Ho + 2, (Wo + 2) * C), jnp.float32),
            ],
        ),
        compiler_params=pltpu.CompilerParams(dimension_semantics=("parallel",)),
        cost_estimate=pl.CostEstimate(flops=flops, transcendentals=0,
                                      bytes_accessed=bytes_accessed),
    )(x_ph, bn, w1_block, wdw, bdw)

    out_nhwc = out_packed.reshape(N, Ho, Wo, C)
    return jnp.transpose(out_nhwc, (0, 3, 1, 2))                           # back to NCHW


# ------------------------------ parameters (deterministic synthetic init) ---------------
def init_params(key, Cin, Cout, k=3, leaves=4, levels=2):
    ks = jax.random.split(key, 11)
    p = {}
    p["bn_gamma"] = 1.0 + 0.1 * jax.random.normal(ks[0], (Cin,), jnp.float32)
    p["bn_beta"] = 0.1 * jax.random.normal(ks[1], (Cin,), jnp.float32)
    p["bn_mean"] = 0.1 * jax.random.normal(ks[2], (Cin,), jnp.float32)
    p["bn_var"] = jax.random.uniform(ks[3], (Cin,), jnp.float32, 0.5, 1.5)
    # torch layouts from the module __init__:
    p["conv_w"] = 0.2 * jax.random.normal(ks[4], (Cout, Cin, 1, 1), jnp.float32)
    p["maxgate"] = 0.2 * jax.random.normal(ks[5], (Cout, 1, k, k), jnp.float32)
    p["mb"] = 0.1 * jax.random.normal(ks[6], (Cout,), jnp.float32)
    p["pconvs"] = 0.2 * jax.random.normal(ks[7], (Cout, 1, k, k, leaves), jnp.float32)
    p["pbs"] = 0.1 * jax.random.normal(ks[8], (Cout, leaves), jnp.float32)
    p["pgates"] = 0.2 * jax.random.normal(ks[9], (Cout, 1, k, k, leaves + levels), jnp.float32)
    p["gbs"] = 0.1 * jax.random.normal(ks[10], (Cout, leaves + levels), jnp.float32)
    return p


# ------------------------------ pure-JAX reference (correctness check) ------------------
def reference_forward(x_nchw, p, eps=1e-5):
    C = p["conv_w"].shape[0]
    x = jnp.transpose(x_nchw, (0, 2, 3, 1)).astype(jnp.float32)
    scale = p["bn_gamma"] / jnp.sqrt(p["bn_var"] + eps)
    shift = p["bn_beta"] - p["bn_mean"] * scale
    xn = jnp.maximum(x * scale + shift, 0.0)
    y = jnp.einsum("nhwi,io->nhwo", xn, jnp.transpose(p["conv_w"][:, :, 0, 0], (1, 0)))

    def dwconv(inp, w4, b, stride):
        filt = jnp.transpose(w4, (2, 3, 1, 0))                      # (3,3,1,C) HWIO
        out = lax.conv_general_dilated(
            inp, filt, (stride, stride), ((1, 1), (1, 1)),
            dimension_numbers=("NHWC", "HWIO", "NHWC"), feature_group_count=C)
        return out + b.reshape(1, 1, 1, C)

    max_out = lax.reduce_window(y, -jnp.inf, lax.max, (1, 3, 3, 1), (1, 2, 2, 1),
                                ((0, 0), (1, 1), (1, 1), (0, 0)))
    out = max_out * dwconv(y, p["maxgate"], p["mb"], 2)
    leaves = []
    for c in range(2):
        g1 = dwconv(y, p["pgates"][..., 2 * c], p["gbs"][:, 2 * c], 2)
        g2 = dwconv(y, p["pgates"][..., 2 * c + 1], p["gbs"][:, 2 * c + 1], 2)
        q1 = dwconv(y, p["pconvs"][..., 2 * c], p["pbs"][:, 2 * c], 2)
        q2 = dwconv(y, p["pconvs"][..., 2 * c + 1], p["pbs"][:, 2 * c + 1], 2)
        leaves += [g1 * q1, g2 * q2]
    nodes = [leaves[0] + leaves[1], leaves[2] + leaves[3]]
    g1 = dwconv(nodes[0], p["pgates"][..., 4], p["gbs"][:, 4], 1)
    g2 = dwconv(nodes[1], p["pgates"][..., 5], p["gbs"][:, 5], 1)
    out = out + nodes[0] * g1 + nodes[1] * g2
    return jnp.transpose(out, (0, 3, 1, 2))


if __name__ == "__main__":
    key = jax.random.PRNGKey(0)
    k_x, k_p = jax.random.split(key)
    N, Cin, H, W = 2, 8, 16, 16
    Cout = 8
    x = jax.random.normal(k_x, (N, Cin, H, W), dtype=jnp.float32)
    params = init_params(k_p, Cin, Cout)

    out = jax.jit(lambda a: transition_forward(a, params))(x)
    out = jax.block_until_ready(out)

    ref = reference_forward(x, params)
    assert out.shape == (N, Cout, H // 2, W // 2), out.shape
    err = float(jnp.max(jnp.abs(out - ref)))
    assert jnp.allclose(out, ref, rtol=2e-3, atol=2e-3), err
    print("KERNEL_OK")
</pallas_src>

<mosaic_0001>
module attributes {stable_mosaic.version = 11 : i64} {
  func.func @_fused_transition_kernel(%arg0: i32, %arg1: memref<1x4x8x64xf32, #tpu.memory_space<vmem>>, %arg2: memref<2x64xf32, #tpu.memory_space<vmem>>, %arg3: memref<64x64xf32, #tpu.memory_space<vmem>>, %arg4: memref<11x9x64xf32, #tpu.memory_space<vmem>>, %arg5: memref<11x64xf32, #tpu.memory_space<vmem>>, %arg6: memref<1x8x64xf32, #tpu.memory_space<vmem>>, %arg7: memref<4x9x72xf32, #tpu.memory_space<vmem>>, %arg8: memref<2x10x80xf32, #tpu.memory_space<vmem>>) attributes {dimension_semantics = [#tpu.dimension_semantics<parallel>], iteration_bounds = array<i64: 2>, scalar_prefetch = 0 : i64, scratch_operands = 2 : i64, tpu.core_type = #tpu.core_type<tc>, window_params = [{transform_indices = @transform_0, window_bounds = array<i64: 1, 4, 8, 64>}, {pipeline_mode = #tpu.pipeline_mode<synchronous>, transform_indices = @transform_1, window_bounds = array<i64: 2, 64>}, {pipeline_mode = #tpu.pipeline_mode<synchronous>, transform_indices = @transform_2, window_bounds = array<i64: 64, 64>}, {pipeline_mode = #tpu.pipeline_mode<synchronous>, transform_indices = @transform_3, window_bounds = array<i64: 11, 9, 64>}, {pipeline_mode = #tpu.pipeline_mode<synchronous>, transform_indices = @transform_4, window_bounds = array<i64: 11, 64>}, {transform_indices = @transform_5, window_bounds = array<i64: 1, 8, 64>}]} {
    %c0 = arith.constant 0 : index
    %c0_0 = arith.constant 0 : index
    %c0_1 = arith.constant 0 : index
    %c0_2 = arith.constant 0 : index
    %0 = vector.load %arg1[%c0, %c0_0, %c0_1, %c0_2] : memref<1x4x8x64xf32, #tpu.memory_space<vmem>>, vector<1x4x8x64xf32>
    %1 = vector.shape_cast %0 : vector<1x4x8x64xf32> to vector<4x8x64xf32>
    %c0_3 = arith.constant 0 : index
    %c0_4 = arith.constant 0 : index
    %2 = vector.load %arg2[%c0_3, %c0_4] : memref<2x64xf32, #tpu.memory_space<vmem>>, vector<1x64xf32>
    %3 = vector.shape_cast %2 : vector<1x64xf32> to vector<1x1x64xf32>
    %4 = vector.broadcast %3 : vector<1x1x64xf32> to vector<4x8x64xf32>
    %5 = arith.mulf %1, %4 : vector<4x8x64xf32>
    %c1 = arith.constant 1 : index
    %c0_5 = arith.constant 0 : index
    %6 = vector.load %arg2[%c1, %c0_5] : memref<2x64xf32, #tpu.memory_space<vmem>>, vector<1x64xf32>
    %7 = vector.shape_cast %6 : vector<1x64xf32> to vector<1x1x64xf32>
    %8 = vector.broadcast %7 : vector<1x1x64xf32> to vector<4x8x64xf32>
    %9 = arith.addf %5, %8 : vector<4x8x64xf32>
    %cst = arith.constant 0.000000e+00 : f32
    %10 = vector.broadcast %cst : f32 to vector<4x8x64xf32>
    %11 = arith.maximumf %9, %10 : vector<4x8x64xf32>
    %12 = vector.shape_cast %11 : vector<4x8x64xf32> to vector<32x64xf32>
    %c0_6 = arith.constant 0 : index
    %c0_7 = arith.constant 0 : index
    %13 = vector.load %arg3[%c0_6, %c0_7] : memref<64x64xf32, #tpu.memory_space<vmem>>, vector<64x64xf32>
    %cst_8 = arith.constant dense<0.000000e+00> : vector<32x64xf32>
    %14 = tpu.matmul %12, %13, %cst_8 {dimension_numbers = #tpu.dot_dimension_numbers<[1], [0], [0], [1], [0, 0, 1, 1], [], []>} : vector<32x64xf32>, vector<64x64xf32>, vector<32x64xf32> -> vector<32x64xf32>
    %15 = vector.shape_cast %14 : vector<32x64xf32> to vector<4x8x64xf32>
    %cst_9 = arith.constant 0xFF800000 : f32
    %16 = vector.broadcast %cst_9 : f32 to vector<1x72xf32>
    %c0_10 = arith.constant 0 : index
    %c0_11 = arith.constant 0 : index
    %c0_12 = arith.constant 0 : index
    %17 = vector.load %arg7[%c0_10, %c0_11, %c0_12] : memref<4x9x72xf32, #tpu.memory_space<vmem>>, vector<1x1x72xf32>
    %18 = vector.shape_cast %17 : vector<1x1x72xf32> to vector<1x72xf32>
    %19 = vector.shape_cast %16 : vector<1x72xf32> to vector<1x1x72xf32>
    tpu.vector_store %arg7[%c0_10, %c0_11, %c0_12], %19 {strides = array<i32>} : memref<4x9x72xf32, #tpu.memory_space<vmem>>, vector<1x1x72xf32>,
    %cst_13 = arith.constant 0xFF800000 : f32
    %20 = vector.broadcast %cst_13 : f32 to vector<1x72xf32>
    %c1_14 = arith.constant 1 : index
    %c0_15 = arith.constant 0 : index
    %c0_16 = arith.constant 0 : index
    %21 = vector.load %arg7[%c1_14, %c0_15, %c0_16] : memref<4x9x72xf32, #tpu.memory_space<vmem>>, vector<1x1x72xf32>
    %22 = vector.shape_cast %21 : vector<1x1x72xf32> to vector<1x72xf32>
    %23 = vector.shape_cast %20 : vector<1x72xf32> to vector<1x1x72xf32>
    tpu.vector_store %arg7[%c1_14, %c0_15, %c0_16], %23 {strides = array<i32>} : memref<4x9x72xf32, #tpu.memory_space<vmem>>, vector<1x1x72xf32>,
    %cst_17 = arith.constant 0xFF800000 : f32
    %24 = vector.broadcast %cst_17 : f32 to vector<9x8xf32>
    %c0_18 = arith.constant 0 : index
    %c0_19 = arith.constant 0 : index
    %c0_20 = arith.constant 0 : index
    %25 = vector.load %arg7[%c0_18, %c0_19, %c0_20] : memref<4x9x72xf32, #tpu.memory_space<vmem>>, vector<1x9x8xf32>
    %26 = vector.shape_cast %25 : vector<1x9x8xf32> to vector<9x8xf32>
    %27 = vector.shape_cast %24 : vector<9x8xf32> to vector<1x9x8xf32>
    tpu.vector_store %arg7[%c0_18, %c0_19, %c0_20], %27 {strides = array<i32>} : memref<4x9x72xf32, #tpu.memory_space<vmem>>, vector<1x9x8xf32>,
    %cst_21 = arith.constant 0xFF800000 : f32
    %28 = vector.broadcast %cst_21 : f32 to vector<9x8xf32>
    %c2 = arith.constant 2 : index
    %c0_22 = arith.constant 0 : index
    %c0_23 = arith.constant 0 : index
    %29 = vector.load %arg7[%c2, %c0_22, %c0_23] : memref<4x9x72xf32, #tpu.memory_space<vmem>>, vector<1x9x8xf32>
    %30 = vector.shape_cast %29 : vector<1x9x8xf32> to vector<9x8xf32>
    %31 = vector.shape_cast %28 : vector<9x8xf32> to vector<1x9x8xf32>
    tpu.vector_store %arg7[%c2, %c0_22, %c0_23], %31 {strides = array<i32>} : memref<4x9x72xf32, #tpu.memory_space<vmem>>, vector<1x9x8xf32>,
    %32 = vector.extract_strided_slice %15 {offsets = [0, 0, 0], sizes = [1, 8, 64], strides = [1, 1, 1]} : vector<4x8x64xf32> to vector<1x8x64xf32>
    %33 = vector.shape_cast %32 : vector<1x8x64xf32> to vector<8x64xf32>
    %c3 = arith.constant 3 : index
    %c0_24 = arith.constant 0 : index
    %c0_25 = arith.constant 0 : index
    %34 = vector.load %arg7[%c3, %c0_24, %c0_25] : memref<4x9x72xf32, #tpu.memory_space<vmem>>, vector<1x8x64xf32>
    %35 = vector.shape_cast %34 : vector<1x8x64xf32> to vector<8x64xf32>
    %36 = vector.shape_cast %33 : vector<8x64xf32> to vector<1x8x64xf32>
    tpu.vector_store %arg7[%c3, %c0_24, %c0_25], %36 {strides = array<i32>} : memref<4x9x72xf32, #tpu.memory_space<vmem>>, vector<1x8x64xf32>,
    %37 = vector.extract_strided_slice %15 {offsets = [1, 0, 0], sizes = [1, 8, 64], strides = [1, 1, 1]} : vector<4x8x64xf32> to vector<1x8x64xf32>
    %38 = vector.shape_cast %37 : vector<1x8x64xf32> to vector<8x64xf32>
    %c2_26 = arith.constant 2 : index
    %c0_27 = arith.constant 0 : index
    %c8 = arith.constant 8 : index
    %39 = vector.load %arg7[%c2_26, %c0_27, %c8] : memref<4x9x72xf32, #tpu.memory_space<vmem>>, vector<1x8x64xf32>
    %40 = vector.shape_cast %39 : vector<1x8x64xf32> to vector<8x64xf32>
    %41 = vector.shape_cast %38 : vector<8x64xf32> to vector<1x8x64xf32>
    tpu.vector_store %arg7[%c2_26, %c0_27, %c8], %41 {strides = array<i32>} : memref<4x9x72xf32, #tpu.memory_space<vmem>>, vector<1x8x64xf32>,
    %42 = vector.extract_strided_slice %15 {offsets = [2, 0, 0], sizes = [1, 8, 64], strides = [1, 1, 1]} : vector<4x8x64xf32> to vector<1x8x64xf32>
    %43 = vector.shape_cast %42 : vector<1x8x64xf32> to vector<8x64xf32>
    %c1_28 = arith.constant 1 : index
    %c1_29 = arith.constant 1 : index
    %c0_30 = arith.constant 0 : index
    %44 = vector.load %arg7[%c1_28, %c1_29, %c0_30] : memref<4x9x72xf32, #tpu.memory_space<vmem>>, vector<1x8x64xf32>
    %45 = vector.shape_cast %44 : vector<1x8x64xf32> to vector<8x64xf32>
    %46 = vector.shape_cast %43 : vector<8x64xf32> to vector<1x8x64xf32>
    tpu.vector_store %arg7[%c1_28, %c1_29, %c0_30], %46 {strides = array<i32>} : memref<4x9x72xf32, #tpu.memory_space<vmem>>, vector<1x8x64xf32>,
    %47 = vector.extract_strided_slice %15 {offsets = [3, 0, 0], sizes = [1, 8, 64], strides = [1, 1, 1]} : vector<4x8x64xf32> to vector<1x8x64xf32>
    %48 = vector.shape_cast %47 : vector<1x8x64xf32> to vector<8x64xf32>
    %c0_31 = arith.constant 0 : index
    %c1_32 = arith.constant 1 : index
    %c8_33 = arith.constant 8 : index
    %49 = vector.load %arg7[%c0_31, %c1_32, %c8_33] : memref<4x9x72xf32, #tpu.memory_space<vmem>>, vector<1x8x64xf32>
    %50 = vector.shape_cast %49 : vector<1x8x64xf32> to vector<8x64xf32>
    %51 = vector.shape_cast %48 : vector<8x64xf32> to vector<1x8x64xf32>
    tpu.vector_store %arg7[%c0_31, %c1_32, %c8_33], %51 {strides = array<i32>} : memref<4x9x72xf32, #tpu.memory_space<vmem>>, vector<1x8x64xf32>,
    %c0_34 = arith.constant 0 : index
    %c0_35 = arith.constant 0 : index
    %c0_36 = arith.constant 0 : index
    %52 = vector.load %arg7[%c0_34, %c0_35, %c0_36] : memref<4x9x72xf32, #tpu.memory_space<vmem>>, vector<1x8x64xf32>
    %53 = vector.shape_cast %52 : vector<1x8x64xf32> to vector<8x64xf32>
    %c1_37 = arith.constant 1 : index
    %c0_38 = arith.constant 0 : index
    %c0_39 = arith.constant 0 : index
    %54 = vector.load %arg7[%c1_37, %c0_38, %c0_39] : memref<4x9x72xf32, #tpu.memory_space<vmem>>, vector<1x8x64xf32>
    %55 = vector.shape_cast %54 : vector<1x8x64xf32> to vector<8x64xf32>
    %56 = arith.maximumf %53, %55 : vector<8x64xf32>
    %c0_40 = arith.constant 0 : index
    %c0_41 = arith.constant 0 : index
    %c8_42 = arith.constant 8 : index
    %57 = vector.load %arg7[%c0_40, %c0_41, %c8_42] : memref<4x9x72xf32, #tpu.memory_space<vmem>>, vector<1x8x64xf32>
    %58 = vector.shape_cast %57 : vector<1x8x64xf32> to vector<8x64xf32>
    %59 = arith.maximumf %56, %58 : vector<8x64xf32>
    %c2_43 = arith.constant 2 : index
    %c0_44 = arith.constant 0 : index
    %c0_45 = arith.constant 0 : index
    %60 = vector.load %arg7[%c2_43, %c0_44, %c0_45] : memref<4x9x72xf32, #tpu.memory_space<vmem>>, vector<1x8x64xf32>
    %61 = vector.shape_cast %60 : vector<1x8x64xf32> to vector<8x64xf32>
    %62 = arith.maximumf %59, %61 : vector<8x64xf32>
    %c3_46 = arith.constant 3 : index
    %c0_47 = arith.constant 0 : index
    %c0_48 = arith.constant 0 : index
    %63 = vector.load %arg7[%c3_46, %c0_47, %c0_48] : memref<4x9x72xf32, #tpu.memory_space<vmem>>, vector<1x8x64xf32>
    %64 = vector.shape_cast %63 : vector<1x8x64xf32> to vector<8x64xf32>
    %65 = arith.maximumf %62, %64 : vector<8x64xf32>
    %c2_49 = arith.constant 2 : index
    %c0_50 = arith.constant 0 : index
    %c8_51 = arith.constant 8 : index
    %66 = vector.load %arg7[%c2_49, %c0_50, %c8_51] : memref<4x9x72xf32, #tpu.memory_space<vmem>>, vector<1x8x64xf32>
    %67 = vector.shape_cast %66 : vector<1x8x64xf32> to vector<8x64xf32>
    %68 = arith.maximumf %65, %67 : vector<8x64xf32>
    %c0_52 = arith.constant 0 : index
    %c1_53 = arith.constant 1 : index
    %c0_54 = arith.constant 0 : index
    %69 = vector.load %arg7[%c0_52, %c1_53, %c0_54] : memref<4x9x72xf32, #tpu.memory_space<vmem>>, vector<1x8x64xf32>
    %70 = vector.shape_cast %69 : vector<1x8x64xf32> to vector<8x64xf32>
    %71 = arith.maximumf %68, %70 : vector<8x64xf32>
    %c1_55 = arith.constant 1 : index
    %c1_56 = arith.constant 1 : index
    %c0_57 = arith.constant 0 : index
    %72 = vector.load %arg7[%c1_55, %c1_56, %c0_57] : memref<4x9x72xf32, #tpu.memory_space<vmem>>, vector<1x8x64xf32>
    %73 = vector.shape_cast %72 : vector<1x8x64xf32> to vector<8x64xf32>
    %74 = arith.maximumf %71, %73 : vector<8x64xf32>
    %c0_58 = arith.constant 0 : index
    %c1_59 = arith.constant 1 : index
    %c8_60 = arith.constant 8 : index
    %75 = vector.load %arg7[%c0_58, %c1_59, %c8_60] : memref<4x9x72xf32, #tpu.memory_space<vmem>>, vector<1x8x64xf32>
    %76 = vector.shape_cast %75 : vector<1x8x64xf32> to vector<8x64xf32>
    %77 = arith.maximumf %74, %76 : vector<8x64xf32>
    %cst_61 = arith.constant 0.000000e+00 : f32
    %78 = vector.broadcast %cst_61 : f32 to vector<1x72xf32>
    %c0_62 = arith.constant 0 : index
    %c0_63 = arith.constant 0 : index
    %c0_64 = arith.constant 0 : index
    %79 = vector.load %arg7[%c0_62, %c0_63, %c0_64] : memref<4x9x72xf32, #tpu.memory_space<vmem>>, vector<1x1x72xf32>
    %80 = vector.shape_cast %79 : vector<1x1x72xf32> to vector<1x72xf32>
    %81 = vector.shape_cast %78 : vector<1x72xf32> to vector<1x1x72xf32>
    tpu.vector_store %arg7[%c0_62, %c0_63, %c0_64], %81 {strides = array<i32>} : memref<4x9x72xf32, #tpu.memory_space<vmem>>, vector<1x1x72xf32>,
    %cst_65 = arith.constant 0.000000e+00 : f32
    %82 = vector.broadcast %cst_65 : f32 to vector<1x72xf32>
    %c1_66 = arith.constant 1 : index
    %c0_67 = arith.constant 0 : index
    %c0_68 = arith.constant 0 : index
    %83 = vector.load %arg7[%c1_66, %c0_67, %c0_68] : memref<4x9x72xf32, #tpu.memory_space<vmem>>, vector<1x1x72xf32>
    %84 = vector.shape_cast %83 : vector<1x1x72xf32> to vector<1x72xf32>
    %85 = vector.shape_cast %82 : vector<1x72xf32> to vector<1x1x72xf32>
    tpu.vector_store %arg7[%c1_66, %c0_67, %c0_68], %85 {strides = array<i32>} : memref<4x9x72xf32, #tpu.memory_space<vmem>>, vector<1x1x72xf32>,
    %cst_69 = arith.constant 0.000000e+00 : f32
    %86 = vector.broadcast %cst_69 : f32 to vector<9x8xf32>
    %c0_70 = arith.constant 0 : index
    %c0_71 = arith.constant 0 : index
    %c0_72 = arith.constant 0 : index
    %87 = vector.load %arg7[%c0_70, %c0_71, %c0_72] : memref<4x9x72xf32, #tpu.memory_space<vmem>>, vector<1x9x8xf32>
    %88 = vector.shape_cast %87 : vector<1x9x8xf32> to vector<9x8xf32>
    %89 = vector.shape_cast %86 : vector<9x8xf32> to vector<1x9x8xf32>
    tpu.vector_store %arg7[%c0_70, %c0_71, %c0_72], %89 {strides = array<i32>} : memref<4x9x72xf32, #tpu.memory_space<vmem>>, vector<1x9x8xf32>,
    %cst_73 = arith.constant 0.000000e+00 : f32
    %90 = vector.broadcast %cst_73 : f32 to vector<9x8xf32>
    %c2_74 = arith.constant 2 : index
    %c0_75 = arith.constant 0 : index
    %c0_76 = arith.constant 0 : index
    %91 = vector.load %arg7[%c2_74, %c0_75, %c0_76] : memref<4x9x72xf32, #tpu.memory_space<vmem>>, vector<1x9x8xf32>
    %92 = vector.shape_cast %91 : vector<1x9x8xf32> to vector<9x8xf32>
    %93 = vector.shape_cast %90 : vector<9x8xf32> to vector<1x9x8xf32>
    tpu.vector_store %arg7[%c2_74, %c0_75, %c0_76], %93 {strides = array<i32>} : memref<4x9x72xf32, #tpu.memory_space<vmem>>, vector<1x9x8xf32>,
    %c0_77 = arith.constant 0 : index
    %c0_78 = arith.constant 0 : index
    %94 = vector.load %arg5[%c0_77, %c0_78] : memref<11x64xf32, #tpu.memory_space<vmem>>, vector<1x64xf32>
    %c1_79 = arith.constant 1 : index
    %c0_80 = arith.constant 0 : index
    %95 = vector.load %arg5[%c1_79, %c0_80] : memref<11x64xf32, #tpu.memory_space<vmem>>, vector<1x64xf32>
    %c2_81 = arith.constant 2 : index
    %c0_82 = arith.constant 0 : index
    %96 = vector.load %arg5[%c2_81, %c0_82] : memref<11x64xf32, #tpu.memory_space<vmem>>, vector<1x64xf32>
    %c3_83 = arith.constant 3 : index
    %c0_84 = arith.constant 0 : index
    %97 = vector.load %arg5[%c3_83, %c0_84] : memref<11x64xf32, #tpu.memory_space<vmem>>, vector<1x64xf32>
    %c4 = arith.constant 4 : index
    %c0_85 = arith.constant 0 : index
    %98 = vector.load %arg5[%c4, %c0_85] : memref<11x64xf32, #tpu.memory_space<vmem>>, vector<1x64xf32>
    %c5 = arith.constant 5 : index
    %c0_86 = arith.constant 0 : index
    %99 = vector.load %arg5[%c5, %c0_86] : memref<11x64xf32, #tpu.memory_space<vmem>>, vector<1x64xf32>
    %c6 = arith.constant 6 : index
    %c0_87 = arith.constant 0 : index
    %100 = vector.load %arg5[%c6, %c0_87] : memref<11x64xf32, #tpu.memory_space<vmem>>, vector<1x64xf32>
    %c7 = arith.constant 7 : index
    %c0_88 = arith.constant 0 : index
    %101 = vector.load %arg5[%c7, %c0_88] : memref<11x64xf32, #tpu.memory_space<vmem>>, vector<1x64xf32>
    %c8_89 = arith.constant 8 : index
    %c0_90 = arith.constant 0 : index
    %102 = vector.load %arg5[%c8_89, %c0_90] : memref<11x64xf32, #tpu.memory_space<vmem>>, vector<1x64xf32>
    %c0_91 = arith.constant 0 : index
    %c0_92 = arith.constant 0 : index
    %c0_93 = arith.constant 0 : index
    %103 = vector.load %arg7[%c0_91, %c0_92, %c0_93] : memref<4x9x72xf32, #tpu.memory_space<vmem>>, vector<1x8x64xf32>
    %104 = vector.shape_cast %103 : vector<1x8x64xf32> to vector<8x64xf32>
    %c0_94 = arith.constant 0 : index
    %c0_95 = arith.constant 0 : index
    %c0_96 = arith.constant 0 : index
    %105 = vector.load %arg4[%c0_94, %c0_95, %c0_96] : memref<11x9x64xf32, #tpu.memory_space<vmem>>, vector<1x1x64xf32>
    %106 = vector.shape_cast %105 : vector<1x1x64xf32> to vector<1x64xf32>
    %107 = vector.broadcast %106 : vector<1x64xf32> to vector<8x64xf32>
    %108 = arith.mulf %104, %107 : vector<8x64xf32>
    %109 = vector.broadcast %94 : vector<1x64xf32> to vector<8x64xf32>
    %110 = arith.addf %109, %108 : vector<8x64xf32>
    %c1_97 = arith.constant 1 : index
    %c0_98 = arith.constant 0 : index
    %c0_99 = arith.constant 0 : index
    %111 = vector.load %arg4[%c1_97, %c0_98, %c0_99] : memref<11x9x64xf32, #tpu.memory_space<vmem>>, vector<1x1x64xf32>
    %112 = vector.shape_cast %111 : vector<1x1x64xf32> to vector<1x64xf32>
    %113 = vector.broadcast %112 : vector<1x64xf32> to vector<8x64xf32>
    %114 = arith.mulf %104, %113 : vector<8x64xf32>
    %115 = vector.broadcast %95 : vector<1x64xf32> to vector<8x64xf32>
    %116 = arith.addf %115, %114 : vector<8x64xf32>
    %c2_100 = arith.constant 2 : index
    %c0_101 = arith.constant 0 : index
    %c0_102 = arith.constant 0 : index
    %117 = vector.load %arg4[%c2_100, %c0_101, %c0_102] : memref<11x9x64xf32, #tpu.memory_space<vmem>>, vector<1x1x64xf32>
    %118 = vector.shape_cast %117 : vector<1x1x64xf32> to vector<1x64xf32>
    %119 = vector.broadcast %118 : vector<1x64xf32> to vector<8x64xf32>
    %120 = arith.mulf %104, %119 : vector<8x64xf32>
    %121 = vector.broadcast %96 : vector<1x64xf32> to vector<8x64xf32>
    %122 = arith.addf %121, %120 : vector<8x64xf32>
    %c3_103 = arith.constant 3 : index
    %c0_104 = arith.constant 0 : index
    %c0_105 = arith.constant 0 : index
    %123 = vector.load %arg4[%c3_103, %c0_104, %c0_105] : memref<11x9x64xf32, #tpu.memory_space<vmem>>, vector<1x1x64xf32>
    %124 = vector.shape_cast %123 : vector<1x1x64xf32> to vector<1x64xf32>
    %125 = vector.broadcast %124 : vector<1x64xf32> to vector<8x64xf32>
    %126 = arith.mulf %104, %125 : vector<8x64xf32>
    %127 = vector.broadcast %97 : vector<1x64xf32> to vector<8x64xf32>
    %128 = arith.addf %127, %126 : vector<8x64xf32>
    %c4_106 = arith.constant 4 : index
    %c0_107 = arith.constant 0 : index
    %c0_108 = arith.constant 0 : index
    %129 = vector.load %arg4[%c4_106, %c0_107, %c0_108] : memref<11x9x64xf32, #tpu.memory_space<vmem>>, vector<1x1x64xf32>
    %130 = vector.shape_cast %129 : vector<1x1x64xf32> to vector<1x64xf32>
    %131 = vector.broadcast %130 : vector<1x64xf32> to vector<8x64xf32>
    %132 = arith.mulf %104, %131 : vector<8x64xf32>
    %133 = vector.broadcast %98 : vector<1x64xf32> to vector<8x64xf32>
    %134 = arith.addf %133, %132 : vector<8x64xf32>
    %c5_109 = arith.constant 5 : index
    %c0_110 = arith.constant 0 : index
    %c0_111 = arith.constant 0 : index
    %135 = vector.load %arg4[%c5_109, %c0_110, %c0_111] : memref<11x9x64xf32, #tpu.memory_space<vmem>>, vector<1x1x64xf32>
    %136 = vector.shape_cast %135 : vector<1x1x64xf32> to vector<1x64xf32>
    %137 = vector.broadcast %136 : vector<1x64xf32> to vector<8x64xf32>
    %138 = arith.mulf %104, %137 : vector<8x64xf32>
    %139 = vector.broadcast %99 : vector<1x64xf32> to vector<8x64xf32>
    %140 = arith.addf %139, %138 : vector<8x64xf32>
    %c6_112 = arith.constant 6 : index
    %c0_113 = arith.constant 0 : index
    %c0_114 = arith.constant 0 : index
    %141 = vector.load %arg4[%c6_112, %c0_113, %c0_114] : memref<11x9x64xf32, #tpu.memory_space<vmem>>, vector<1x1x64xf32>
    %142 = vector.shape_cast %141 : vector<1x1x64xf32> to vector<1x64xf32>
    %143 = vector.broadcast %142 : vector<1x64xf32> to vector<8x64xf32>
    %144 = arith.mulf %104, %143 : vector<8x64xf32>
    %145 = vector.broadcast %100 : vector<1x64xf32> to vector<8x64xf32>
    %146 = arith.addf %145, %144 : vector<8x64xf32>
    %c7_115 = arith.constant 7 : index
    %c0_116 = arith.constant 0 : index
    %c0_117 = arith.constant 0 : index
    %147 = vector.load %arg4[%c7_115, %c0_116, %c0_117] : memref<11x9x64xf32, #tpu.memory_space<vmem>>, vector<1x1x64xf32>
    %148 = vector.shape_cast %147 : vector<1x1x64xf32> to vector<1x64xf32>
    %149 = vector.broadcast %148 : vector<1x64xf32> to vector<8x64xf32>
    %150 = arith.mulf %104, %149 : vector<8x64xf32>
    %151 = vector.broadcast %101 : vector<1x64xf32> to vector<8x64xf32>
    %152 = arith.addf %151, %150 : vector<8x64xf32>
    %c8_118 = arith.constant 8 : index
    %c0_119 = arith.constant 0 : index
    %c0_120 = arith.constant 0 : index
    %153 = vector.load %arg4[%c8_118, %c0_119, %c0_120] : memref<11x9x64xf32, #tpu.memory_space<vmem>>, vector<1x1x64xf32>
    %154 = vector.shape_cast %153 : vector<1x1x64xf32> to vector<1x64xf32>
    %155 = vector.broadcast %154 : vector<1x64xf32> to vector<8x64xf32>
    %156 = arith.mulf %104, %155 : vector<8x64xf32>
    %157 = vector.broadcast %102 : vector<1x64xf32> to vector<8x64xf32>
    %158 = arith.addf %157, %156 : vector<8x64xf32>
    %c1_121 = arith.constant 1 : index
    %c0_122 = arith.constant 0 : index
    %c0_123 = arith.constant 0 : index
    %159 = vector.load %arg7[%c1_121, %c0_122, %c0_123] : memref<4x9x72xf32, #tpu.memory_space<vmem>>, vector<1x8x64xf32>
    %160 = vector.shape_cast %159 : vector<1x8x64xf32> to vector<8x64xf32>
    %c0_124 = arith.constant 0 : index
    %c1_125 = arith.constant 1 : index
    %c0_126 = arith.constant 0 : index
    %161 = vector.load %arg4[%c0_124, %c1_125, %c0_126] : memref<11x9x64xf32, #tpu.memory_space<vmem>>, vector<1x1x64xf32>
    %162 = vector.shape_cast %161 : vector<1x1x64xf32> to vector<1x64xf32>
    %163 = vector.broadcast %162 : vector<1x64xf32> to vector<8x64xf32>
    %164 = arith.mulf %160, %163 : vector<8x64xf32>
    %165 = arith.addf %110, %164 : vector<8x64xf32>
    %c1_127 = arith.constant 1 : index
    %c1_128 = arith.constant 1 : index
    %c0_129 = arith.constant 0 : index
    %166 = vector.load %arg4[%c1_127, %c1_128, %c0_129] : memref<11x9x64xf32, #tpu.memory_space<vmem>>, vector<1x1x64xf32>
    %167 = vector.shape_cast %166 : vector<1x1x64xf32> to vector<1x64xf32>
    %168 = vector.broadcast %167 : vector<1x64xf32> to vector<8x64xf32>
    %169 = arith.mulf %160, %168 : vector<8x64xf32>
    %170 = arith.addf %116, %169 : vector<8x64xf32>
    %c2_130 = arith.constant 2 : index
    %c1_131 = arith.constant 1 : index
    %c0_132 = arith.constant 0 : index
    %171 = vector.load %arg4[%c2_130, %c1_131, %c0_132] : memref<11x9x64xf32, #tpu.memory_space<vmem>>, vector<1x1x64xf32>
    %172 = vector.shape_cast %171 : vector<1x1x64xf32> to vector<1x64xf32>
    %173 = vector.broadcast %172 : vector<1x64xf32> to vector<8x64xf32>
    %174 = arith.mulf %160, %173 : vector<8x64xf32>
    %175 = arith.addf %122, %174 : vector<8x64xf32>
    %c3_133 = arith.constant 3 : index
    %c1_134 = arith.constant 1 : index
    %c0_135 = arith.constant 0 : index
    %176 = vector.load %arg4[%c3_133, %c1_134, %c0_135] : memref<11x9x64xf32, #tpu.memory_space<vmem>>, vector<1x1x64xf32>
    %177 = vector.shape_cast %176 : vector<1x1x64xf32> to vector<1x64xf32>
    %178 = vector.broadcast %177 : vector<1x64xf32> to vector<8x64xf32>
    %179 = arith.mulf %160, %178 : vector<8x64xf32>
    %180 = arith.addf %128, %179 : vector<8x64xf32>
    %c4_136 = arith.constant 4 : index
    %c1_137 = arith.constant 1 : index
    %c0_138 = arith.constant 0 : index
    %181 = vector.load %arg4[%c4_136, %c1_137, %c0_138] : memref<11x9x64xf32, #tpu.memory_space<vmem>>, vector<1x1x64xf32>
    %182 = vector.shape_cast %181 : vector<1x1x64xf32> to vector<1x64xf32>
    %183 = vector.broadcast %182 : vector<1x64xf32> to vector<8x64xf32>
    %184 = arith.mulf %160, %183 : vector<8x64xf32>
    %185 = arith.addf %134, %184 : vector<8x64xf32>
    %c5_139 = arith.constant 5 : index
    %c1_140 = arith.constant 1 : index
    %c0_141 = arith.constant 0 : index
    %186 = vector.load %arg4[%c5_139, %c1_140, %c0_141] : memref<11x9x64xf32, #tpu.memory_space<vmem>>, vector<1x1x64xf32>
    %187 = vector.shape_cast %186 : vector<1x1x64xf32> to vector<1x64xf32>
    %188 = vector.broadcast %187 : vector<1x64xf32> to vector<8x64xf32>
    %189 = arith.mulf %160, %188 : vector<8x64xf32>
    %190 = arith.addf %140, %189 : vector<8x64xf32>
    %c6_142 = arith.constant 6 : index
    %c1_143 = arith.constant 1 : index
    %c0_144 = arith.constant 0 : index
    %191 = vector.load %arg4[%c6_142, %c1_143, %c0_144] : memref<11x9x64xf32, #tpu.memory_space<vmem>>, vector<1x1x64xf32>
    %192 = vector.shape_cast %191 : vector<1x1x64xf32> to vector<1x64xf32>
    %193 = vector.broadcast %192 : vector<1x64xf32> to vector<8x64xf32>
    %194 = arith.mulf %160, %193 : vector<8x64xf32>
    %195 = arith.addf %146, %194 : vector<8x64xf32>
    %c7_145 = arith.constant 7 : index
    %c1_146 = arith.constant 1 : index
    %c0_147 = arith.constant 0 : index
    %196 = vector.load %arg4[%c7_145, %c1_146, %c0_147] : memref<11x9x64xf32, #tpu.memory_space<vmem>>, vector<1x1x64xf32>
    %197 = vector.shape_cast %196 : vector<1x1x64xf32> to vector<1x64xf32>
    %198 = vector.broadcast %197 : vector<1x64xf32> to vector<8x64xf32>
    %199 = arith.mulf %160, %198 : vector<8x64xf32>
    %200 = arith.addf %152, %199 : vector<8x64xf32>
    %c8_148 = arith.constant 8 : index
    %c1_149 = arith.constant 1 : index
    %c0_150 = arith.constant 0 : index
    %201 = vector.load %arg4[%c8_148, %c1_149, %c0_150] : memref<11x9x64xf32, #tpu.memory_space<vmem>>, vector<1x1x64xf32>
    %202 = vector.shape_cast %201 : vector<1x1x64xf32> to vector<1x64xf32>
    %203 = vector.broadcast %202 : vector<1x64xf32> to vector<8x64xf32>
    %204 = arith.mulf %160, %203 : vector<8x64xf32>
    %205 = arith.addf %158, %204 : vector<8x64xf32>
    %c0_151 = arith.constant 0 : index
    %c0_152 = arith.constant 0 : index
    %c8_153 = arith.constant 8 : index
    %206 = vector.load %arg7[%c0_151, %c0_152, %c8_153] : memref<4x9x72xf32, #tpu.memory_space<vmem>>, vector<1x8x64xf32>
    %207 = vector.shape_cast %206 : vector<1x8x64xf32> to vector<8x64xf32>
    %c0_154 = arith.constant 0 : index
    %c2_155 = arith.constant 2 : index
    %c0_156 = arith.constant 0 : index
    %208 = vector.load %arg4[%c0_154, %c2_155, %c0_156] : memref<11x9x64xf32, #tpu.memory_space<vmem>>, vector<1x1x64xf32>
    %209 = vector.shape_cast %208 : vector<1x1x64xf32> to vector<1x64xf32>
    %210 = vector.broadcast %209 : vector<1x64xf32> to vector<8x64xf32>
    %211 = arith.mulf %207, %210 : vector<8x64xf32>
    %212 = arith.addf %165, %211 : vector<8x64xf32>
    %c1_157 = arith.constant 1 : index
    %c2_158 = arith.constant 2 : index
    %c0_159 = arith.constant 0 : index
    %213 = vector.load %arg4[%c1_157, %c2_158, %c0_159] : memref<11x9x64xf32, #tpu.memory_space<vmem>>, vector<1x1x64xf32>
    %214 = vector.shape_cast %213 : vector<1x1x64xf32> to vector<1x64xf32>
    %215 = vector.broadcast %214 : vector<1x64xf32> to vector<8x64xf32>
    %216 = arith.mulf %207, %215 : vector<8x64xf32>
    %217 = arith.addf %170, %216 : vector<8x64xf32>
    %c2_160 = arith.constant 2 : index
    %c2_161 = arith.constant 2 : index
    %c0_162 = arith.constant 0 : index
    %218 = vector.load %arg4[%c2_160, %c2_161, %c0_162] : memref<11x9x64xf32, #tpu.memory_space<vmem>>, vector<1x1x64xf32>
    %219 = vector.shape_cast %218 : vector<1x1x64xf32> to vector<1x64xf32>
    %220 = vector.broadcast %219 : vector<1x64xf32> to vector<8x64xf32>
    %221 = arith.mulf %207, %220 : vector<8x64xf32>
    %222 = arith.addf %175, %221 : vector<8x64xf32>
    %c3_163 = arith.constant 3 : index
    %c2_164 = arith.constant 2 : index
    %c0_165 = arith.constant 0 : index
    %223 = vector.load %arg4[%c3_163, %c2_164, %c0_165] : memref<11x9x64xf32, #tpu.memory_space<vmem>>, vector<1x1x64xf32>
    %224 = vector.shape_cast %223 : vector<1x1x64xf32> to vector<1x64xf32>
    %225 = vector.broadcast %224 : vector<1x64xf32> to vector<8x64xf32>
    %226 = arith.mulf %207, %225 : vector<8x64xf32>
    %227 = arith.addf %180, %226 : vector<8x64xf32>
    %c4_166 = arith.constant 4 : index
    %c2_167 = arith.constant 2 : index
    %c0_168 = arith.constant 0 : index
    %228 = vector.load %arg4[%c4_166, %c2_167, %c0_168] : memref<11x9x64xf32, #tpu.memory_space<vmem>>, vector<1x1x64xf32>
    %229 = vector.shape_cast %228 : vector<1x1x64xf32> to vector<1x64xf32>
    %230 = vector.broadcast %229 : vector<1x64xf32> to vector<8x64xf32>
    %231 = arith.mulf %207, %230 : vector<8x64xf32>
    %232 = arith.addf %185, %231 : vector<8x64xf32>
    %c5_169 = arith.constant 5 : index
    %c2_170 = arith.constant 2 : index
    %c0_171 = arith.constant 0 : index
    %233 = vector.load %arg4[%c5_169, %c2_170, %c0_171] : memref<11x9x64xf32, #tpu.memory_space<vmem>>, vector<1x1x64xf32>
    %234 = vector.shape_cast %233 : vector<1x1x64xf32> to vector<1x64xf32>
    %235 = vector.broadcast %234 : vector<1x64xf32> to vector<8x64xf32>
    %236 = arith.mulf %207, %235 : vector<8x64xf32>
    %237 = arith.addf %190, %236 : vector<8x64xf32>
    %c6_172 = arith.constant 6 : index
    %c2_173 = arith.constant 2 : index
    %c0_174 = arith.constant 0 : index
    %238 = vector.load %arg4[%c6_172, %c2_173, %c0_174] : memref<11x9x64xf32, #tpu.memory_space<vmem>>, vector<1x1x64xf32>
    %239 = vector.shape_cast %238 : vector<1x1x64xf32> to vector<1x64xf32>
    %240 = vector.broadcast %239 : vector<1x64xf32> to vector<8x64xf32>
    %241 = arith.mulf %207, %240 : vector<8x64xf32>
    %242 = arith.addf %195, %241 : vector<8x64xf32>
    %c7_175 = arith.constant 7 : index
    %c2_176 = arith.constant 2 : index
    %c0_177 = arith.constant 0 : index
    %243 = vector.load %arg4[%c7_175, %c2_176, %c0_177] : memref<11x9x64xf32, #tpu.memory_space<vmem>>, vector<1x1x64xf32>
    %244 = vector.shape_cast %243 : vector<1x1x64xf32> to vector<1x64xf32>
    %245 = vector.broadcast %244 : vector<1x64xf32> to vector<8x64xf32>
    %246 = arith.mulf %207, %245 : vector<8x64xf32>
    %247 = arith.addf %200, %246 : vector<8x64xf32>
    %c8_178 = arith.constant 8 : index
    %c2_179 = arith.constant 2 : index
    %c0_180 = arith.constant 0 : index
    %248 = vector.load %arg4[%c8_178, %c2_179, %c0_180] : memref<11x9x64xf32, #tpu.memory_space<vmem>>, vector<1x1x64xf32>
    %249 = vector.shape_cast %248 : vector<1x1x64xf32> to vector<1x64xf32>
    %250 = vector.broadcast %249 : vector<1x64xf32> to vector<8x64xf32>
    %251 = arith.mulf %207, %250 : vector<8x64xf32>
    %252 = arith.addf %205, %251 : vector<8x64xf32>
    %c2_181 = arith.constant 2 : index
    %c0_182 = arith.constant 0 : index
    %c0_183 = arith.constant 0 : index
    %253 = vector.load %arg7[%c2_181, %c0_182, %c0_183] : memref<4x9x72xf32, #tpu.memory_space<vmem>>, vector<1x8x64xf32>
    %254 = vector.shape_cast %253 : vector<1x8x64xf32> to vector<8x64xf32>
    %c0_184 = arith.constant 0 : index
    %c3_185 = arith.constant 3 : index
    %c0_186 = arith.constant 0 : index
    %255 = vector.load %arg4[%c0_184, %c3_185, %c0_186] : memref<11x9x64xf32, #tpu.memory_space<vmem>>, vector<1x1x64xf32>
    %256 = vector.shape_cast %255 : vector<1x1x64xf32> to vector<1x64xf32>
    %257 = vector.broadcast %256 : vector<1x64xf32> to vector<8x64xf32>
    %258 = arith.mulf %254, %257 : vector<8x64xf32>
    %259 = arith.addf %212, %258 : vector<8x64xf32>
    %c1_187 = arith.constant 1 : index
    %c3_188 = arith.constant 3 : index
    %c0_189 = arith.constant 0 : index
    %260 = vector.load %arg4[%c1_187, %c3_188, %c0_189] : memref<11x9x64xf32, #tpu.memory_space<vmem>>, vector<1x1x64xf32>
    %261 = vector.shape_cast %260 : vector<1x1x64xf32> to vector<1x64xf32>
    %262 = vector.broadcast %261 : vector<1x64xf32> to vector<8x64xf32>
    %263 = arith.mulf %254, %262 : vector<8x64xf32>
    %264 = arith.addf %217, %263 : vector<8x64xf32>
    %c2_190 = arith.constant 2 : index
    %c3_191 = arith.constant 3 : index
    %c0_192 = arith.constant 0 : index
    %265 = vector.load %arg4[%c2_190, %c3_191, %c0_192] : memref<11x9x64xf32, #tpu.memory_space<vmem>>, vector<1x1x64xf32>
    %266 = vector.shape_cast %265 : vector<1x1x64xf32> to vector<1x64xf32>
    %267 = vector.broadcast %266 : vector<1x64xf32> to vector<8x64xf32>
    %268 = arith.mulf %254, %267 : vector<8x64xf32>
    %269 = arith.addf %222, %268 : vector<8x64xf32>
    %c3_193 = arith.constant 3 : index
    %c3_194 = arith.constant 3 : index
    %c0_195 = arith.constant 0 : index
    %270 = vector.load %arg4[%c3_193, %c3_194, %c0_195] : memref<11x9x64xf32, #tpu.memory_space<vmem>>, vector<1x1x64xf32>
    %271 = vector.shape_cast %270 : vector<1x1x64xf32> to vector<1x64xf32>
    %272 = vector.broadcast %271 : vector<1x64xf32> to vector<8x64xf32>
    %273 = arith.mulf %254, %272 : vector<8x64xf32>
    %274 = arith.addf %227, %273 : vector<8x64xf32>
    %c4_196 = arith.constant 4 : index
    %c3_197 = arith.constant 3 : index
    %c0_198 = arith.constant 0 : index
    %275 = vector.load %arg4[%c4_196, %c3_197, %c0_198] : memref<11x9x64xf32, #tpu.memory_space<vmem>>, vector<1x1x64xf32>
    %276 = vector.shape_cast %275 : vector<1x1x64xf32> to vector<1x64xf32>
    %277 = vector.broadcast %276 : vector<1x64xf32> to vector<8x64xf32>
    %278 = arith.mulf %254, %277 : vector<8x64xf32>
    %279 = arith.addf %232, %278 : vector<8x64xf32>
    %c5_199 = arith.constant 5 : index
    %c3_200 = arith.constant 3 : index
    %c0_201 = arith.constant 0 : index
    %280 = vector.load %arg4[%c5_199, %c3_200, %c0_201] : memref<11x9x64xf32, #tpu.memory_space<vmem>>, vector<1x1x64xf32>
    %281 = vector.shape_cast %280 : vector<1x1x64xf32> to vector<1x64xf32>
    %282 = vector.broadcast %281 : vector<1x64xf32> to vector<8x64xf32>
    %283 = arith.mulf %254, %282 : vector<8x64xf32>
    %284 = arith.addf %237, %283 : vector<8x64xf32>
    %c6_202 = arith.constant 6 : index
    %c3_203 = arith.constant 3 : index
    %c0_204 = arith.constant 0 : index
    %285 = vector.load %arg4[%c6_202, %c3_203, %c0_204] : memref<11x9x64xf32, #tpu.memory_space<vmem>>, vector<1x1x64xf32>
    %286 = vector.shape_cast %285 : vector<1x1x64xf32> to vector<1x64xf32>
    %287 = vector.broadcast %286 : vector<1x64xf32> to vector<8x64xf32>
    %288 = arith.mulf %254, %287 : vector<8x64xf32>
    %289 = arith.addf %242, %288 : vector<8x64xf32>
    %c7_205 = arith.constant 7 : index
    %c3_206 = arith.constant 3 : index
    %c0_207 = arith.constant 0 : index
    %290 = vector.load %arg4[%c7_205, %c3_206, %c0_207] : memref<11x9x64xf32, #tpu.memory_space<vmem>>, vector<1x1x64xf32>
    %291 = vector.shape_cast %290 : vector<1x1x64xf32> to vector<1x64xf32>
    %292 = vector.broadcast %291 : vector<1x64xf32> to vector<8x64xf32>
    %293 = arith.mulf %254, %292 : vector<8x64xf32>
    %294 = arith.addf %247, %293 : vector<8x64xf32>
    %c8_208 = arith.constant 8 : index
    %c3_209 = arith.constant 3 : index
    %c0_210 = arith.constant 0 : index
    %295 = vector.load %arg4[%c8_208, %c3_209, %c0_210] : memref<11x9x64xf32, #tpu.memory_space<vmem>>, vector<1x1x64xf32>
    %296 = vector.shape_cast %295 : vector<1x1x64xf32> to vector<1x64xf32>
    %297 = vector.broadcast %296 : vector<1x64xf32> to vector<8x64xf32>
    %298 = arith.mulf %254, %297 : vector<8x64xf32>
    %299 = arith.addf %252, %298 : vector<8x64xf32>
    %c3_211 = arith.constant 3 : index
    %c0_212 = arith.constant 0 : index
    %c0_213 = arith.constant 0 : index
    %300 = vector.load %arg7[%c3_211, %c0_212, %c0_213] : memref<4x9x72xf32, #tpu.memory_space<vmem>>, vector<1x8x64xf32>
    %301 = vector.shape_cast %300 : vector<1x8x64xf32> to vector<8x64xf32>
    %c0_214 = arith.constant 0 : index
    %c4_215 = arith.constant 4 : index
    %c0_216 = arith.constant 0 : index
    %302 = vector.load %arg4[%c0_214, %c4_215, %c0_216] : memref<11x9x64xf32, #tpu.memory_space<vmem>>, vector<1x1x64xf32>
    %303 = vector.shape_cast %302 : vector<1x1x64xf32> to vector<1x64xf32>
    %304 = vector.broadcast %303 : vector<1x64xf32> to vector<8x64xf32>
    %305 = arith.mulf %301, %304 : vector<8x64xf32>
    %306 = arith.addf %259, %305 : vector<8x64xf32>
    %c1_217 = arith.constant 1 : index
    %c4_218 = arith.constant 4 : index
    %c0_219 = arith.constant 0 : index
    %307 = vector.load %arg4[%c1_217, %c4_218, %c0_219] : memref<11x9x64xf32, #tpu.memory_space<vmem>>, vector<1x1x64xf32>
    %308 = vector.shape_cast %307 : vector<1x1x64xf32> to vector<1x64xf32>
    %309 = vector.broadcast %308 : vector<1x64xf32> to vector<8x64xf32>
    %310 = arith.mulf %301, %309 : vector<8x64xf32>
    %311 = arith.addf %264, %310 : vector<8x64xf32>
    %c2_220 = arith.constant 2 : index
    %c4_221 = arith.constant 4 : index
    %c0_222 = arith.constant 0 : index
    %312 = vector.load %arg4[%c2_220, %c4_221, %c0_222] : memref<11x9x64xf32, #tpu.memory_space<vmem>>, vector<1x1x64xf32>
    %313 = vector.shape_cast %312 : vector<1x1x64xf32> to vector<1x64xf32>
    %314 = vector.broadcast %313 : vector<1x64xf32> to vector<8x64xf32>
    %315 = arith.mulf %301, %314 : vector<8x64xf32>
    %316 = arith.addf %269, %315 : vector<8x64xf32>
    %c3_223 = arith.constant 3 : index
    %c4_224 = arith.constant 4 : index
    %c0_225 = arith.constant 0 : index
    %317 = vector.load %arg4[%c3_223, %c4_224, %c0_225] : memref<11x9x64xf32, #tpu.memory_space<vmem>>, vector<1x1x64xf32>
    %318 = vector.shape_cast %317 : vector<1x1x64xf32> to vector<1x64xf32>
    %319 = vector.broadcast %318 : vector<1x64xf32> to vector<8x64xf32>
    %320 = arith.mulf %301, %319 : vector<8x64xf32>
    %321 = arith.addf %274, %320 : vector<8x64xf32>
    %c4_226 = arith.constant 4 : index
    %c4_227 = arith.constant 4 : index
    %c0_228 = arith.constant 0 : index
    %322 = vector.load %arg4[%c4_226, %c4_227, %c0_228] : memref<11x9x64xf32, #tpu.memory_space<vmem>>, vector<1x1x64xf32>
    %323 = vector.shape_cast %322 : vector<1x1x64xf32> to vector<1x64xf32>
    %324 = vector.broadcast %323 : vector<1x64xf32> to vector<8x64xf32>
    %325 = arith.mulf %301, %324 : vector<8x64xf32>
    %326 = arith.addf %279, %325 : vector<8x64xf32>
    %c5_229 = arith.constant 5 : index
    %c4_230 = arith.constant 4 : index
    %c0_231 = arith.constant 0 : index
    %327 = vector.load %arg4[%c5_229, %c4_230, %c0_231] : memref<11x9x64xf32, #tpu.memory_space<vmem>>, vector<1x1x64xf32>
    %328 = vector.shape_cast %327 : vector<1x1x64xf32> to vector<1x64xf32>
    %329 = vector.broadcast %328 : vector<1x64xf32> to vector<8x64xf32>
    %330 = arith.mulf %301, %329 : vector<8x64xf32>
    %331 = arith.addf %284, %330 : vector<8x64xf32>
    %c6_232 = arith.constant 6 : index
    %c4_233 = arith.constant 4 : index
    %c0_234 = arith.constant 0 : index
    %332 = vector.load %arg4[%c6_232, %c4_233, %c0_234] : memref<11x9x64xf32, #tpu.memory_space<vmem>>, vector<1x1x64xf32>
    %333 = vector.shape_cast %332 : vector<1x1x64xf32> to vector<1x64xf32>
    %334 = vector.broadcast %333 : vector<1x64xf32> to vector<8x64xf32>
    %335 = arith.mulf %301, %334 : vector<8x64xf32>
    %336 = arith.addf %289, %335 : vector<8x64xf32>
    %c7_235 = arith.constant 7 : index
    %c4_236 = arith.constant 4 : index
    %c0_237 = arith.constant 0 : index
    %337 = vector.load %arg4[%c7_235, %c4_236, %c0_237] : memref<11x9x64xf32, #tpu.memory_space<vmem>>, vector<1x1x64xf32>
    %338 = vector.shape_cast %337 : vector<1x1x64xf32> to vector<1x64xf32>
    %339 = vector.broadcast %338 : vector<1x64xf32> to vector<8x64xf32>
    %340 = arith.mulf %301, %339 : vector<8x64xf32>
    %341 = arith.addf %294, %340 : vector<8x64xf32>
    %c8_238 = arith.constant 8 : index
    %c4_239 = arith.constant 4 : index
    %c0_240 = arith.constant 0 : index
    %342 = vector.load %arg4[%c8_238, %c4_239, %c0_240] : memref<11x9x64xf32, #tpu.memory_space<vmem>>, vector<1x1x64xf32>
    %343 = vector.shape_cast %342 : vector<1x1x64xf32> to vector<1x64xf32>
    %344 = vector.broadcast %343 : vector<1x64xf32> to vector<8x64xf32>
    %345 = arith.mulf %301, %344 : vector<8x64xf32>
    %346 = arith.addf %299, %345 : vector<8x64xf32>
    %c2_241 = arith.constant 2 : index
    %c0_242 = arith.constant 0 : index
    %c8_243 = arith.constant 8 : index
    %347 = vector.load %arg7[%c2_241, %c0_242, %c8_243] : memref<4x9x72xf32, #tpu.memory_space<vmem>>, vector<1x8x64xf32>
    %348 = vector.shape_cast %347 : vector<1x8x64xf32> to vector<8x64xf32>
    %c0_244 = arith.constant 0 : index
    %c5_245 = arith.constant 5 : index
    %c0_246 = arith.constant 0 : index
    %349 = vector.load %arg4[%c0_244, %c5_245, %c0_246] : memref<11x9x64xf32, #tpu.memory_space<vmem>>, vector<1x1x64xf32>
    %350 = vector.shape_cast %349 : vector<1x1x64xf32> to vector<1x64xf32>
    %351 = vector.broadcast %350 : vector<1x64xf32> to vector<8x64xf32>
    %352 = arith.mulf %348, %351 : vector<8x64xf32>
    %353 = arith.addf %306, %352 : vector<8x64xf32>
    %c1_247 = arith.constant 1 : index
    %c5_248 = arith.constant 5 : index
    %c0_249 = arith.constant 0 : index
    %354 = vector.load %arg4[%c1_247, %c5_248, %c0_249] : memref<11x9x64xf32, #tpu.memory_space<vmem>>, vector<1x1x64xf32>
    %355 = vector.shape_cast %354 : vector<1x1x64xf32> to vector<1x64xf32>
    %356 = vector.broadcast %355 : vector<1x64xf32> to vector<8x64xf32>
    %357 = arith.mulf %348, %356 : vector<8x64xf32>
    %358 = arith.addf %311, %357 : vector<8x64xf32>
    %c2_250 = arith.constant 2 : index
    %c5_251 = arith.constant 5 : index
    %c0_252 = arith.constant 0 : index
    %359 = vector.load %arg4[%c2_250, %c5_251, %c0_252] : memref<11x9x64xf32, #tpu.memory_space<vmem>>, vector<1x1x64xf32>
    %360 = vector.shape_cast %359 : vector<1x1x64xf32> to vector<1x64xf32>
    %361 = vector.broadcast %360 : vector<1x64xf32> to vector<8x64xf32>
    %362 = arith.mulf %348, %361 : vector<8x64xf32>
    %363 = arith.addf %316, %362 : vector<8x64xf32>
    %c3_253 = arith.constant 3 : index
    %c5_254 = arith.constant 5 : index
    %c0_255 = arith.constant 0 : index
    %364 = vector.load %arg4[%c3_253, %c5_254, %c0_255] : memref<11x9x64xf32, #tpu.memory_space<vmem>>, vector<1x1x64xf32>
    %365 = vector.shape_cast %364 : vector<1x1x64xf32> to vector<1x64xf32>
    %366 = vector.broadcast %365 : vector<1x64xf32> to vector<8x64xf32>
    %367 = arith.mulf %348, %366 : vector<8x64xf32>
    %368 = arith.addf %321, %367 : vector<8x64xf32>
    %c4_256 = arith.constant 4 : index
    %c5_257 = arith.constant 5 : index
    %c0_258 = arith.constant 0 : index
    %369 = vector.load %arg4[%c4_256, %c5_257, %c0_258] : memref<11x9x64xf32, #tpu.memory_space<vmem>>, vector<1x1x64xf32>
    %370 = vector.shape_cast %369 : vector<1x1x64xf32> to vector<1x64xf32>
    %371 = vector.broadcast %370 : vector<1x64xf32> to vector<8x64xf32>
    %372 = arith.mulf %348, %371 : vector<8x64xf32>
    %373 = arith.addf %326, %372 : vector<8x64xf32>
    %c5_259 = arith.constant 5 : index
    %c5_260 = arith.constant 5 : index
    %c0_261 = arith.constant 0 : index
    %374 = vector.load %arg4[%c5_259, %c5_260, %c0_261] : memref<11x9x64xf32, #tpu.memory_space<vmem>>, vector<1x1x64xf32>
    %375 = vector.shape_cast %374 : vector<1x1x64xf32> to vector<1x64xf32>
    %376 = vector.broadcast %375 : vector<1x64xf32> to vector<8x64xf32>
    %377 = arith.mulf %348, %376 : vector<8x64xf32>
    %378 = arith.addf %331, %377 : vector<8x64xf32>
    %c6_262 = arith.constant 6 : index
    %c5_263 = arith.constant 5 : index
    %c0_264 = arith.constant 0 : index
    %379 = vector.load %arg4[%c6_262, %c5_263, %c0_264] : memref<11x9x64xf32, #tpu.memory_space<vmem>>, vector<1x1x64xf32>
    %380 = vector.shape_cast %379 : vector<1x1x64xf32> to vector<1x64xf32>
    %381 = vector.broadcast %380 : vector<1x64xf32> to vector<8x64xf32>
    %382 = arith.mulf %348, %381 : vector<8x64xf32>
    %383 = arith.addf %336, %382 : vector<8x64xf32>
    %c7_265 = arith.constant 7 : index
    %c5_266 = arith.constant 5 : index
    %c0_267 = arith.constant 0 : index
    %384 = vector.load %arg4[%c7_265, %c5_266, %c0_267] : memref<11x9x64xf32, #tpu.memory_space<vmem>>, vector<1x1x64xf32>
    %385 = vector.shape_cast %384 : vector<1x1x64xf32> to vector<1x64xf32>
    %386 = vector.broadcast %385 : vector<1x64xf32> to vector<8x64xf32>
    %387 = arith.mulf %348, %386 : vector<8x64xf32>
    %388 = arith.addf %341, %387 : vector<8x64xf32>
    %c8_268 = arith.constant 8 : index
    %c5_269 = arith.constant 5 : index
    %c0_270 = arith.constant 0 : index
    %389 = vector.load %arg4[%c8_268, %c5_269, %c0_270] : memref<11x9x64xf32, #tpu.memory_space<vmem>>, vector<1x1x64xf32>
    %390 = vector.shape_cast %389 : vector<1x1x64xf32> to vector<1x64xf32>
    %391 = vector.broadcast %390 : vector<1x64xf32> to vector<8x64xf32>
    %392 = arith.mulf %348, %391 : vector<8x64xf32>
    %393 = arith.addf %346, %392 : vector<8x64xf32>
    %c0_271 = arith.constant 0 : index
    %c1_272 = arith.constant 1 : index
    %c0_273 = arith.constant 0 : index
    %394 = vector.load %arg7[%c0_271, %c1_272, %c0_273] : memref<4x9x72xf32, #tpu.memory_space<vmem>>, vector<1x8x64xf32>
    %395 = vector.shape_cast %394 : vector<1x8x64xf32> to vector<8x64xf32>
    %c0_274 = arith.constant 0 : index
    %c6_275 = arith.constant 6 : index
    %c0_276 = arith.constant 0 : index
    %396 = vector.load %arg4[%c0_274, %c6_275, %c0_276] : memref<11x9x64xf32, #tpu.memory_space<vmem>>, vector<1x1x64xf32>
    %397 = vector.shape_cast %396 : vector<1x1x64xf32> to vector<1x64xf32>
    %398 = vector.broadcast %397 : vector<1x64xf32> to vector<8x64xf32>
    %399 = arith.mulf %395, %398 : vector<8x64xf32>
    %400 = arith.addf %353, %399 : vector<8x64xf32>
    %c1_277 = arith.constant 1 : index
    %c6_278 = arith.constant 6 : index
    %c0_279 = arith.constant 0 : index
    %401 = vector.load %arg4[%c1_277, %c6_278, %c0_279] : memref<11x9x64xf32, #tpu.memory_space<vmem>>, vector<1x1x64xf32>
    %402 = vector.shape_cast %401 : vector<1x1x64xf32> to vector<1x64xf32>
    %403 = vector.broadcast %402 : vector<1x64xf32> to vector<8x64xf32>
    %404 = arith.mulf %395, %403 : vector<8x64xf32>
    %405 = arith.addf %358, %404 : vector<8x64xf32>
    %c2_280 = arith.constant 2 : index
    %c6_281 = arith.constant 6 : index
    %c0_282 = arith.constant 0 : index
    %406 = vector.load %arg4[%c2_280, %c6_281, %c0_282] : memref<11x9x64xf32, #tpu.memory_space<vmem>>, vector<1x1x64xf32>
    %407 = vector.shape_cast %406 : vector<1x1x64xf32> to vector<1x64xf32>
    %408 = vector.broadcast %407 : vector<1x64xf32> to vector<8x64xf32>
    %409 = arith.mulf %395, %408 : vector<8x64xf32>
    %410 = arith.addf %363, %409 : vector<8x64xf32>
    %c3_283 = arith.constant 3 : index
    %c6_284 = arith.constant 6 : index
    %c0_285 = arith.constant 0 : index
    %411 = vector.load %arg4[%c3_283, %c6_284, %c0_285] : memref<11x9x64xf32, #tpu.memory_space<vmem>>, vector<1x1x64xf32>
    %412 = vector.shape_cast %411 : vector<1x1x64xf32> to vector<1x64xf32>
    %413 = vector.broadcast %412 : vector<1x64xf32> to vector<8x64xf32>
    %414 = arith.mulf %395, %413 : vector<8x64xf32>
    %415 = arith.addf %368, %414 : vector<8x64xf32>
    %c4_286 = arith.constant 4 : index
    %c6_287 = arith.constant 6 : index
    %c0_288 = arith.constant 0 : index
    %416 = vector.load %arg4[%c4_286, %c6_287, %c0_288] : memref<11x9x64xf32, #tpu.memory_space<vmem>>, vector<1x1x64xf32>
    %417 = vector.shape_cast %416 : vector<1x1x64xf32> to vector<1x64xf32>
    %418 = vector.broadcast %417 : vector<1x64xf32> to vector<8x64xf32>
    %419 = arith.mulf %395, %418 : vector<8x64xf32>
    %420 = arith.addf %373, %419 : vector<8x64xf32>
    %c5_289 = arith.constant 5 : index
    %c6_290 = arith.constant 6 : index
    %c0_291 = arith.constant 0 : index
    %421 = vector.load %arg4[%c5_289, %c6_290, %c0_291] : memref<11x9x64xf32, #tpu.memory_space<vmem>>, vector<1x1x64xf32>
    %422 = vector.shape_cast %421 : vector<1x1x64xf32> to vector<1x64xf32>
    %423 = vector.broadcast %422 : vector<1x64xf32> to vector<8x64xf32>
    %424 = arith.mulf %395, %423 : vector<8x64xf32>
    %425 = arith.addf %378, %424 : vector<8x64xf32>
    %c6_292 = arith.constant 6 : index
    %c6_293 = arith.constant 6 : index
    %c0_294 = arith.constant 0 : index
    %426 = vector.load %arg4[%c6_292, %c6_293, %c0_294] : memref<11x9x64xf32, #tpu.memory_space<vmem>>, vector<1x1x64xf32>
    %427 = vector.shape_cast %426 : vector<1x1x64xf32> to vector<1x64xf32>
    %428 = vector.broadcast %427 : vector<1x64xf32> to vector<8x64xf32>
    %429 = arith.mulf %395, %428 : vector<8x64xf32>
    %430 = arith.addf %383, %429 : vector<8x64xf32>
    %c7_295 = arith.constant 7 : index
    %c6_296 = arith.constant 6 : index
    %c0_297 = arith.constant 0 : index
    %431 = vector.load %arg4[%c7_295, %c6_296, %c0_297] : memref<11x9x64xf32, #tpu.memory_space<vmem>>, vector<1x1x64xf32>
    %432 = vector.shape_cast %431 : vector<1x1x64xf32> to vector<1x64xf32>
    %433 = vector.broadcast %432 : vector<1x64xf32> to vector<8x64xf32>
    %434 = arith.mulf %395, %433 : vector<8x64xf32>
    %435 = arith.addf %388, %434 : vector<8x64xf32>
    %c8_298 = arith.constant 8 : index
    %c6_299 = arith.constant 6 : index
    %c0_300 = arith.constant 0 : index
    %436 = vector.load %arg4[%c8_298, %c6_299, %c0_300] : memref<11x9x64xf32, #tpu.memory_space<vmem>>, vector<1x1x64xf32>
    %437 = vector.shape_cast %436 : vector<1x1x64xf32> to vector<1x64xf32>
    %438 = vector.broadcast %437 : vector<1x64xf32> to vector<8x64xf32>
    %439 = arith.mulf %395, %438 : vector<8x64xf32>
    %440 = arith.addf %393, %439 : vector<8x64xf32>
    %c1_301 = arith.constant 1 : index
    %c1_302 = arith.constant 1 : index
    %c0_303 = arith.constant 0 : index
    %441 = vector.load %arg7[%c1_301, %c1_302, %c0_303] : memref<4x9x72xf32, #tpu.memory_space<vmem>>, vector<1x8x64xf32>
    %442 = vector.shape_cast %441 : vector<1x8x64xf32> to vector<8x64xf32>
    %c0_304 = arith.constant 0 : index
    %c7_305 = arith.constant 7 : index
    %c0_306 = arith.constant 0 : index
    %443 = vector.load %arg4[%c0_304, %c7_305, %c0_306] : memref<11x9x64xf32, #tpu.memory_space<vmem>>, vector<1x1x64xf32>
    %444 = vector.shape_cast %443 : vector<1x1x64xf32> to vector<1x64xf32>
    %445 = vector.broadcast %444 : vector<1x64xf32> to vector<8x64xf32>
    %446 = arith.mulf %442, %445 : vector<8x64xf32>
    %447 = arith.addf %400, %446 : vector<8x64xf32>
    %c1_307 = arith.constant 1 : index
    %c7_308 = arith.constant 7 : index
    %c0_309 = arith.constant 0 : index
    %448 = vector.load %arg4[%c1_307, %c7_308, %c0_309] : memref<11x9x64xf32, #tpu.memory_space<vmem>>, vector<1x1x64xf32>
    %449 = vector.shape_cast %448 : vector<1x1x64xf32> to vector<1x64xf32>
    %450 = vector.broadcast %449 : vector<1x64xf32> to vector<8x64xf32>
    %451 = arith.mulf %442, %450 : vector<8x64xf32>
    %452 = arith.addf %405, %451 : vector<8x64xf32>
    %c2_310 = arith.constant 2 : index
    %c7_311 = arith.constant 7 : index
    %c0_312 = arith.constant 0 : index
    %453 = vector.load %arg4[%c2_310, %c7_311, %c0_312] : memref<11x9x64xf32, #tpu.memory_space<vmem>>, vector<1x1x64xf32>
    %454 = vector.shape_cast %453 : vector<1x1x64xf32> to vector<1x64xf32>
    %455 = vector.broadcast %454 : vector<1x64xf32> to vector<8x64xf32>
    %456 = arith.mulf %442, %455 : vector<8x64xf32>
    %457 = arith.addf %410, %456 : vector<8x64xf32>
    %c3_313 = arith.constant 3 : index
    %c7_314 = arith.constant 7 : index
    %c0_315 = arith.constant 0 : index
    %458 = vector.load %arg4[%c3_313, %c7_314, %c0_315] : memref<11x9x64xf32, #tpu.memory_space<vmem>>, vector<1x1x64xf32>
    %459 = vector.shape_cast %458 : vector<1x1x64xf32> to vector<1x64xf32>
    %460 = vector.broadcast %459 : vector<1x64xf32> to vector<8x64xf32>
    %461 = arith.mulf %442, %460 : vector<8x64xf32>
    %462 = arith.addf %415, %461 : vector<8x64xf32>
    %c4_316 = arith.constant 4 : index
    %c7_317 = arith.constant 7 : index
    %c0_318 = arith.constant 0 : index
    %463 = vector.load %arg4[%c4_316, %c7_317, %c0_318] : memref<11x9x64xf32, #tpu.memory_space<vmem>>, vector<1x1x64xf32>
    %464 = vector.shape_cast %463 : vector<1x1x64xf32> to vector<1x64xf32>
    %465 = vector.broadcast %464 : vector<1x64xf32> to vector<8x64xf32>
    %466 = arith.mulf %442, %465 : vector<8x64xf32>
    %467 = arith.addf %420, %466 : vector<8x64xf32>
    %c5_319 = arith.constant 5 : index
    %c7_320 = arith.constant 7 : index
    %c0_321 = arith.constant 0 : index
    %468 = vector.load %arg4[%c5_319, %c7_320, %c0_321] : memref<11x9x64xf32, #tpu.memory_space<vmem>>, vector<1x1x64xf32>
    %469 = vector.shape_cast %468 : vector<1x1x64xf32> to vector<1x64xf32>
    %470 = vector.broadcast %469 : vector<1x64xf32> to vector<8x64xf32>
    %471 = arith.mulf %442, %470 : vector<8x64xf32>
    %472 = arith.addf %425, %471 : vector<8x64xf32>
    %c6_322 = arith.constant 6 : index
    %c7_323 = arith.constant 7 : index
    %c0_324 = arith.constant 0 : index
    %473 = vector.load %arg4[%c6_322, %c7_323, %c0_324] : memref<11x9x64xf32, #tpu.memory_space<vmem>>, vector<1x1x64xf32>
    %474 = vector.shape_cast %473 : vector<1x1x64xf32> to vector<1x64xf32>
    %475 = vector.broadcast %474 : vector<1x64xf32> to vector<8x64xf32>
    %476 = arith.mulf %442, %475 : vector<8x64xf32>
    %477 = arith.addf %430, %476 : vector<8x64xf32>
    %c7_325 = arith.constant 7 : index
    %c7_326 = arith.constant 7 : index
    %c0_327 = arith.constant 0 : index
    %478 = vector.load %arg4[%c7_325, %c7_326, %c0_327] : memref<11x9x64xf32, #tpu.memory_space<vmem>>, vector<1x1x64xf32>
    %479 = vector.shape_cast %478 : vector<1x1x64xf32> to vector<1x64xf32>
    %480 = vector.broadcast %479 : vector<1x64xf32> to vector<8x64xf32>
    %481 = arith.mulf %442, %480 : vector<8x64xf32>
    %482 = arith.addf %435, %481 : vector<8x64xf32>
    %c8_328 = arith.constant 8 : index
    %c7_329 = arith.constant 7 : index
    %c0_330 = arith.constant 0 : index
    %483 = vector.load %arg4[%c8_328, %c7_329, %c0_330] : memref<11x9x64xf32, #tpu.memory_space<vmem>>, vector<1x1x64xf32>
    %484 = vector.shape_cast %483 : vector<1x1x64xf32> to vector<1x64xf32>
    %485 = vector.broadcast %484 : vector<1x64xf32> to vector<8x64xf32>
    %486 = arith.mulf %442, %485 : vector<8x64xf32>
    %487 = arith.addf %440, %486 : vector<8x64xf32>
    %c0_331 = arith.constant 0 : index
    %c1_332 = arith.constant 1 : index
    %c8_333 = arith.constant 8 : index
    %488 = vector.load %arg7[%c0_331, %c1_332, %c8_333] : memref<4x9x72xf32, #tpu.memory_space<vmem>>, vector<1x8x64xf32>
    %489 = vector.shape_cast %488 : vector<1x8x64xf32> to vector<8x64xf32>
    %c0_334 = arith.constant 0 : index
    %c8_335 = arith.constant 8 : index
    %c0_336 = arith.constant 0 : index
    %490 = vector.load %arg4[%c0_334, %c8_335, %c0_336] : memref<11x9x64xf32, #tpu.memory_space<vmem>>, vector<1x1x64xf32>
    %491 = vector.shape_cast %490 : vector<1x1x64xf32> to vector<1x64xf32>
    %492 = vector.broadcast %491 : vector<1x64xf32> to vector<8x64xf32>
    %493 = arith.mulf %489, %492 : vector<8x64xf32>
    %494 = arith.addf %447, %493 : vector<8x64xf32>
    %c1_337 = arith.constant 1 : index
    %c8_338 = arith.constant 8 : index
    %c0_339 = arith.constant 0 : index
    %495 = vector.load %arg4[%c1_337, %c8_338, %c0_339] : memref<11x9x64xf32, #tpu.memory_space<vmem>>, vector<1x1x64xf32>
    %496 = vector.shape_cast %495 : vector<1x1x64xf32> to vector<1x64xf32>
    %497 = vector.broadcast %496 : vector<1x64xf32> to vector<8x64xf32>
    %498 = arith.mulf %489, %497 : vector<8x64xf32>
    %499 = arith.addf %452, %498 : vector<8x64xf32>
    %c2_340 = arith.constant 2 : index
    %c8_341 = arith.constant 8 : index
    %c0_342 = arith.constant 0 : index
    %500 = vector.load %arg4[%c2_340, %c8_341, %c0_342] : memref<11x9x64xf32, #tpu.memory_space<vmem>>, vector<1x1x64xf32>
    %501 = vector.shape_cast %500 : vector<1x1x64xf32> to vector<1x64xf32>
    %502 = vector.broadcast %501 : vector<1x64xf32> to vector<8x64xf32>
    %503 = arith.mulf %489, %502 : vector<8x64xf32>
    %504 = arith.addf %457, %503 : vector<8x64xf32>
    %c3_343 = arith.constant 3 : index
    %c8_344 = arith.constant 8 : index
    %c0_345 = arith.constant 0 : index
    %505 = vector.load %arg4[%c3_343, %c8_344, %c0_345] : memref<11x9x64xf32, #tpu.memory_space<vmem>>, vector<1x1x64xf32>
    %506 = vector.shape_cast %505 : vector<1x1x64xf32> to vector<1x64xf32>
    %507 = vector.broadcast %506 : vector<1x64xf32> to vector<8x64xf32>
    %508 = arith.mulf %489, %507 : vector<8x64xf32>
    %509 = arith.addf %462, %508 : vector<8x64xf32>
    %c4_346 = arith.constant 4 : index
    %c8_347 = arith.constant 8 : index
    %c0_348 = arith.constant 0 : index
    %510 = vector.load %arg4[%c4_346, %c8_347, %c0_348] : memref<11x9x64xf32, #tpu.memory_space<vmem>>, vector<1x1x64xf32>
    %511 = vector.shape_cast %510 : vector<1x1x64xf32> to vector<1x64xf32>
    %512 = vector.broadcast %511 : vector<1x64xf32> to vector<8x64xf32>
    %513 = arith.mulf %489, %512 : vector<8x64xf32>
    %514 = arith.addf %467, %513 : vector<8x64xf32>
    %c5_349 = arith.constant 5 : index
    %c8_350 = arith.constant 8 : index
    %c0_351 = arith.constant 0 : index
    %515 = vector.load %arg4[%c5_349, %c8_350, %c0_351] : memref<11x9x64xf32, #tpu.memory_space<vmem>>, vector<1x1x64xf32>
    %516 = vector.shape_cast %515 : vector<1x1x64xf32> to vector<1x64xf32>
    %517 = vector.broadcast %516 : vector<1x64xf32> to vector<8x64xf32>
    %518 = arith.mulf %489, %517 : vector<8x64xf32>
    %519 = arith.addf %472, %518 : vector<8x64xf32>
    %c6_352 = arith.constant 6 : index
    %c8_353 = arith.constant 8 : index
    %c0_354 = arith.constant 0 : index
    %520 = vector.load %arg4[%c6_352, %c8_353, %c0_354] : memref<11x9x64xf32, #tpu.memory_space<vmem>>, vector<1x1x64xf32>
    %521 = vector.shape_cast %520 : vector<1x1x64xf32> to vector<1x64xf32>
    %522 = vector.broadcast %521 : vector<1x64xf32> to vector<8x64xf32>
    %523 = arith.mulf %489, %522 : vector<8x64xf32>
    %524 = arith.addf %477, %523 : vector<8x64xf32>
    %c7_355 = arith.constant 7 : index
    %c8_356 = arith.constant 8 : index
    %c0_357 = arith.constant 0 : index
    %525 = vector.load %arg4[%c7_355, %c8_356, %c0_357] : memref<11x9x64xf32, #tpu.memory_space<vmem>>, vector<1x1x64xf32>
    %526 = vector.shape_cast %525 : vector<1x1x64xf32> to vector<1x64xf32>
    %527 = vector.broadcast %526 : vector<1x64xf32> to vector<8x64xf32>
    %528 = arith.mulf %489, %527 : vector<8x64xf32>
    %529 = arith.addf %482, %528 : vector<8x64xf32>
    %c8_358 = arith.constant 8 : index
    %c8_359 = arith.constant 8 : index
    %c0_360 = arith.constant 0 : index
    %530 = vector.load %arg4[%c8_358, %c8_359, %c0_360] : memref<11x9x64xf32, #tpu.memory_space<vmem>>, vector<1x1x64xf32>
    %531 = vector.shape_cast %530 : vector<1x1x64xf32> to vector<1x64xf32>
    %532 = vector.broadcast %531 : vector<1x64xf32> to vector<8x64xf32>
    %533 = arith.mulf %489, %532 : vector<8x64xf32>
    %534 = arith.addf %487, %533 : vector<8x64xf32>
    %535 = arith.mulf %77, %494 : vector<8x64xf32>
    %536 = arith.mulf %499, %519 : vector<8x64xf32>
    %537 = arith.mulf %504, %524 : vector<8x64xf32>
    %538 = arith.addf %536, %537 : vector<8x64xf32>
    %539 = arith.mulf %509, %529 : vector<8x64xf32>
    %540 = arith.mulf %514, %534 : vector<8x64xf32>
    %541 = arith.addf %539, %540 : vector<8x64xf32>
    %cst_361 = arith.constant 0.000000e+00 : f32
    %542 = vector.broadcast %cst_361 : f32 to vector<1x80xf32>
    %cst_362 = arith.constant 0.000000e+00 : f32
    %543 = vector.broadcast %cst_362 : f32 to vector<8x8xf32>
    %c0_363 = arith.constant 0 : index
    %c0_364 = arith.constant 0 : index
    %c0_365 = arith.constant 0 : index
    %544 = vector.load %arg8[%c0_363, %c0_364, %c0_365] : memref<2x10x80xf32, #tpu.memory_space<vmem>>, vector<1x1x80xf32>
    %545 = vector.shape_cast %544 : vector<1x1x80xf32> to vector<1x80xf32>
    %546 = vector.shape_cast %542 : vector<1x80xf32> to vector<1x1x80xf32>
    tpu.vector_store %arg8[%c0_363, %c0_364, %c0_365], %546 {strides = array<i32>} : memref<2x10x80xf32, #tpu.memory_space<vmem>>, vector<1x1x80xf32>,
    %c0_366 = arith.constant 0 : index
    %c9 = arith.constant 9 : index
    %c0_367 = arith.constant 0 : index
    %547 = vector.load %arg8[%c0_366, %c9, %c0_367] : memref<2x10x80xf32, #tpu.memory_space<vmem>>, vector<1x1x80xf32>
    %548 = vector.shape_cast %547 : vector<1x1x80xf32> to vector<1x80xf32>
    %549 = vector.shape_cast %542 : vector<1x80xf32> to vector<1x1x80xf32>
    tpu.vector_store %arg8[%c0_366, %c9, %c0_367], %549 {strides = array<i32>} : memref<2x10x80xf32, #tpu.memory_space<vmem>>, vector<1x1x80xf32>,
    %c0_368 = arith.constant 0 : index
    %c1_369 = arith.constant 1 : index
    %c0_370 = arith.constant 0 : index
    %550 = vector.load %arg8[%c0_368, %c1_369, %c0_370] : memref<2x10x80xf32, #tpu.memory_space<vmem>>, vector<1x8x8xf32>
    %551 = vector.shape_cast %550 : vector<1x8x8xf32> to vector<8x8xf32>
    %552 = vector.shape_cast %543 : vector<8x8xf32> to vector<1x8x8xf32>
    tpu.vector_store %arg8[%c0_368, %c1_369, %c0_370], %552 {strides = array<i32>} : memref<2x10x80xf32, #tpu.memory_space<vmem>>, vector<1x8x8xf32>,
    %c0_371 = arith.constant 0 : index
    %c1_372 = arith.constant 1 : index
    %c72 = arith.constant 72 : index
    %553 = vector.load %arg8[%c0_371, %c1_372, %c72] : memref<2x10x80xf32, #tpu.memory_space<vmem>>, vector<1x8x8xf32>
    %554 = vector.shape_cast %553 : vector<1x8x8xf32> to vector<8x8xf32>
    %555 = vector.shape_cast %543 : vector<8x8xf32> to vector<1x8x8xf32>
    tpu.vector_store %arg8[%c0_371, %c1_372, %c72], %555 {strides = array<i32>} : memref<2x10x80xf32, #tpu.memory_space<vmem>>, vector<1x8x8xf32>,
    %c0_373 = arith.constant 0 : index
    %c1_374 = arith.constant 1 : index
    %c8_375 = arith.constant 8 : index
    %556 = vector.load %arg8[%c0_373, %c1_374, %c8_375] : memref<2x10x80xf32, #tpu.memory_space<vmem>>, vector<1x8x64xf32>
    %557 = vector.shape_cast %556 : vector<1x8x64xf32> to vector<8x64xf32>
    %558 = vector.shape_cast %538 : vector<8x64xf32> to vector<1x8x64xf32>
    tpu.vector_store %arg8[%c0_373, %c1_374, %c8_375], %558 {strides = array<i32>} : memref<2x10x80xf32, #tpu.memory_space<vmem>>, vector<1x8x64xf32>,
    %c1_376 = arith.constant 1 : index
    %c0_377 = arith.constant 0 : index
    %c0_378 = arith.constant 0 : index
    %559 = vector.load %arg8[%c1_376, %c0_377, %c0_378] : memref<2x10x80xf32, #tpu.memory_space<vmem>>, vector<1x1x80xf32>
    %560 = vector.shape_cast %559 : vector<1x1x80xf32> to vector<1x80xf32>
    %561 = vector.shape_cast %542 : vector<1x80xf32> to vector<1x1x80xf32>
    tpu.vector_store %arg8[%c1_376, %c0_377, %c0_378], %561 {strides = array<i32>} : memref<2x10x80xf32, #tpu.memory_space<vmem>>, vector<1x1x80xf32>,
    %c1_379 = arith.constant 1 : index
    %c9_380 = arith.constant 9 : index
    %c0_381 = arith.constant 0 : index
    %562 = vector.load %arg8[%c1_379, %c9_380, %c0_381] : memref<2x10x80xf32, #tpu.memory_space<vmem>>, vector<1x1x80xf32>
    %563 = vector.shape_cast %562 : vector<1x1x80xf32> to vector<1x80xf32>
    %564 = vector.shape_cast %542 : vector<1x80xf32> to vector<1x1x80xf32>
    tpu.vector_store %arg8[%c1_379, %c9_380, %c0_381], %564 {strides = array<i32>} : memref<2x10x80xf32, #tpu.memory_space<vmem>>, vector<1x1x80xf32>,
    %c1_382 = arith.constant 1 : index
    %c1_383 = arith.constant 1 : index
    %c0_384 = arith.constant 0 : index
    %565 = vector.load %arg8[%c1_382, %c1_383, %c0_384] : memref<2x10x80xf32, #tpu.memory_space<vmem>>, vector<1x8x8xf32>
    %566 = vector.shape_cast %565 : vector<1x8x8xf32> to vector<8x8xf32>
    %567 = vector.shape_cast %543 : vector<8x8xf32> to vector<1x8x8xf32>
    tpu.vector_store %arg8[%c1_382, %c1_383, %c0_384], %567 {strides = array<i32>} : memref<2x10x80xf32, #tpu.memory_space<vmem>>, vector<1x8x8xf32>,
    %c1_385 = arith.constant 1 : index
    %c1_386 = arith.constant 1 : index
    %c72_387 = arith.constant 72 : index
    %568 = vector.load %arg8[%c1_385, %c1_386, %c72_387] : memref<2x10x80xf32, #tpu.memory_space<vmem>>, vector<1x8x8xf32>
    %569 = vector.shape_cast %568 : vector<1x8x8xf32> to vector<8x8xf32>
    %570 = vector.shape_cast %543 : vector<8x8xf32> to vector<1x8x8xf32>
    tpu.vector_store %arg8[%c1_385, %c1_386, %c72_387], %570 {strides = array<i32>} : memref<2x10x80xf32, #tpu.memory_space<vmem>>, vector<1x8x8xf32>,
    %c1_388 = arith.constant 1 : index
    %c1_389 = arith.constant 1 : index
    %c8_390 = arith.constant 8 : index
    %571 = vector.load %arg8[%c1_388, %c1_389, %c8_390] : memref<2x10x80xf32, #tpu.memory_space<vmem>>, vector<1x8x64xf32>
    %572 = vector.shape_cast %571 : vector<1x8x64xf32> to vector<8x64xf32>
    %573 = vector.shape_cast %541 : vector<8x64xf32> to vector<1x8x64xf32>
    tpu.vector_store %arg8[%c1_388, %c1_389, %c8_390], %573 {strides = array<i32>} : memref<2x10x80xf32, #tpu.memory_space<vmem>>, vector<1x8x64xf32>,
    %c9_391 = arith.constant 9 : index
    %c0_392 = arith.constant 0 : index
    %574 = vector.load %arg5[%c9_391, %c0_392] : memref<11x64xf32, #tpu.memory_space<vmem>>, vector<1x64xf32>
    %c10 = arith.constant 10 : index
    %c0_393 = arith.constant 0 : index
    %575 = vector.load %arg5[%c10, %c0_393] : memref<11x64xf32, #tpu.memory_space<vmem>>, vector<1x64xf32>
    %c0_394 = arith.constant 0 : index
    %c0_395 = arith.constant 0 : index
    %c0_396 = arith.constant 0 : index
    %576 = vector.load %arg8[%c0_394, %c0_395, %c0_396] : memref<2x10x80xf32, #tpu.memory_space<vmem>>, vector<1x8x64xf32>
    %577 = vector.shape_cast %576 : vector<1x8x64xf32> to vector<8x64xf32>
    %c9_397 = arith.constant 9 : index
    %c0_398 = arith.constant 0 : index
    %c0_399 = arith.constant 0 : index
    %578 = vector.load %arg4[%c9_397, %c0_398, %c0_399] : memref<11x9x64xf32, #tpu.memory_space<vmem>>, vector<1x1x64xf32>
    %579 = vector.shape_cast %578 : vector<1x1x64xf32> to vector<1x64xf32>
    %580 = vector.broadcast %579 : vector<1x64xf32> to vector<8x64xf32>
    %581 = arith.mulf %577, %580 : vector<8x64xf32>
    %582 = vector.broadcast %574 : vector<1x64xf32> to vector<8x64xf32>
    %583 = arith.addf %582, %581 : vector<8x64xf32>
    %c1_400 = arith.constant 1 : index
    %c0_401 = arith.constant 0 : index
    %c0_402 = arith.constant 0 : index
    %584 = vector.load %arg8[%c1_400, %c0_401, %c0_402] : memref<2x10x80xf32, #tpu.memory_space<vmem>>, vector<1x8x64xf32>
    %585 = vector.shape_cast %584 : vector<1x8x64xf32> to vector<8x64xf32>
    %c10_403 = arith.constant 10 : index
    %c0_404 = arith.constant 0 : index
    %c0_405 = arith.constant 0 : index
    %586 = vector.load %arg4[%c10_403, %c0_404, %c0_405] : memref<11x9x64xf32, #tpu.memory_space<vmem>>, vector<1x1x64xf32>
    %587 = vector.shape_cast %586 : vector<1x1x64xf32> to vector<1x64xf32>
    %588 = vector.broadcast %587 : vector<1x64xf32> to vector<8x64xf32>
    %589 = arith.mulf %585, %588 : vector<8x64xf32>
    %590 = vector.broadcast %575 : vector<1x64xf32> to vector<8x64xf32>
    %591 = arith.addf %590, %589 : vector<8x64xf32>
    %c0_406 = arith.constant 0 : index
    %c0_407 = arith.constant 0 : index
    %c8_408 = arith.constant 8 : index
    %592 = vector.load %arg8[%c0_406, %c0_407, %c8_408] : memref<2x10x80xf32, #tpu.memory_space<vmem>>, vector<1x8x64xf32>
    %593 = vector.shape_cast %592 : vector<1x8x64xf32> to vector<8x64xf32>
    %c9_409 = arith.constant 9 : index
    %c1_410 = arith.constant 1 : index
    %c0_411 = arith.constant 0 : index
    %594 = vector.load %arg4[%c9_409, %c1_410, %c0_411] : memref<11x9x64xf32, #tpu.memory_space<vmem>>, vector<1x1x64xf32>
    %595 = vector.shape_cast %594 : vector<1x1x64xf32> to vector<1x64xf32>
    %596 = vector.broadcast %595 : vector<1x64xf32> to vector<8x64xf32>
    %597 = arith.mulf %593, %596 : vector<8x64xf32>
    %598 = arith.addf %583, %597 : vector<8x64xf32>
    %c1_412 = arith.constant 1 : index
    %c0_413 = arith.constant 0 : index
    %c8_414 = arith.constant 8 : index
    %599 = vector.load %arg8[%c1_412, %c0_413, %c8_414] : memref<2x10x80xf32, #tpu.memory_space<vmem>>, vector<1x8x64xf32>
    %600 = vector.shape_cast %599 : vector<1x8x64xf32> to vector<8x64xf32>
    %c10_415 = arith.constant 10 : index
    %c1_416 = arith.constant 1 : index
    %c0_417 = arith.constant 0 : index
    %601 = vector.load %arg4[%c10_415, %c1_416, %c0_417] : memref<11x9x64xf32, #tpu.memory_space<vmem>>, vector<1x1x64xf32>
    %602 = vector.shape_cast %601 : vector<1x1x64xf32> to vector<1x64xf32>
    %603 = vector.broadcast %602 : vector<1x64xf32> to vector<8x64xf32>
    %604 = arith.mulf %600, %603 : vector<8x64xf32>
    %605 = arith.addf %591, %604 : vector<8x64xf32>
    %c0_418 = arith.constant 0 : index
    %c0_419 = arith.constant 0 : index
    %c16 = arith.constant 16 : index
    %606 = vector.load %arg8[%c0_418, %c0_419, %c16] : memref<2x10x80xf32, #tpu.memory_space<vmem>>, vector<1x8x64xf32>
    %607 = vector.shape_cast %606 : vector<1x8x64xf32> to vector<8x64xf32>
    %c9_420 = arith.constant 9 : index
    %c2_421 = arith.constant 2 : index
    %c0_422 = arith.constant 0 : index
    %608 = vector.load %arg4[%c9_420, %c2_421, %c0_422] : memref<11x9x64xf32, #tpu.memory_space<vmem>>, vector<1x1x64xf32>
    %609 = vector.shape_cast %608 : vector<1x1x64xf32> to vector<1x64xf32>
    %610 = vector.broadcast %609 : vector<1x64xf32> to vector<8x64xf32>
    %611 = arith.mulf %607, %610 : vector<8x64xf32>
    %612 = arith.addf %598, %611 : vector<8x64xf32>
    %c1_423 = arith.constant 1 : index
    %c0_424 = arith.constant 0 : index
    %c16_425 = arith.constant 16 : index
    %613 = vector.load %arg8[%c1_423, %c0_424, %c16_425] : memref<2x10x80xf32, #tpu.memory_space<vmem>>, vector<1x8x64xf32>
    %614 = vector.shape_cast %613 : vector<1x8x64xf32> to vector<8x64xf32>
    %c10_426 = arith.constant 10 : index
    %c2_427 = arith.constant 2 : index
    %c0_428 = arith.constant 0 : index
    %615 = vector.load %arg4[%c10_426, %c2_427, %c0_428] : memref<11x9x64xf32, #tpu.memory_space<vmem>>, vector<1x1x64xf32>
    %616 = vector.shape_cast %615 : vector<1x1x64xf32> to vector<1x64xf32>
    %617 = vector.broadcast %616 : vector<1x64xf32> to vector<8x64xf32>
    %618 = arith.mulf %614, %617 : vector<8x64xf32>
    %619 = arith.addf %605, %618 : vector<8x64xf32>
    %c0_429 = arith.constant 0 : index
    %c1_430 = arith.constant 1 : index
    %c0_431 = arith.constant 0 : index
    %620 = vector.load %arg8[%c0_429, %c1_430, %c0_431] : memref<2x10x80xf32, #tpu.memory_space<vmem>>, vector<1x8x64xf32>
    %621 = vector.shape_cast %620 : vector<1x8x64xf32> to vector<8x64xf32>
    %c9_432 = arith.constant 9 : index
    %c3_433 = arith.constant 3 : index
    %c0_434 = arith.constant 0 : index
    %622 = vector.load %arg4[%c9_432, %c3_433, %c0_434] : memref<11x9x64xf32, #tpu.memory_space<vmem>>, vector<1x1x64xf32>
    %623 = vector.shape_cast %622 : vector<1x1x64xf32> to vector<1x64xf32>
    %624 = vector.broadcast %623 : vector<1x64xf32> to vector<8x64xf32>
    %625 = arith.mulf %621, %624 : vector<8x64xf32>
    %626 = arith.addf %612, %625 : vector<8x64xf32>
    %c1_435 = arith.constant 1 : index
    %c1_436 = arith.constant 1 : index
    %c0_437 = arith.constant 0 : index
    %627 = vector.load %arg8[%c1_435, %c1_436, %c0_437] : memref<2x10x80xf32, #tpu.memory_space<vmem>>, vector<1x8x64xf32>
    %628 = vector.shape_cast %627 : vector<1x8x64xf32> to vector<8x64xf32>
    %c10_438 = arith.constant 10 : index
    %c3_439 = arith.constant 3 : index
    %c0_440 = arith.constant 0 : index
    %629 = vector.load %arg4[%c10_438, %c3_439, %c0_440] : memref<11x9x64xf32, #tpu.memory_space<vmem>>, vector<1x1x64xf32>
    %630 = vector.shape_cast %629 : vector<1x1x64xf32> to vector<1x64xf32>
    %631 = vector.broadcast %630 : vector<1x64xf32> to vector<8x64xf32>
    %632 = arith.mulf %628, %631 : vector<8x64xf32>
    %633 = arith.addf %619, %632 : vector<8x64xf32>
    %c0_441 = arith.constant 0 : index
    %c1_442 = arith.constant 1 : index
    %c8_443 = arith.constant 8 : index
    %634 = vector.load %arg8[%c0_441, %c1_442, %c8_443] : memref<2x10x80xf32, #tpu.memory_space<vmem>>, vector<1x8x64xf32>
    %635 = vector.shape_cast %634 : vector<1x8x64xf32> to vector<8x64xf32>
    %c9_444 = arith.constant 9 : index
    %c4_445 = arith.constant 4 : index
    %c0_446 = arith.constant 0 : index
    %636 = vector.load %arg4[%c9_444, %c4_445, %c0_446] : memref<11x9x64xf32, #tpu.memory_space<vmem>>, vector<1x1x64xf32>
    %637 = vector.shape_cast %636 : vector<1x1x64xf32> to vector<1x64xf32>
    %638 = vector.broadcast %637 : vector<1x64xf32> to vector<8x64xf32>
    %639 = arith.mulf %635, %638 : vector<8x64xf32>
    %640 = arith.addf %626, %639 : vector<8x64xf32>
    %c1_447 = arith.constant 1 : index
    %c1_448 = arith.constant 1 : index
    %c8_449 = arith.constant 8 : index
    %641 = vector.load %arg8[%c1_447, %c1_448, %c8_449] : memref<2x10x80xf32, #tpu.memory_space<vmem>>, vector<1x8x64xf32>
    %642 = vector.shape_cast %641 : vector<1x8x64xf32> to vector<8x64xf32>
    %c10_450 = arith.constant 10 : index
    %c4_451 = arith.constant 4 : index
    %c0_452 = arith.constant 0 : index
    %643 = vector.load %arg4[%c10_450, %c4_451, %c0_452] : memref<11x9x64xf32, #tpu.memory_space<vmem>>, vector<1x1x64xf32>
    %644 = vector.shape_cast %643 : vector<1x1x64xf32> to vector<1x64xf32>
    %645 = vector.broadcast %644 : vector<1x64xf32> to vector<8x64xf32>
    %646 = arith.mulf %642, %645 : vector<8x64xf32>
    %647 = arith.addf %633, %646 : vector<8x64xf32>
    %c0_453 = arith.constant 0 : index
    %c1_454 = arith.constant 1 : index
    %c16_455 = arith.constant 16 : index
    %648 = vector.load %arg8[%c0_453, %c1_454, %c16_455] : memref<2x10x80xf32, #tpu.memory_space<vmem>>, vector<1x8x64xf32>
    %649 = vector.shape_cast %648 : vector<1x8x64xf32> to vector<8x64xf32>
    %c9_456 = arith.constant 9 : index
    %c5_457 = arith.constant 5 : index
    %c0_458 = arith.constant 0 : index
    %650 = vector.load %arg4[%c9_456, %c5_457, %c0_458] : memref<11x9x64xf32, #tpu.memory_space<vmem>>, vector<1x1x64xf32>
    %651 = vector.shape_cast %650 : vector<1x1x64xf32> to vector<1x64xf32>
    %652 = vector.broadcast %651 : vector<1x64xf32> to vector<8x64xf32>
    %653 = arith.mulf %649, %652 : vector<8x64xf32>
    %654 = arith.addf %640, %653 : vector<8x64xf32>
    %c1_459 = arith.constant 1 : index
    %c1_460 = arith.constant 1 : index
    %c16_461 = arith.constant 16 : index
    %655 = vector.load %arg8[%c1_459, %c1_460, %c16_461] : memref<2x10x80xf32, #tpu.memory_space<vmem>>, vector<1x8x64xf32>
    %656 = vector.shape_cast %655 : vector<1x8x64xf32> to vector<8x64xf32>
    %c10_462 = arith.constant 10 : index
    %c5_463 = arith.constant 5 : index
    %c0_464 = arith.constant 0 : index
    %657 = vector.load %arg4[%c10_462, %c5_463, %c0_464] : memref<11x9x64xf32, #tpu.memory_space<vmem>>, vector<1x1x64xf32>
    %658 = vector.shape_cast %657 : vector<1x1x64xf32> to vector<1x64xf32>
    %659 = vector.broadcast %658 : vector<1x64xf32> to vector<8x64xf32>
    %660 = arith.mulf %656, %659 : vector<8x64xf32>
    %661 = arith.addf %647, %660 : vector<8x64xf32>
    %c0_465 = arith.constant 0 : index
    %c2_466 = arith.constant 2 : index
    %c0_467 = arith.constant 0 : index
    %662 = vector.load %arg8[%c0_465, %c2_466, %c0_467] : memref<2x10x80xf32, #tpu.memory_space<vmem>>, vector<1x8x64xf32>
    %663 = vector.shape_cast %662 : vector<1x8x64xf32> to vector<8x64xf32>
    %c9_468 = arith.constant 9 : index
    %c6_469 = arith.constant 6 : index
    %c0_470 = arith.constant 0 : index
    %664 = vector.load %arg4[%c9_468, %c6_469, %c0_470] : memref<11x9x64xf32, #tpu.memory_space<vmem>>, vector<1x1x64xf32>
    %665 = vector.shape_cast %664 : vector<1x1x64xf32> to vector<1x64xf32>
    %666 = vector.broadcast %665 : vector<1x64xf32> to vector<8x64xf32>
    %667 = arith.mulf %663, %666 : vector<8x64xf32>
    %668 = arith.addf %654, %667 : vector<8x64xf32>
    %c1_471 = arith.constant 1 : index
    %c2_472 = arith.constant 2 : index
    %c0_473 = arith.constant 0 : index
    %669 = vector.load %arg8[%c1_471, %c2_472, %c0_473] : memref<2x10x80xf32, #tpu.memory_space<vmem>>, vector<1x8x64xf32>
    %670 = vector.shape_cast %669 : vector<1x8x64xf32> to vector<8x64xf32>
    %c10_474 = arith.constant 10 : index
    %c6_475 = arith.constant 6 : index
    %c0_476 = arith.constant 0 : index
    %671 = vector.load %arg4[%c10_474, %c6_475, %c0_476] : memref<11x9x64xf32, #tpu.memory_space<vmem>>, vector<1x1x64xf32>
    %672 = vector.shape_cast %671 : vector<1x1x64xf32> to vector<1x64xf32>
    %673 = vector.broadcast %672 : vector<1x64xf32> to vector<8x64xf32>
    %674 = arith.mulf %670, %673 : vector<8x64xf32>
    %675 = arith.addf %661, %674 : vector<8x64xf32>
    %c0_477 = arith.constant 0 : index
    %c2_478 = arith.constant 2 : index
    %c8_479 = arith.constant 8 : index
    %676 = vector.load %arg8[%c0_477, %c2_478, %c8_479] : memref<2x10x80xf32, #tpu.memory_space<vmem>>, vector<1x8x64xf32>
    %677 = vector.shape_cast %676 : vector<1x8x64xf32> to vector<8x64xf32>
    %c9_480 = arith.constant 9 : index
    %c7_481 = arith.constant 7 : index
    %c0_482 = arith.constant 0 : index
    %678 = vector.load %arg4[%c9_480, %c7_481, %c0_482] : memref<11x9x64xf32, #tpu.memory_space<vmem>>, vector<1x1x64xf32>
    %679 = vector.shape_cast %678 : vector<1x1x64xf32> to vector<1x64xf32>
    %680 = vector.broadcast %679 : vector<1x64xf32> to vector<8x64xf32>
    %681 = arith.mulf %677, %680 : vector<8x64xf32>
    %682 = arith.addf %668, %681 : vector<8x64xf32>
    %c1_483 = arith.constant 1 : index
    %c2_484 = arith.constant 2 : index
    %c8_485 = arith.constant 8 : index
    %683 = vector.load %arg8[%c1_483, %c2_484, %c8_485] : memref<2x10x80xf32, #tpu.memory_space<vmem>>, vector<1x8x64xf32>
    %684 = vector.shape_cast %683 : vector<1x8x64xf32> to vector<8x64xf32>
    %c10_486 = arith.constant 10 : index
    %c7_487 = arith.constant 7 : index
    %c0_488 = arith.constant 0 : index
    %685 = vector.load %arg4[%c10_486, %c7_487, %c0_488] : memref<11x9x64xf32, #tpu.memory_space<vmem>>, vector<1x1x64xf32>
    %686 = vector.shape_cast %685 : vector<1x1x64xf32> to vector<1x64xf32>
    %687 = vector.broadcast %686 : vector<1x64xf32> to vector<8x64xf32>
    %688 = arith.mulf %684, %687 : vector<8x64xf32>
    %689 = arith.addf %675, %688 : vector<8x64xf32>
    %c0_489 = arith.constant 0 : index
    %c2_490 = arith.constant 2 : index
    %c16_491 = arith.constant 16 : index
    %690 = vector.load %arg8[%c0_489, %c2_490, %c16_491] : memref<2x10x80xf32, #tpu.memory_space<vmem>>, vector<1x8x64xf32>
    %691 = vector.shape_cast %690 : vector<1x8x64xf32> to vector<8x64xf32>
    %c9_492 = arith.constant 9 : index
    %c8_493 = arith.constant 8 : index
    %c0_494 = arith.constant 0 : index
    %692 = vector.load %arg4[%c9_492, %c8_493, %c0_494] : memref<11x9x64xf32, #tpu.memory_space<vmem>>, vector<1x1x64xf32>
    %693 = vector.shape_cast %692 : vector<1x1x64xf32> to vector<1x64xf32>
    %694 = vector.broadcast %693 : vector<1x64xf32> to vector<8x64xf32>
    %695 = arith.mulf %691, %694 : vector<8x64xf32>
    %696 = arith.addf %682, %695 : vector<8x64xf32>
    %c1_495 = arith.constant 1 : index
    %c2_496 = arith.constant 2 : index
    %c16_497 = arith.constant 16 : index
    %697 = vector.load %arg8[%c1_495, %c2_496, %c16_497] : memref<2x10x80xf32, #tpu.memory_space<vmem>>, vector<1x8x64xf32>
    %698 = vector.shape_cast %697 : vector<1x8x64xf32> to vector<8x64xf32>
    %c10_498 = arith.constant 10 : index
    %c8_499 = arith.constant 8 : index
    %c0_500 = arith.constant 0 : index
    %699 = vector.load %arg4[%c10_498, %c8_499, %c0_500] : memref<11x9x64xf32, #tpu.memory_space<vmem>>, vector<1x1x64xf32>
    %700 = vector.shape_cast %699 : vector<1x1x64xf32> to vector<1x64xf32>
    %701 = vector.broadcast %700 : vector<1x64xf32> to vector<8x64xf32>
    %702 = arith.mulf %698, %701 : vector<8x64xf32>
    %703 = arith.addf %689, %702 : vector<8x64xf32>
    %704 = arith.mulf %538, %696 : vector<8x64xf32>
    %705 = arith.addf %535, %704 : vector<8x64xf32>
    %706 = arith.mulf %541, %703 : vector<8x64xf32>
    %707 = arith.addf %705, %706 : vector<8x64xf32>
    %c0_501 = arith.constant 0 : index
    %c0_502 = arith.constant 0 : index
    %c0_503 = arith.constant 0 : index
    %708 = vector.load %arg6[%c0_501, %c0_502, %c0_503] : memref<1x8x64xf32, #tpu.memory_space<vmem>>, vector<1x8x64xf32>
    %709 = vector.shape_cast %708 : vector<1x8x64xf32> to vector<8x64xf32>
    %710 = vector.shape_cast %707 : vector<8x64xf32> to vector<1x8x64xf32>
    tpu.vector_store %arg6[%c0_501, %c0_502, %c0_503], %710 {strides = array<i32>} : memref<1x8x64xf32, #tpu.memory_space<vmem>>, vector<1x8x64xf32>,
    return
  }
  func.func @transform_0(%arg0: i32) -> (i32, i32, i32, i32) {
    %c0_i32 = arith.constant 0 : i32
    %c0_i32_0 = arith.constant 0 : i32
    %c0_i32_1 = arith.constant 0 : i32
    %c0_i32_2 = arith.constant 0 : i32
    return %arg0, %c0_i32, %c0_i32_0, %c0_i32_1 : i32, i32, i32, i32
  }
  func.func @transform_1(%arg0: i32) -> (i32, i32) {
    %c0_i32 = arith.constant 0 : i32
    %c0_i32_0 = arith.constant 0 : i32
    %c0_i32_1 = arith.constant 0 : i32
    return %c0_i32, %c0_i32_0 : i32, i32
  }
  func.func @transform_2(%arg0: i32) -> (i32, i32) {
    %c0_i32 = arith.constant 0 : i32
    %c0_i32_0 = arith.constant 0 : i32
    %c0_i32_1 = arith.constant 0 : i32
    return %c0_i32, %c0_i32_0 : i32, i32
  }
  func.func @transform_3(%arg0: i32) -> (i32, i32, i32) {
    %c0_i32 = arith.constant 0 : i32
    %c0_i32_0 = arith.constant 0 : i32
    %c0_i32_1 = arith.constant 0 : i32
    %c0_i32_2 = arith.constant 0 : i32
    return %c0_i32, %c0_i32_0, %c0_i32_1 : i32, i32, i32
  }
  func.func @transform_4(%arg0: i32) -> (i32, i32) {
    %c0_i32 = arith.constant 0 : i32
    %c0_i32_0 = arith.constant 0 : i32
    %c0_i32_1 = arith.constant 0 : i32
    return %c0_i32, %c0_i32_0 : i32, i32
  }
  func.func @transform_5(%arg0: i32) -> (i32, i32, i32) {
    %c0_i32 = arith.constant 0 : i32
    %c0_i32_0 = arith.constant 0 : i32
    %c0_i32_1 = arith.constant 0 : i32
    return %arg0, %c0_i32, %c0_i32_0 : i32, i32, i32
  }
}

</mosaic_0001>

<llo_original>
// kernel: tile.61
$region0: #{tile.61}
  #allocation0 [shape = 's32[1]{0}', space=sflag, size = 0x4, scoped, tag = 'scoped memory for tile.61']
  %s0 = inlined_call_operand.vmem [shape: f32[8], index: 0, kind: input, shape index: {}]
  %s1 = inlined_call_operand.vmem [shape: f32[8,8], index: 1, kind: output, shape index: {}]
  // Predicated region
  $region2: #{tile.61} parent=0 // pred_check
    _
  $region3: #{tile.61} parent=0 // pred_check_branch
    %3 = sbr.rel (0) target = $region5
  $region4: #{tile.61} parent=0 // pred_region
    _
  $region5: #{tile.61} parent=0 // pred_fallthru
    _
  %v4 = vld [vmem:[%s0] ss:$0 sm:$0xff]
  %5 = vst [vmem:[%s1] sm:$0xff] %v4

// kernel: tile.63
$region0: #{tile.63}
  %s0 = inlined_call_operand.vmem [shape: f32[8,8], index: 0, kind: input, shape index: {}]
  %s1 = inlined_call_operand.vmem [shape: f32[1,64], index: 1, kind: output, shape index: {}]
  $region1: #{tile.63} parent=0
    #allocation0 [shape = 'u8[4096]{0}', space=vmem, size = 0x1000, scoped, tag = 'scoped mem for output reshape']
    %v2 = vld [vmem:[%s0] sm:$0x1]
    %vm3 = vcmask 64512
    %4 = vst.msk [vmem:[#allocation0] sm:$0x1] %vm3, %v2
    %s5 = scalar_lea.vmem %s0, 7
    %v6 = vld [vmem:[%s5] sm:$0x1]
    %7 = vrot.lane.b32.xlu0 %v6, 56
    %v8 = vpop.permute.xlu0 %7
    %vm9 = vcmask 523712
    %10 = vst.msk [vmem:[#allocation0] sm:$0x1] %vm9, %v8
    %s11 = scalar_lea.vmem %s0, 6
    %v12 = vld [vmem:[%s11] sm:$0x1]
    %13 = vrot.lane.b32.xlu0 %v12, 48
    %v14 = vpop.permute.xlu0 %13
    %vm15 = vcmask 458112
    %16 = vst.msk [vmem:[#allocation0] sm:$0x1] %vm15, %v14
    %s17 = scalar_lea.vmem %s0, 5
    %v18 = vld [vmem:[%s17] sm:$0x1]
    %19 = vrot.lane.b32.xlu0 %v18, 40
    %v20 = vpop.permute.xlu0 %19
    %vm21 = vcmask 392512
    %22 = vst.msk [vmem:[#allocation0] sm:$0x1] %vm21, %v20
    %s23 = scalar_lea.vmem %s0, 4
    %v24 = vld [vmem:[%s23] sm:$0x1]
    %25 = vrot.lane.b32.xlu0 %v24, 32
    %v26 = vpop.permute.xlu0 %25
    %vm27 = vcmask 326912
    %28 = vst.msk [vmem:[#allocation0] sm:$0x1] %vm27, %v26
    %s29 = scalar_lea.vmem %s0, 3
    %v30 = vld [vmem:[%s29] sm:$0x1]
    %31 = vrot.lane.b32.xlu0 %v30, 24
    %v32 = vpop.permute.xlu0 %31
    %vm33 = vcmask 261312
    %34 = vst.msk [vmem:[#allocation0] sm:$0x1] %vm33, %v32
    %s35 = scalar_lea.vmem %s0, 2
    %v36 = vld [vmem:[%s35] sm:$0x1]
    %37 = vrot.lane.b32.xlu0 %v36, 16
    %v38 = vpop.permute.xlu0 %37
    %vm39 = vcmask 195712
    %40 = vst.msk [vmem:[#allocation0] sm:$0x1] %vm39, %v38
    %s41 = scalar_lea.vmem %s0, 1
    %v42 = vld [vmem:[%s41] sm:$0x1]
    %43 = vrot.lane.b32.xlu0 %v42, 8
    %v44 = vpop.permute.xlu0 %43
    %vm45 = vcmask 130112
    %46 = vst.msk [vmem:[#allocation0] sm:$0x1] %vm45, %v44
    %s48 = sshll.u32 1, 1
    %s49 = ssub.s32 %s48, 1
    %v51 = vld [vmem:[#allocation0] sm:%s49]
    %s52 = sshll.u32 1, 1
    %s53 = ssub.s32 %s52, 1
    %54 = vst [vmem:[%s1] sm:%s53] %v51

// kernel: tile.111
$region0: #{tile.111}
  %s0 = inlined_call_operand.vmem [shape: f32[11,8,8], index: 0, kind: input, shape index: {}]
  %s1 = inlined_call_operand.vmem [shape: f32[11,64], index: 1, kind: output, shape index: {}]
  %v2 = vld [vmem:[%s0] ss:$8 sm:$0xf]
  %v3 = vld [vmem:[%s0] ss:$8 sm:$0xf0]
  %vm4 = vcmask 1047556
  %v5 = vsel %vm4, %v3, %v2
  %vm6 = vcmask 64512
  %7 = vst.msk [vmem:[%s1] sm:$0xff] %vm6, %v5
  %s8 = scalar_lea.vmem %s0, 64
  %v9 = vld [vmem:[%s8] ss:$8 sm:$0x7]
  %vm10 = vcmask 64512
  %s11 = scalar_lea.vmem %s1, 8
  %12 = vst.msk [vmem:[%s11] sm:$0x7] %vm10, %v9
  %s13 = scalar_lea.vmem %s0, 7
  %v14 = vld [vmem:[%s13] ss:$8 sm:$0xf]
  %s15 = scalar_lea.vmem %s0, 7
  %v16 = vld [vmem:[%s15] ss:$8 sm:$0xf0]
  %vm17 = vcmask 1047556
  %v18 = vsel %vm17, %v16, %v14
  %19 = vrot.lane.b32.xlu0 %v18, 56
  %v20 = vpop.permute.xlu0 %19
  %vm21 = vcmask 523712
  %22 = vst.msk [vmem:[%s1] sm:$0xff] %vm21, %v20
  %s23 = scalar_lea.vmem %s0, 71
  %v24 = vld [vmem:[%s23] ss:$8 sm:$0x7]
  %25 = vrot.lane.b32.xlu0 %v24, 56
  %v26 = vpop.permute.xlu0 %25
  %vm27 = vcmask 523712
  %s28 = scalar_lea.vmem %s1, 8
  %29 = vst.msk [vmem:[%s28] sm:$0x7] %vm27, %v26
  %s30 = scalar_lea.vmem %s0, 6
  %v31 = vld [vmem:[%s30] ss:$8 sm:$0xf]
  %s32 = scalar_lea.vmem %s0, 6
  %v33 = vld [vmem:[%s32] ss:$8 sm:$0xf0]
  %vm34 = vcmask 1047556
  %v35 = vsel %vm34, %v33, %v31
  %36 = vrot.lane.b32.xlu0 %v35, 48
  %v37 = vpop.permute.xlu0 %36
  %vm38 = vcmask 458112
  %39 = vst.msk [vmem:[%s1] sm:$0xff] %vm38, %v37
  %s40 = scalar_lea.vmem %s0, 70
  %v41 = vld [vmem:[%s40] ss:$8 sm:$0x7]
  %42 = vrot.lane.b32.xlu0 %v41, 48
  %v43 = vpop.permute.xlu0 %42
  %vm44 = vcmask 458112
  %s45 = scalar_lea.vmem %s1, 8
  %46 = vst.msk [vmem:[%s45] sm:$0x7] %vm44, %v43
  %s47 = scalar_lea.vmem %s0, 5
  %v48 = vld [vmem:[%s47] ss:$8 sm:$0xf]
  %s49 = scalar_lea.vmem %s0, 5
  %v50 = vld [vmem:[%s49] ss:$8 sm:$0xf0]
  %vm51 = vcmask 1047556
  %v52 = vsel %vm51, %v50, %v48
  %53 = vrot.lane.b32.xlu0 %v52, 40
  %v54 = vpop.permute.xlu0 %53
  %vm55 = vcmask 392512
  %56 = vst.msk [vmem:[%s1] sm:$0xff] %vm55, %v54
  %s57 = scalar_lea.vmem %s0, 69
  %v58 = vld [vmem:[%s57] ss:$8 sm:$0x7]
  %59 = vrot.lane.b32.xlu0 %v58, 40
  %v60 = vpop.permute.xlu0 %59
  %vm61 = vcmask 392512
  %s62 = scalar_lea.vmem %s1, 8
  %63 = vst.msk [vmem:[%s62] sm:$0x7] %vm61, %v60
  %s64 = scalar_lea.vmem %s0, 4
  %v65 = vld [vmem:[%s64] ss:$8 sm:$0xf]
  %s66 = scalar_lea.vmem %s0, 4
  %v67 = vld [vmem:[%s66] ss:$8 sm:$0xf0]
  %vm68 = vcmask 1047556
  %v69 = vsel %vm68, %v67, %v65
  %70 = vrot.lane.b32.xlu0 %v69, 32
  %v71 = vpop.permute.xlu0 %70
  %vm72 = vcmask 326912
  %73 = vst.msk [vmem:[%s1] sm:$0xff] %vm72, %v71
  %s74 = scalar_lea.vmem %s0, 68
  %v75 = vld [vmem:[%s74] ss:$8 sm:$0x7]
  %76 = vrot.lane.b32.xlu0 %v75, 32
  %v77 = vpop.permute.xlu0 %76
  %vm78 = vcmask 326912
  %s79 = scalar_lea.vmem %s1, 8
  %80 = vst.msk [vmem:[%s79] sm:$0x7] %vm78, %v77
  %s81 = scalar_lea.vmem %s0, 3
  %v82 = vld [vmem:[%s81] ss:$8 sm:$0xf]
  %s83 = scalar_lea.vmem %s0, 3
  %v84 = vld [vmem:[%s83] ss:$8 sm:$0xf0]
  %vm85 = vcmask 1047556
  %v86 = vsel %vm85, %v84, %v82
  %87 = vrot.lane.b32.xlu0 %v86, 24
  %v88 = vpop.permute.xlu0 %87
  %vm89 = vcmask 261312
  %90 = vst.msk [vmem:[%s1] sm:$0xff] %vm89, %v88
  %s91 = scalar_lea.vmem %s0, 67
  %v92 = vld [vmem:[%s91] ss:$8 sm:$0x7]
  %93 = vrot.lane.b32.xlu0 %v92, 24
  %v94 = vpop.permute.xlu0 %93
  %vm95 = vcmask 261312
  %s96 = scalar_lea.vmem %s1, 8
  %97 = vst.msk [vmem:[%s96] sm:$0x7] %vm95, %v94
  %s98 = scalar_lea.vmem %s0, 2
  %v99 = vld [vmem:[%s98] ss:$8 sm:$0xf]
  %s100 = scalar_lea.vmem %s0, 2
  %v101 = vld [vmem:[%s100] ss:$8 sm:$0xf0]
  %vm102 = vcmask 1047556
  %v103 = vsel %vm102, %v101, %v99
  %104 = vrot.lane.b32.xlu0 %v103, 16
  %v105 = vpop.permute.xlu0 %104
  %vm106 = vcmask 195712
  %107 = vst.msk [vmem:[%s1] sm:$0xff] %vm106, %v105
  %s108 = scalar_lea.vmem %s0, 66
  %v109 = vld [vmem:[%s108] ss:$8 sm:$0x7]
  %110 = vrot.lane.b32.xlu0 %v109, 16
  %v111 = vpop.permute.xlu0 %110
  %vm112 = vcmask 195712
  %s113 = scalar_lea.vmem %s1, 8
  %114 = vst.msk [vmem:[%s113] sm:$0x7] %vm112, %v111
  %s115 = scalar_lea.vmem %s0, 1
  %v116 = vld [vmem:[%s115] ss:$8 sm:$0xf]
  %s117 = scalar_lea.vmem %s0, 1
  %v118 = vld [vmem:[%s117] ss:$8 sm:$0xf0]
  %vm119 = vcmask 1047556
  %v120 = vsel %vm119, %v118, %v116
  %121 = vrot.lane.b32.xlu0 %v120, 8
  %v122 = vpop.permute.xlu0 %121
  %vm123 = vcmask 130112
  %124 = vst.msk [vmem:[%s1] sm:$0xff] %vm123, %v122
  %s125 = scalar_lea.vmem %s0, 65
  %v126 = vld [vmem:[%s125] ss:$8 sm:$0x7]
  %127 = vrot.lane.b32.xlu0 %v126, 8
  %v128 = vpop.permute.xlu0 %127
  %vm129 = vcmask 130112
  %s130 = scalar_lea.vmem %s1, 8
  %131 = vst.msk [vmem:[%s130] sm:$0x7] %vm129, %v128

// kernel: _lambda_.1
$region0: #{_lambda_.1}
  #allocation0 [shape = 'u32[]', space=smem, size = 0x4, offset = 0x4, fixed_abs, tag = 'smem constant byte address 0x4 - core index']
  #allocation1 [shape = 'u32[144,128]{1,0:T(1,128)}', space=vmem, size = 0x12000, scoped, tag = 'internal scratch']
  #allocation2 [shape = 'f32[4,9,72]{2,1,0:T(8,128)}', space=vmem, size = 0x8000, scoped, tag = 'scratch operand']
  #allocation3 [shape = 'f32[2,10,80]{2,1,0:T(8,128)}', space=vmem, size = 0x4000, scoped, tag = 'scratch operand']
  %s0 = inlined_call_operand.vmem [shape: f32[2,4,8,64], index: 0, kind: input, shape index: {}]
  %s1 = inlined_call_operand.vmem [shape: f32[2,64], index: 1, kind: input, shape index: {}]
  %s2 = inlined_call_operand.vmem [shape: f32[64,64], index: 2, kind: input, shape index: {}]
  %s3 = inlined_call_operand.vmem [shape: f32[11,9,64], index: 3, kind: input, shape index: {}]
  %s4 = inlined_call_operand.vmem [shape: f32[11,64], index: 4, kind: input, shape index: {}]
  %s5 = inlined_call_operand.vmem [shape: f32[2,8,64], index: 5, kind: output, shape index: {}]
  %s6 = sld [smem:[#allocation0]]
  $region53: #{_lambda_.1} parent=0
    _
  %s8 = ssub.s32 1, %s6
  %s9 = scalar_select 0, %s8, %s6
  loop: start=0, step=1, limit=4
  $region2: #{_lambda_.1} parent=0 // loop_pre_header
    _
  $region3: #{_lambda_.1} parent=0 // loop_header
    %s11 = sphi 0, %s15
    %p12 = scmp.ge.s32.totalorder %s11, 4
    %s21 = sphi 0, %s23
    %s24 = sphi 0, %s21
    %s25 = sphi 0, %s24
    %s41 = sphi 0, %s25
    %s45 = sphi 0, %s45
    %s47 = sphi 0, %s45
    %s48 = sphi 0, %s47
    %s62 = sphi 0, %s48
    %s66 = sphi 0, %s66
    %s68 = sphi 0, %s66
    %s69 = sphi 0, %s68
    %s83 = sphi 0, %s69
    %s87 = sphi 0, %s87
    %s89 = sphi 0, %s87
    %s90 = sphi 0, %s89
    %s104 = sphi 0, %s90
    %s108 = sphi 0, %s108
    %s110 = sphi 0, %s108
    %s111 = sphi 0, %s110
    %s125 = sphi 0, %s111
    %s131 = sphi 0, %s133
    %s134 = sphi 0, %s131
    %s135 = sphi 0, %s134
    %s151 = sphi 0, %s135
  $region4: #{_lambda_.1} parent=0 // loop_header_branch
    %14 = sbr.rel (%p12) target = $region8
  $region5: #{_lambda_.1} parent=0 // loop_body
    %s16 = ssub.s32 %s11, 1
    %s17 = ssub.s32 %s11, 2
    %s18 = sadd.s32 %s11, 1
    %s19 = ssub.s32 %s11, %s18
    %p20 = scmp.eq.s32.totalorder %s19, 0
    %s22 = sadd.s32 %s21, 1
    %s23 = scalar_select %p20, %s21, %s22
    %p26 = pneg %p20
    %p27 = scmp.eq.s32.totalorder %s11, 1
    %p28 = por %p26, %p27
    %p29 = scmp.ne.s32.totalorder %s21, %s24
    %p30 = scmp.eq.s32.totalorder %s11, 0
    %p31 = por %p29, %p30
    %p32 = scmp.ne.s32.totalorder %s21, %s24
    %p33 = scmp.eq.s32.totalorder %s16, 1
    %p34 = por %p32, %p33
    %p35 = scmp.ne.s32.totalorder %s24, %s25
    %p36 = scmp.eq.s32.totalorder %s16, 0
    %p37 = por %p35, %p36
    %p38 = scmp.ne.s32.totalorder %s24, %s25
    %p39 = scmp.eq.s32.totalorder %s17, 1
    %p40 = por %p38, %p39
    %p42 = scmp.ne.s32.totalorder %s25, %s41
    %p43 = scmp.eq.s32.totalorder %s17, 0
    %p44 = por %p42, %p43
    %s46 = sadd.s32 %s45, 1
    %p49 = scmp.eq.s32.totalorder %s11, 1
    %p50 = scmp.ne.s32.totalorder %s45, %s47
    %p51 = scmp.eq.s32.totalorder %s11, 0
    %p52 = por %p50, %p51
    %p53 = scmp.ne.s32.totalorder %s45, %s47
    %p54 = scmp.eq.s32.totalorder %s16, 1
    %p55 = por %p53, %p54
    %p56 = scmp.ne.s32.totalorder %s47, %s48
    %p57 = scmp.eq.s32.totalorder %s16, 0
    %p58 = por %p56, %p57
    %p59 = scmp.ne.s32.totalorder %s47, %s48
    %p60 = scmp.eq.s32.totalorder %s17, 1
    %p61 = por %p59, %p60
    %p63 = scmp.ne.s32.totalorder %s48, %s62
    %p64 = scmp.eq.s32.totalorder %s17, 0
    %p65 = por %p63, %p64
    %s67 = sadd.s32 %s66, 1
    %p70 = scmp.eq.s32.totalorder %s11, 1
    %p71 = scmp.ne.s32.totalorder %s66, %s68
    %p72 = scmp.eq.s32.totalorder %s11, 0
    %p73 = por %p71, %p72
    %p74 = scmp.ne.s32.totalorder %s66, %s68
    %p75 = scmp.eq.s32.totalorder %s16, 1
    %p76 = por %p74, %p75
    %p77 = scmp.ne.s32.totalorder %s68, %s69
    %p78 = scmp.eq.s32.totalorder %s16, 0
    %p79 = por %p77, %p78
    %p80 = scmp.ne.s32.totalorder %s68, %s69
    %p81 = scmp.eq.s32.totalorder %s17, 1
    %p82 = por %p80, %p81
    %p84 = scmp.ne.s32.totalorder %s69, %s83
    %p85 = scmp.eq.s32.totalorder %s17, 0
    %p86 = por %p84, %p85
    %s88 = sadd.s32 %s87, 1
    %p91 = scmp.eq.s32.totalorder %s11, 1
    %p92 = scmp.ne.s32.totalorder %s87, %s89
    %p93 = scmp.eq.s32.totalorder %s11, 0
    %p94 = por %p92, %p93
    %p95 = scmp.ne.s32.totalorder %s87, %s89
    %p96 = scmp.eq.s32.totalorder %s16, 1
    %p97 = por %p95, %p96
    %p98 = scmp.ne.s32.totalorder %s89, %s90
    %p99 = scmp.eq.s32.totalorder %s16, 0
    %p100 = por %p98, %p99
    %p101 = scmp.ne.s32.totalorder %s89, %s90
    %p102 = scmp.eq.s32.totalorder %s17, 1
    %p103 = por %p101, %p102
    %p105 = scmp.ne.s32.totalorder %s90, %s104
    %p106 = scmp.eq.s32.totalorder %s17, 0
    %p107 = por %p105, %p106
    %s109 = sadd.s32 %s108, 1
    %p112 = scmp.eq.s32.totalorder %s11, 1
    %p113 = scmp.ne.s32.totalorder %s108, %s110
    %p114 = scmp.eq.s32.totalorder %s11, 0
    %p115 = por %p113, %p114
    %p116 = scmp.ne.s32.totalorder %s108, %s110
    %p117 = scmp.eq.s32.totalorder %s16, 1
    %p118 = por %p116, %p117
    %p119 = scmp.ne.s32.totalorder %s110, %s111
    %p120 = scmp.eq.s32.totalorder %s16, 0
    %p121 = por %p119, %p120
    %p122 = scmp.ne.s32.totalorder %s110, %s111
    %p123 = scmp.eq.s32.totalorder %s17, 1
    %p124 = por %p122, %p123
    %p126 = scmp.ne.s32.totalorder %s111, %s125
    %p127 = scmp.eq.s32.totalorder %s17, 0
    %p128 = por %p126, %p127
    %s129 = ssub.s32 %s11, %s18
    %p130 = scmp.eq.s32.totalorder %s129, 0
    %s132 = sadd.s32 %s131, 1
    %s133 = scalar_select %p130, %s131, %s132
    %p136 = pneg %p130
    %p137 = scmp.eq.s32.totalorder %s11, 1
    %p138 = por %p136, %p137
    %p139 = scmp.ne.s32.totalorder %s131, %s134
    %p140 = scmp.eq.s32.totalorder %s11, 0
    %p141 = por %p139, %p140
    %p142 = scmp.ne.s32.totalorder %s131, %s134
    %p143 = scmp.eq.s32.totalorder %s16, 1
    %p144 = por %p142, %p143
    %p145 = scmp.ne.s32.totalorder %s134, %s135
    %p146 = scmp.eq.s32.totalorder %s16, 0
    %p147 = por %p145, %p146
    %p148 = scmp.ne.s32.totalorder %s134, %s135
    %p149 = scmp.eq.s32.totalorder %s17, 1
    %p150 = por %p148, %p149
    %p152 = scmp.ne.s32.totalorder %s135, %s151
    %p153 = scmp.eq.s32.totalorder %s17, 0
    %p154 = por %p152, %p153
    %p155 = scmp.le.s32.totalorder 1, %s11
    %p156 = scmp.lt.s32.totalorder %s11, 3
    %p157 = pnand %p155, %p156
    %p158 = pneg %p157
    // Predicated region
    $region9: #{_lambda_.1} parent=5 // pred_check
      _
    $region10: #{_lambda_.1} parent=5 // pred_check_branch
      %160 = sbr.rel (%p157) target = $region12
    $region11: #{_lambda_.1} parent=5 // pred_region
      %s161 = ssub.s32 %s11, 1
      // Predicated region
      $region13: #{_lambda_.1} parent=11 // pred_check
        %p162 = pneg %p58
      $region14: #{_lambda_.1} parent=11 // pred_check_branch
        %164 = sbr.rel (%p162) target = $region16
      $region15: #{_lambda_.1} parent=11 // pred_region
        _
      $region16: #{_lambda_.1} parent=11 // pred_fallthru
        _
      // Predicated region
      $region17: #{_lambda_.1} parent=11 // pred_check
        %p165 = pneg %p79
      $region18: #{_lambda_.1} parent=11 // pred_check_branch
        %167 = sbr.rel (%p165) target = $region20
      $region19: #{_lambda_.1} parent=11 // pred_region
        _
      $region20: #{_lambda_.1} parent=11 // pred_fallthru
        _
      // Predicated region
      $region21: #{_lambda_.1} parent=11 // pred_check
        %p168 = pneg %p100
      $region22: #{_lambda_.1} parent=11 // pred_check_branch
        %170 = sbr.rel (%p168) target = $region24
      $region23: #{_lambda_.1} parent=11 // pred_region
        _
      $region24: #{_lambda_.1} parent=11 // pred_fallthru
        _
      // Predicated region
      $region25: #{_lambda_.1} parent=11 // pred_check
        %p171 = pneg %p121
      $region26: #{_lambda_.1} parent=11 // pred_check_branch
        %173 = sbr.rel (%p171) target = $region28
      $region27: #{_lambda_.1} parent=11 // pred_region
        _
      $region28: #{_lambda_.1} parent=11 // pred_fallthru
        _
    $region12: #{_lambda_.1} parent=5 // pred_fallthru
      _
    %p174 = scmp.lt.s32.totalorder %s11, 2
    // Predicated region
    $region29: #{_lambda_.1} parent=5 // pred_check
      %p175 = pneg %p174
    $region30: #{_lambda_.1} parent=5 // pred_check_branch
      %177 = sbr.rel (%p175) target = $region32
    $region31: #{_lambda_.1} parent=5 // pred_region
      // Predicated region
      $region33: #{_lambda_.1} parent=31 // pred_check
        %p178 = pneg %p31
      $region34: #{_lambda_.1} parent=31 // pred_check_branch
        %180 = sbr.rel (%p178) target = $region36
      $region35: #{_lambda_.1} parent=31 // pred_region
        %p181 = scmp.lt.s32.totalorder %s11, 1
        %s182 = scalar_select %p181, %s11, 1
        %s183 = smul.addr %s182, 4
        %s184 = smul.addr %s183, 8
        %s185 = scalar_lea.vmem %s0, %s184
      $region36: #{_lambda_.1} parent=31 // pred_fallthru
        _
    $region32: #{_lambda_.1} parent=5 // pred_fallthru
      _
    %p186 = scmp.le.s32.totalorder 1, %s11
    %p187 = scmp.lt.s32.totalorder %s11, 3
    %p188 = pnand %p186, %p187
    %p189 = pneg %p188
    // Predicated region
    $region37: #{_lambda_.1} parent=5 // pred_check
      _
    $region38: #{_lambda_.1} parent=5 // pred_check_branch
      %191 = sbr.rel (%p188) target = $region40
    $region39: #{_lambda_.1} parent=5 // pred_region
      %s192 = ssub.s32 %s11, 1
      %p193 = scmp.lt.s32.totalorder %s16, 1
      %s194 = scalar_select %p193, %s16, 1
      %s195 = smul.addr %s194, 4
      %s196 = smul.addr %s195, 8
      %s197 = scalar_lea.vmem %s0, %s196
      %p198 = pneg %p37
      %p199 = pneg %p34
      %p200 = pneg %p58
      %p201 = pneg %p55
      %p202 = pneg %p79
      %p203 = pneg %p76
      %p204 = pneg %p100
      %p205 = pneg %p97
      %p206 = pneg %p121
      %p207 = pneg %p118
      %p208 = pneg %p147
      %p209 = pneg %p144
      %p210 = scmp.lt.s32.totalorder %s16, 1
      %s211 = scalar_select %p210, %s16, 1
      %s212 = smul.addr %s211, 8
      %s213 = scalar_lea.vmem %s5, %s212
      %p214 = scmp.lt.s32.totalorder %s16, 1
      %s215 = scalar_select %p214, %s16, 1
      %s216 = smul.addr %s215, 4
      %s217 = smul.addr %s216, 8
      %s218 = scalar_lea.vmem %s0, %s217
      %p219 = scmp.lt.s32.totalorder %s16, 1
      %s220 = scalar_select %p219, %s16, 1
      %s221 = smul.addr %s220, 8
      %s222 = scalar_lea.vmem %s5, %s221
      %v223 = vld [vmem:[%s218] sm:$0xff]
      %v224 = vld [vmem:[%s218 + $0x8] sm:$0xff]
      %v225 = vld [vmem:[%s218 + $0x10] sm:$0xff]
      %v226 = vld [vmem:[%s218 + $0x18] sm:$0xff]
      %v227 = vld [vmem:[%s1] sm:$0x1]
      %v228 = vlaneseq
      %v229 = vshrl.u32 %v228, 7
      %v230 = vsub.s32 0, %v229
      %v231 = vrot.slane %v227, %v230
      %v232 = vmul.f32 %v223, %v231
      %v233 = vmul.f32 %v224, %v231
      %v234 = vmul.f32 %v225, %v231
      %v235 = vmul.f32 %v226, %v231
      %v236 = vld [vmem:[%s1 + $0x1] sm:$0x1]
      %v237 = vlaneseq
      %v238 = vshrl.u32 %v237, 7
      %v239 = vsub.s32 0, %v238
      %v240 = vrot.slane %v236, %v239
      %v241 = vadd.f32 %v232, %v240
      %v242 = vadd.f32 %v233, %v240
      %v243 = vadd.f32 %v234, %v240
      %v244 = vadd.f32 %v235, %v240
      %v245 = vmax.f32 %v241, 0.0
      %v246 = vmax.f32 %v242, 0.0
      %v247 = vmax.f32 %v243, 0.0
      %v248 = vmax.f32 %v244, 0.0
      %v249 = vld [vmem:[%s2] sm:$0xff]
      %v250 = vld [vmem:[%s2 + $0x8] sm:$0xff]
      %v251 = vld [vmem:[%s2 + $0x10] sm:$0xff]
      %v252 = vld [vmem:[%s2 + $0x18] sm:$0xff]
      %v253 = vld [vmem:[%s2 + $0x20] sm:$0xff]
      %v254 = vld [vmem:[%s2 + $0x28] sm:$0xff]
      %v255 = vld [vmem:[%s2 + $0x30] sm:$0xff]
      %v256 = vld [vmem:[%s2 + $0x38] sm:$0xff]
      %vm257 = vcmask 523264
      %v259 = vsel %vm257, %v245, 0
      %v262 = vsel %vm257, %v246, 0
      %v265 = vsel %vm257, %v247, 0
      %v268 = vsel %vm257, %v248, 0
      %270 = vmatprep.subr.mxu0 0.0
      %271 = vmatpush1.msra.mxu0 0.0
      %272 = vmatprep.subr.mxu0 0.0
      %273 = vmatpush1.msra.mxu0 0.0
      %274 = vmatprep.subr.mxu0 0.0
      %275 = vmatpush1.msra.mxu0 0.0
      %276 = vmatprep.subr.mxu0 0.0
      %277 = vmatpush1.msra.mxu0 0.0
      %278 = vmatprep.subr.mxu0 0.0
      %279 = vmatpush1.msra.mxu0 0.0
      %280 = vmatprep.subr.mxu0 0.0
      %281 = vmatpush1.msra.mxu0 0.0
      %282 = vmatprep.subr.mxu0 0.0
      %283 = vmatpush1.msra.mxu0 0.0
      %284 = vmatprep.subr.mxu0 0.0
      %285 = vmatpush1.msra.mxu0 0.0
      %286 = vmatprep.subr.mxu0 0.0
      %287 = vmatpush1.msra.mxu0 %v256
      %288 = vmatprep.subr.mxu0 0.0
      %289 = vmatpush1.msra.mxu0 %v255
      %290 = vmatprep.subr.mxu0 0.0
      %291 = vmatpush1.msra.mxu0 %v254
      %292 = vmatprep.subr.mxu0 0.0
      %293 = vmatpush1.msra.mxu0 %v253
      %294 = vmatprep.subr.mxu0 0.0
      %295 = vmatpush1.msra.mxu0 %v252
      %296 = vmatprep.subr.mxu0 0.0
      %297 = vmatpush1.msra.mxu0 %v251
      %298 = vmatprep.subr.mxu0 0.0
      %299 = vmatpush1.msra.mxu0 %v250
      %300 = vmatprep.subr.mxu0 0.0
      %301 = vmatpush1.msra.mxu0 %v249
      %302 = vmatprep.subr.mxu0 0.0
      %303 = vmatpush2.msra.mxu0 0.0
      %304 = vmatprep.subr.mxu0 0.0
      %305 = vmatpush2.msra.mxu0 0.0
      %306 = vmatprep.subr.mxu0 0.0
      %307 = vmatpush2.msra.mxu0 0.0
      %308 = vmatprep.subr.mxu0 0.0
      %309 = vmatpush2.msra.mxu0 0.0
      %310 = vmatprep.subr.mxu0 0.0
      %311 = vmatpush2.msra.mxu0 0.0
      %312 = vmatprep.subr.mxu0 0.0
      %313 = vmatpush2.msra.mxu0 0.0
      %314 = vmatprep.subr.mxu0 0.0
      %315 = vmatpush2.msra.mxu0 0.0
      %316 = vmatprep.subr.mxu0 0.0
      %317 = vmatpush2.msra.mxu0 0.0
      %318 = vmatprep.subr.mxu0 0.0
      %319 = vmatpush2.msra.mxu0 0.0
      %320 = vmatprep.subr.mxu0 0.0
      %321 = vmatpush2.msra.mxu0 0.0
      %322 = vmatprep.subr.mxu0 0.0
      %323 = vmatpush2.msra.mxu0 0.0
      %324 = vmatprep.subr.mxu0 0.0
      %325 = vmatpush2.msra.mxu0 0.0
      %326 = vmatprep.subr.mxu0 0.0
      %327 = vmatpush2.msra.mxu0 0.0
      %328 = vmatprep.subr.mxu0 0.0
      %329 = vmatpush2.msra.mxu0 0.0
      %330 = vmatprep.subr.mxu0 0.0
      %331 = vmatpush2.msra.mxu0 0.0
      %332 = vmatprep.subr.mxu0 0.0
      %333 = vmatpush2.msra.mxu0 0.0
      %334 = vmatprep.mubr.f32.mxu0 0.0
      %335 = vmatmul.mubr.f32.gmra.mxu0 %v259
      %v336 = vpop.f32.mrf.mxu0
      %v337 = vadd.f32 0.0, %v336
      %v338 = vpop.f32.mrf.mxu0
      %339 = vmatprep.mubr.f32.mxu0 0.0
      %340 = vmatmul.mubr.f32.gmra.mxu0 %v262
      %v341 = vpop.f32.mrf.mxu0
      %v342 = vadd.f32 0.0, %v341
      %v343 = vpop.f32.mrf.mxu0
      %344 = vmatprep.mubr.f32.mxu0 0.0
      %345 = vmatmul.mubr.f32.gmra.mxu0 %v265
      %v346 = vpop.f32.mrf.mxu0
      %v347 = vadd.f32 0.0, %v346
      %v348 = vpop.f32.mrf.mxu0
      %349 = vmatprep.mubr.f32.mxu0 0.0
      %350 = vmatmul.mubr.f32.gmra.mxu0 %v268
      %v351 = vpop.f32.mrf.mxu0
      %v352 = vadd.f32 0.0, %v351
      %v353 = vpop.f32.mrf.mxu0
      %354 = vdwg.mxu0
      %vm355 = vcmask 581632
      %356 = vst.msk [vmem:[#allocation2] sm:$0x1] %vm355, -inf
      %s357 = scalar_lea.vmem [#allocation2], 16
      %358 = vst.msk [vmem:[%s357] sm:$0x1] %vm355, -inf
      %vm359 = vcmask 64512
      %360 = vst.msk [vmem:[#allocation2] sm:$0xff] %vm359, -inf
      %vm361 = vcmask 57344
      %362 = vst.msk [vmem:[#allocation2 + $0x8] sm:$0x1] %vm361, -inf
      %s363 = scalar_lea.vmem [#allocation2], 32
      %364 = vst.msk [vmem:[%s363] sm:$0xff] %vm359, -inf
      %365 = vst.msk [vmem:[%s363 + $0x8] sm:$0x1] %vm361, -inf
      %s366 = scalar_lea.vmem [#allocation2], 48
      %367 = vst.msk [vmem:[%s366] sm:$0xff] %vm257, %v337
      %369 = vrot.lane.b32.xlu0 %v342, 8
      %v370 = vpop.permute.xlu0 %369
      %vm372 = vcmask 588864
      %373 = vst.msk [vmem:[%s363] sm:$0xff] %vm372, %v370
      %374 = vst.msk [vmem:[%s357 + $0x1] sm:$0xff] %vm257, %v347
      %376 = vrot.lane.b32.xlu0 %v352, 8
      %v377 = vpop.permute.xlu0 %376
      %379 = vst.msk [vmem:[#allocation2 + $0x1] sm:$0xff] %vm372, %v377
      %v380 = vld [vmem:[#allocation2] sm:$0xff]
      %v381 = vld [vmem:[%s357] sm:$0xff]
      %v382 = vmax.f32 %v380, %v381
      %384 = vrot.lane.b32.xlu0 %v380, 120
      %v385 = vpop.permute.xlu0 %384
      %v387 = vmax.f32 %v382, %v385
      %v388 = vld [vmem:[%s363] sm:$0xff]
      %v389 = vmax.f32 %v387, %v388
      %v390 = vld [vmem:[%s366] sm:$0xff]
      %v391 = vmax.f32 %v389, %v390
      %393 = vrot.lane.b32.xlu0 %v388, 120
      %v394 = vpop.permute.xlu0 %393
      %v396 = vmax.f32 %v391, %v394
      %v397 = vld [vmem:[#allocation2 + $0x1] sm:$0xff]
      %v398 = vmax.f32 %v396, %v397
      %v399 = vld [vmem:[%s357 + $0x1] sm:$0xff]
      %v400 = vmax.f32 %v398, %v399
      %402 = vrot.lane.b32.xlu0 %v397, 120
      %v403 = vpop.permute.xlu0 %402
      %v405 = vmax.f32 %v400, %v403
      %406 = vst.msk [vmem:[#allocation2] sm:$0x1] %vm355, 0.0
      %407 = vst.msk [vmem:[%s357] sm:$0x1] %vm355, 0.0
      %408 = vst.msk [vmem:[#allocation2] sm:$0xff] %vm359, 0.0
      %409 = vst.msk [vmem:[#allocation2 + $0x8] sm:$0x1] %vm361, 0.0
      %410 = vst.msk [vmem:[%s363] sm:$0xff] %vm359, 0.0
      %411 = vst.msk [vmem:[%s363 + $0x8] sm:$0x1] %vm361, 0.0
      %v412 = vld [vmem:[%s4] sm:$0x1]
      %v413 = vld [vmem:[%s4 + $0x1] sm:$0x1]
      %v414 = vld [vmem:[%s4 + $0x2] sm:$0x1]
      %v415 = vld [vmem:[%s4 + $0x3] sm:$0x1]
      %v416 = vld [vmem:[%s4 + $0x4] sm:$0x1]
      %v417 = vld [vmem:[%s4 + $0x5] sm:$0x1]
      %v418 = vld [vmem:[%s4 + $0x6] sm:$0x1]
      %v419 = vld [vmem:[%s4 + $0x7] sm:$0x1]
      %v420 = vld [vmem:[%s4 + $0x8] sm:$0x1]
      %v421 = vld [vmem:[#allocation2] sm:$0xff]
      %v422 = vld [vmem:[%s3] sm:$0x1]
      %v423 = vlaneseq
      %v424 = vshrl.u32 %v423, 7
      %v425 = vsub.s32 0, %v424
      %v426 = vrot.slane %v422, %v425
      %v427 = vmul.f32 %v421, %v426
      %v428 = vlaneseq
      %v429 = vshrl.u32 %v428, 7
      %v430 = vsub.s32 0, %v429
      %v431 = vrot.slane %v412, %v430
      %v432 = vadd.f32 %v431, %v427
      %s433 = scalar_lea.vmem %s3, 16
      %v434 = vld [vmem:[%s433] sm:$0x1]
      %v435 = vlaneseq
      %v436 = vshrl.u32 %v435, 7
      %v437 = vsub.s32 0, %v436
      %v438 = vrot.slane %v434, %v437
      %v439 = vmul.f32 %v421, %v438
      %v440 = vlaneseq
      %v441 = vshrl.u32 %v440, 7
      %v442 = vsub.s32 0, %v441
      %v443 = vrot.slane %v413, %v442
      %v444 = vadd.f32 %v443, %v439
      %s445 = scalar_lea.vmem %s3, 32
      %v446 = vld [vmem:[%s445] sm:$0x1]
      %v447 = vlaneseq
      %v448 = vshrl.u32 %v447, 7
      %v449 = vsub.s32 0, %v448
      %v450 = vrot.slane %v446, %v449
      %v451 = vmul.f32 %v421, %v450
      %v452 = vlaneseq
      %v453 = vshrl.u32 %v452, 7
      %v454 = vsub.s32 0, %v453
      %v455 = vrot.slane %v414, %v454
      %v456 = vadd.f32 %v455, %v451
      %s457 = scalar_lea.vmem %s3, 48
      %v458 = vld [vmem:[%s457] sm:$0x1]
      %v459 = vlaneseq
      %v460 = vshrl.u32 %v459, 7
      %v461 = vsub.s32 0, %v460
      %v462 = vrot.slane %v458, %v461
      %v463 = vmul.f32 %v421, %v462
      %v464 = vlaneseq
      %v465 = vshrl.u32 %v464, 7
      %v466 = vsub.s32 0, %v465
      %v467 = vrot.slane %v415, %v466
      %v468 = vadd.f32 %v467, %v463
      %s469 = scalar_lea.vmem %s3, 64
      %v470 = vld [vmem:[%s469] sm:$0x1]
      %v471 = vlaneseq
      %v472 = vshrl.u32 %v471, 7
      %v473 = vsub.s32 0, %v472
      %v474 = vrot.slane %v470, %v473
      %v475 = vmul.f32 %v421, %v474
      %v476 = vlaneseq
      %v477 = vshrl.u32 %v476, 7
      %v478 = vsub.s32 0, %v477
      %v479 = vrot.slane %v416, %v478
      %v480 = vadd.f32 %v479, %v475
      %s481 = scalar_lea.vmem %s3, 80
      %v482 = vld [vmem:[%s481] sm:$0x1]
      %v483 = vlaneseq
      %v484 = vshrl.u32 %v483, 7
      %v485 = vsub.s32 0, %v484
      %v486 = vrot.slane %v482, %v485
      %v487 = vmul.f32 %v421, %v486
      %v488 = vlaneseq
      %v489 = vshrl.u32 %v488, 7
      %v490 = vsub.s32 0, %v489
      %v491 = vrot.slane %v417, %v490
      %v492 = vadd.f32 %v491, %v487
      %s493 = scalar_lea.vmem %s3, 96
      %v494 = vld [vmem:[%s493] sm:$0x1]
      %v495 = vlaneseq
      %v496 = vshrl.u32 %v495, 7
      %v497 = vsub.s32 0, %v496
      %v498 = vrot.slane %v494, %v497
      %v499 = vmul.f32 %v421, %v498
      %v500 = vlaneseq
      %v501 = vshrl.u32 %v500, 7
      %v502 = vsub.s32 0, %v501
      %v503 = vrot.slane %v418, %v502
      %v504 = vadd.f32 %v503, %v499
      %s505 = scalar_lea.vmem %s3, 112
      %v506 = vld [vmem:[%s505] sm:$0x1]
      %v507 = vlaneseq
      %v508 = vshrl.u32 %v507, 7
      %v509 = vsub.s32 0, %v508
      %v510 = vrot.slane %v506, %v509
      %v511 = vmul.f32 %v421, %v510
      %v512 = vlaneseq
      %v513 = vshrl.u32 %v512, 7
      %v514 = vsub.s32 0, %v513
      %v515 = vrot.slane %v419, %v514
      %v516 = vadd.f32 %v515, %v511
      %s517 = scalar_lea.vmem %s3, 128
      %v518 = vld [vmem:[%s517] sm:$0x1]
      %v519 = vlaneseq
      %v520 = vshrl.u32 %v519, 7
      %v521 = vsub.s32 0, %v520
      %v522 = vrot.slane %v518, %v521
      %v523 = vmul.f32 %v421, %v522
      %v524 = vlaneseq
      %v525 = vshrl.u32 %v524, 7
      %v526 = vsub.s32 0, %v525
      %v527 = vrot.slane %v420, %v526
      %v528 = vadd.f32 %v527, %v523
      %v529 = vld [vmem:[%s357] sm:$0xff]
      %v530 = vld [vmem:[%s3 + $0x1] sm:$0x1]
      %v531 = vlaneseq
      %v532 = vshrl.u32 %v531, 7
      %v533 = vsub.s32 0, %v532
      %v534 = vrot.slane %v530, %v533
      %v535 = vmul.f32 %v529, %v534
      %v536 = vadd.f32 %v432, %v535
      %v537 = vld [vmem:[%s433 + $0x1] sm:$0x1]
      %v538 = vlaneseq
      %v539 = vshrl.u32 %v538, 7
      %v540 = vsub.s32 0, %v539
      %v541 = vrot.slane %v537, %v540
      %v542 = vmul.f32 %v529, %v541
      %v543 = vadd.f32 %v444, %v542
      %v544 = vld [vmem:[%s445 + $0x1] sm:$0x1]
      %v545 = vlaneseq
      %v546 = vshrl.u32 %v545, 7
      %v547 = vsub.s32 0, %v546
      %v548 = vrot.slane %v544, %v547
      %v549 = vmul.f32 %v529, %v548
      %v550 = vadd.f32 %v456, %v549
      %v551 = vld [vmem:[%s457 + $0x1] sm:$0x1]
      %v552 = vlaneseq
      %v553 = vshrl.u32 %v552, 7
      %v554 = vsub.s32 0, %v553
      %v555 = vrot.slane %v551, %v554
      %v556 = vmul.f32 %v529, %v555
      %v557 = vadd.f32 %v468, %v556
      %v558 = vld [vmem:[%s469 + $0x1] sm:$0x1]
      %v559 = vlaneseq
      %v560 = vshrl.u32 %v559, 7
      %v561 = vsub.s32 0, %v560
      %v562 = vrot.slane %v558, %v561
      %v563 = vmul.f32 %v529, %v562
      %v564 = vadd.f32 %v480, %v563
      %v565 = vld [vmem:[%s481 + $0x1] sm:$0x1]
      %v566 = vlaneseq
      %v567 = vshrl.u32 %v566, 7
      %v568 = vsub.s32 0, %v567
      %v569 = vrot.slane %v565, %v568
      %v570 = vmul.f32 %v529, %v569
      %v571 = vadd.f32 %v492, %v570
      %v572 = vld [vmem:[%s493 + $0x1] sm:$0x1]
      %v573 = vlaneseq
      %v574 = vshrl.u32 %v573, 7
      %v575 = vsub.s32 0, %v574
      %v576 = vrot.slane %v572, %v575
      %v577 = vmul.f32 %v529, %v576
      %v578 = vadd.f32 %v504, %v577
      %v579 = vld [vmem:[%s505 + $0x1] sm:$0x1]
      %v580 = vlaneseq
      %v581 = vshrl.u32 %v580, 7
      %v582 = vsub.s32 0, %v581
      %v583 = vrot.slane %v579, %v582
      %v584 = vmul.f32 %v529, %v583
      %v585 = vadd.f32 %v516, %v584
      %v586 = vld [vmem:[%s517 + $0x1] sm:$0x1]
      %v587 = vlaneseq
      %v588 = vshrl.u32 %v587, 7
      %v589 = vsub.s32 0, %v588
      %v590 = vrot.slane %v586, %v589
      %v591 = vmul.f32 %v529, %v590
      %v592 = vadd.f32 %v528, %v591
      %v593 = vld [vmem:[%s3 + $0x2] sm:$0x1]
      %v594 = vlaneseq
      %v595 = vshrl.u32 %v594, 7
      %v596 = vsub.s32 0, %v595
      %v597 = vrot.slane %v593, %v596
      %599 = vrot.lane.b32.xlu0 %v597, 8
      %v600 = vpop.permute.xlu0 %599
      %v602 = vmul.f32 %v421, %v600
      %604 = vrot.lane.b32.xlu0 %v602, 120
      %v605 = vpop.permute.xlu0 %604
      %v607 = vadd.f32 %v536, %v605
      %v608 = vld [vmem:[%s433 + $0x2] sm:$0x1]
      %v609 = vlaneseq
      %v610 = vshrl.u32 %v609, 7
      %v611 = vsub.s32 0, %v610
      %v612 = vrot.slane %v608, %v611
      %614 = vrot.lane.b32.xlu0 %v612, 8
      %v615 = vpop.permute.xlu0 %614
      %v617 = vmul.f32 %v421, %v615
      %619 = vrot.lane.b32.xlu0 %v617, 120
      %v620 = vpop.permute.xlu0 %619
      %v622 = vadd.f32 %v543, %v620
      %v623 = vld [vmem:[%s445 + $0x2] sm:$0x1]
      %v624 = vlaneseq
      %v625 = vshrl.u32 %v624, 7
      %v626 = vsub.s32 0, %v625
      %v627 = vrot.slane %v623, %v626
      %629 = vrot.lane.b32.xlu0 %v627, 8
      %v630 = vpop.permute.xlu0 %629
      %v632 = vmul.f32 %v421, %v630
      %634 = vrot.lane.b32.xlu0 %v632, 120
      %v635 = vpop.permute.xlu0 %634
      %v637 = vadd.f32 %v550, %v635
      %v638 = vld [vmem:[%s457 + $0x2] sm:$0x1]
      %v639 = vlaneseq
      %v640 = vshrl.u32 %v639, 7
      %v641 = vsub.s32 0, %v640
      %v642 = vrot.slane %v638, %v641
      %644 = vrot.lane.b32.xlu0 %v642, 8
      %v645 = vpop.permute.xlu0 %644
      %v647 = vmul.f32 %v421, %v645
      %649 = vrot.lane.b32.xlu0 %v647, 120
      %v650 = vpop.permute.xlu0 %649
      %v652 = vadd.f32 %v557, %v650
      %v653 = vld [vmem:[%s469 + $0x2] sm:$0x1]
      %v654 = vlaneseq
      %v655 = vshrl.u32 %v654, 7
      %v656 = vsub.s32 0, %v655
      %v657 = vrot.slane %v653, %v656
      %659 = vrot.lane.b32.xlu0 %v657, 8
      %v660 = vpop.permute.xlu0 %659
      %v662 = vmul.f32 %v421, %v660
      %664 = vrot.lane.b32.xlu0 %v662, 120
      %v665 = vpop.permute.xlu0 %664
      %v667 = vadd.f32 %v564, %v665
      %v668 = vld [vmem:[%s481 + $0x2] sm:$0x1]
      %v669 = vlaneseq
      %v670 = vshrl.u32 %v669, 7
      %v671 = vsub.s32 0, %v670
      %v672 = vrot.slane %v668, %v671
      %674 = vrot.lane.b32.xlu0 %v672, 8
      %v675 = vpop.permute.xlu0 %674
      %v677 = vmul.f32 %v421, %v675
      %679 = vrot.lane.b32.xlu0 %v677, 120
      %v680 = vpop.permute.xlu0 %679
      %v682 = vadd.f32 %v571, %v680
      %v683 = vld [vmem:[%s493 + $0x2] sm:$0x1]
      %v684 = vlaneseq
      %v685 = vshrl.u32 %v684, 7
      %v686 = vsub.s32 0, %v685
      %v687 = vrot.slane %v683, %v686
      %689 = vrot.lane.b32.xlu0 %v687, 8
      %v690 = vpop.permute.xlu0 %689
      %v692 = vmul.f32 %v421, %v690
      %694 = vrot.lane.b32.xlu0 %v692, 120
      %v695 = vpop.permute.xlu0 %694
      %v697 = vadd.f32 %v578, %v695
      %v698 = vld [vmem:[%s505 + $0x2] sm:$0x1]
      %v699 = vlaneseq
      %v700 = vshrl.u32 %v699, 7
      %v701 = vsub.s32 0, %v700
      %v702 = vrot.slane %v698, %v701
      %704 = vrot.lane.b32.xlu0 %v702, 8
      %v705 = vpop.permute.xlu0 %704
      %v707 = vmul.f32 %v421, %v705
      %709 = vrot.lane.b32.xlu0 %v707, 120
      %v710 = vpop.permute.xlu0 %709
      %v712 = vadd.f32 %v585, %v710
      %v713 = vld [vmem:[%s517 + $0x2] sm:$0x1]
      %v714 = vlaneseq
      %v715 = vshrl.u32 %v714, 7
      %v716 = vsub.s32 0, %v715
      %v717 = vrot.slane %v713, %v716
      %719 = vrot.lane.b32.xlu0 %v717, 8
      %v720 = vpop.permute.xlu0 %719
      %v722 = vmul.f32 %v421, %v720
      %724 = vrot.lane.b32.xlu0 %v722, 120
      %v725 = vpop.permute.xlu0 %724
      %v727 = vadd.f32 %v592, %v725
      %v728 = vld [vmem:[%s363] sm:$0xff]
      %v729 = vld [vmem:[%s3 + $0x3] sm:$0x1]
      %v730 = vlaneseq
      %v731 = vshrl.u32 %v730, 7
      %v732 = vsub.s32 0, %v731
      %v733 = vrot.slane %v729, %v732
      %v734 = vmul.f32 %v728, %v733
      %v735 = vadd.f32 %v607, %v734
      %v736 = vld [vmem:[%s433 + $0x3] sm:$0x1]
      %v737 = vlaneseq
      %v738 = vshrl.u32 %v737, 7
      %v739 = vsub.s32 0, %v738
      %v740 = vrot.slane %v736, %v739
      %v741 = vmul.f32 %v728, %v740
      %v742 = vadd.f32 %v622, %v741
      %v743 = vld [vmem:[%s445 + $0x3] sm:$0x1]
      %v744 = vlaneseq
      %v745 = vshrl.u32 %v744, 7
      %v746 = vsub.s32 0, %v745
      %v747 = vrot.slane %v743, %v746
      %v748 = vmul.f32 %v728, %v747
      %v749 = vadd.f32 %v637, %v748
      %v750 = vld [vmem:[%s457 + $0x3] sm:$0x1]
      %v751 = vlaneseq
      %v752 = vshrl.u32 %v751, 7
      %v753 = vsub.s32 0, %v752
      %v754 = vrot.slane %v750, %v753
      %v755 = vmul.f32 %v728, %v754
      %v756 = vadd.f32 %v652, %v755
      %v757 = vld [vmem:[%s469 + $0x3] sm:$0x1]
      %v758 = vlaneseq
      %v759 = vshrl.u32 %v758, 7
      %v760 = vsub.s32 0, %v759
      %v761 = vrot.slane %v757, %v760
      %v762 = vmul.f32 %v728, %v761
      %v763 = vadd.f32 %v667, %v762
      %v764 = vld [vmem:[%s481 + $0x3] sm:$0x1]
      %v765 = vlaneseq
      %v766 = vshrl.u32 %v765, 7
      %v767 = vsub.s32 0, %v766
      %v768 = vrot.slane %v764, %v767
      %v769 = vmul.f32 %v728, %v768
      %v770 = vadd.f32 %v682, %v769
      %v771 = vld [vmem:[%s493 + $0x3] sm:$0x1]
      %v772 = vlaneseq
      %v773 = vshrl.u32 %v772, 7
      %v774 = vsub.s32 0, %v773
      %v775 = vrot.slane %v771, %v774
      %v776 = vmul.f32 %v728, %v775
      %v777 = vadd.f32 %v697, %v776
      %v778 = vld [vmem:[%s505 + $0x3] sm:$0x1]
      %v779 = vlaneseq
      %v780 = vshrl.u32 %v779, 7
      %v781 = vsub.s32 0, %v780
      %v782 = vrot.slane %v778, %v781
      %v783 = vmul.f32 %v728, %v782
      %v784 = vadd.f32 %v712, %v783
      %v785 = vld [vmem:[%s517 + $0x3] sm:$0x1]
      %v786 = vlaneseq
      %v787 = vshrl.u32 %v786, 7
      %v788 = vsub.s32 0, %v787
      %v789 = vrot.slane %v785, %v788
      %v790 = vmul.f32 %v728, %v789
      %v791 = vadd.f32 %v727, %v790
      %v792 = vld [vmem:[%s366] sm:$0xff]
      %v793 = vld [vmem:[%s3 + $0x4] sm:$0x1]
      %v794 = vlaneseq
      %v795 = vshrl.u32 %v794, 7
      %v796 = vsub.s32 0, %v795
      %v797 = vrot.slane %v793, %v796
      %v798 = vmul.f32 %v792, %v797
      %v799 = vadd.f32 %v735, %v798
      %v800 = vld [vmem:[%s433 + $0x4] sm:$0x1]
      %v801 = vlaneseq
      %v802 = vshrl.u32 %v801, 7
      %v803 = vsub.s32 0, %v802
      %v804 = vrot.slane %v800, %v803
      %v805 = vmul.f32 %v792, %v804
      %v806 = vadd.f32 %v742, %v805
      %v807 = vld [vmem:[%s445 + $0x4] sm:$0x1]
      %v808 = vlaneseq
      %v809 = vshrl.u32 %v808, 7
      %v810 = vsub.s32 0, %v809
      %v811 = vrot.slane %v807, %v810
      %v812 = vmul.f32 %v792, %v811
      %v813 = vadd.f32 %v749, %v812
      %v814 = vld [vmem:[%s457 + $0x4] sm:$0x1]
      %v815 = vlaneseq
      %v816 = vshrl.u32 %v815, 7
      %v817 = vsub.s32 0, %v816
      %v818 = vrot.slane %v814, %v817
      %v819 = vmul.f32 %v792, %v818
      %v820 = vadd.f32 %v756, %v819
      %v821 = vld [vmem:[%s469 + $0x4] sm:$0x1]
      %v822 = vlaneseq
      %v823 = vshrl.u32 %v822, 7
      %v824 = vsub.s32 0, %v823
      %v825 = vrot.slane %v821, %v824
      %v826 = vmul.f32 %v792, %v825
      %v827 = vadd.f32 %v763, %v826
      %v828 = vld [vmem:[%s481 + $0x4] sm:$0x1]
      %v829 = vlaneseq
      %v830 = vshrl.u32 %v829, 7
      %v831 = vsub.s32 0, %v830
      %v832 = vrot.slane %v828, %v831
      %v833 = vmul.f32 %v792, %v832
      %v834 = vadd.f32 %v770, %v833
      %v835 = vld [vmem:[%s493 + $0x4] sm:$0x1]
      %v836 = vlaneseq
      %v837 = vshrl.u32 %v836, 7
      %v838 = vsub.s32 0, %v837
      %v839 = vrot.slane %v835, %v838
      %v840 = vmul.f32 %v792, %v839
      %v841 = vadd.f32 %v777, %v840
      %v842 = vld [vmem:[%s505 + $0x4] sm:$0x1]
      %v843 = vlaneseq
      %v844 = vshrl.u32 %v843, 7
      %v845 = vsub.s32 0, %v844
      %v846 = vrot.slane %v842, %v845
      %v847 = vmul.f32 %v792, %v846
      %v848 = vadd.f32 %v784, %v847
      %v849 = vld [vmem:[%s517 + $0x4] sm:$0x1]
      %v850 = vlaneseq
      %v851 = vshrl.u32 %v850, 7
      %v852 = vsub.s32 0, %v851
      %v853 = vrot.slane %v849, %v852
      %v854 = vmul.f32 %v792, %v853
      %v855 = vadd.f32 %v791, %v854
      %v856 = vld [vmem:[%s3 + $0x5] sm:$0x1]
      %v857 = vlaneseq
      %v858 = vshrl.u32 %v857, 7
      %v859 = vsub.s32 0, %v858
      %v860 = vrot.slane %v856, %v859
      %862 = vrot.lane.b32.xlu0 %v860, 8
      %v863 = vpop.permute.xlu0 %862
      %v865 = vmul.f32 %v728, %v863
      %867 = vrot.lane.b32.xlu0 %v865, 120
      %v868 = vpop.permute.xlu0 %867
      %v870 = vadd.f32 %v799, %v868
      %v871 = vld [vmem:[%s433 + $0x5] sm:$0x1]
      %v872 = vlaneseq
      %v873 = vshrl.u32 %v872, 7
      %v874 = vsub.s32 0, %v873
      %v875 = vrot.slane %v871, %v874
      %877 = vrot.lane.b32.xlu0 %v875, 8
      %v878 = vpop.permute.xlu0 %877
      %v880 = vmul.f32 %v728, %v878
      %882 = vrot.lane.b32.xlu0 %v880, 120
      %v883 = vpop.permute.xlu0 %882
      %v885 = vadd.f32 %v806, %v883
      %v886 = vld [vmem:[%s445 + $0x5] sm:$0x1]
      %v887 = vlaneseq
      %v888 = vshrl.u32 %v887, 7
      %v889 = vsub.s32 0, %v888
      %v890 = vrot.slane %v886, %v889
      %892 = vrot.lane.b32.xlu0 %v890, 8
      %v893 = vpop.permute.xlu0 %892
      %v895 = vmul.f32 %v728, %v893
      %897 = vrot.lane.b32.xlu0 %v895, 120
      %v898 = vpop.permute.xlu0 %897
      %v900 = vadd.f32 %v813, %v898
      %v901 = vld [vmem:[%s457 + $0x5] sm:$0x1]
      %v902 = vlaneseq
      %v903 = vshrl.u32 %v902, 7
      %v904 = vsub.s32 0, %v903
      %v905 = vrot.slane %v901, %v904
      %907 = vrot.lane.b32.xlu0 %v905, 8
      %v908 = vpop.permute.xlu0 %907
      %v910 = vmul.f32 %v728, %v908
      %912 = vrot.lane.b32.xlu0 %v910, 120
      %v913 = vpop.permute.xlu0 %912
      %v915 = vadd.f32 %v820, %v913
      %v916 = vld [vmem:[%s469 + $0x5] sm:$0x1]
      %v917 = vlaneseq
      %v918 = vshrl.u32 %v917, 7
      %v919 = vsub.s32 0, %v918
      %v920 = vrot.slane %v916, %v919
      %922 = vrot.lane.b32.xlu0 %v920, 8
      %v923 = vpop.permute.xlu0 %922
      %v925 = vmul.f32 %v728, %v923
      %927 = vrot.lane.b32.xlu0 %v925, 120
      %v928 = vpop.permute.xlu0 %927
      %v930 = vadd.f32 %v827, %v928
      %v931 = vld [vmem:[%s481 + $0x5] sm:$0x1]
      %v932 = vlaneseq
      %v933 = vshrl.u32 %v932, 7
      %v934 = vsub.s32 0, %v933
      %v935 = vrot.slane %v931, %v934
      %937 = vrot.lane.b32.xlu0 %v935, 8
      %v938 = vpop.permute.xlu0 %937
      %v940 = vmul.f32 %v728, %v938
      %942 = vrot.lane.b32.xlu0 %v940, 120
      %v943 = vpop.permute.xlu0 %942
      %v945 = vadd.f32 %v834, %v943
      %v946 = vld [vmem:[%s493 + $0x5] sm:$0x1]
      %v947 = vlaneseq
      %v948 = vshrl.u32 %v947, 7
      %v949 = vsub.s32 0, %v948
      %v950 = vrot.slane %v946, %v949
      %952 = vrot.lane.b32.xlu0 %v950, 8
      %v953 = vpop.permute.xlu0 %952
      %v955 = vmul.f32 %v728, %v953
      %957 = vrot.lane.b32.xlu0 %v955, 120
      %v958 = vpop.permute.xlu0 %957
      %v960 = vadd.f32 %v841, %v958
      %v961 = vld [vmem:[%s505 + $0x5] sm:$0x1]
      %v962 = vlaneseq
      %v963 = vshrl.u32 %v962, 7
      %v964 = vsub.s32 0, %v963
      %v965 = vrot.slane %v961, %v964
      %967 = vrot.lane.b32.xlu0 %v965, 8
      %v968 = vpop.permute.xlu0 %967
      %v970 = vmul.f32 %v728, %v968
      %972 = vrot.lane.b32.xlu0 %v970, 120
      %v973 = vpop.permute.xlu0 %972
      %v975 = vadd.f32 %v848, %v973
      %v976 = vld [vmem:[%s517 + $0x5] sm:$0x1]
      %v977 = vlaneseq
      %v978 = vshrl.u32 %v977, 7
      %v979 = vsub.s32 0, %v978
      %v980 = vrot.slane %v976, %v979
      %982 = vrot.lane.b32.xlu0 %v980, 8
      %v983 = vpop.permute.xlu0 %982
      %v985 = vmul.f32 %v728, %v983
      %987 = vrot.lane.b32.xlu0 %v985, 120
      %v988 = vpop.permute.xlu0 %987
      %v990 = vadd.f32 %v855, %v988
      %v991 = vld [vmem:[#allocation2 + $0x1] sm:$0xff]
      %v992 = vld [vmem:[%s3 + $0x6] sm:$0x1]
      %v993 = vlaneseq
      %v994 = vshrl.u32 %v993, 7
      %v995 = vsub.s32 0, %v994
      %v996 = vrot.slane %v992, %v995
      %v997 = vmul.f32 %v991, %v996
      %v998 = vadd.f32 %v870, %v997
      %v999 = vld [vmem:[%s433 + $0x6] sm:$0x1]
      %v1000 = vlaneseq
      %v1001 = vshrl.u32 %v1000, 7
      %v1002 = vsub.s32 0, %v1001
      %v1003 = vrot.slane %v999, %v1002
      %v1004 = vmul.f32 %v991, %v1003
      %v1005 = vadd.f32 %v885, %v1004
      %v1006 = vld [vmem:[%s445 + $0x6] sm:$0x1]
      %v1007 = vlaneseq
      %v1008 = vshrl.u32 %v1007, 7
      %v1009 = vsub.s32 0, %v1008
      %v1010 = vrot.slane %v1006, %v1009
      %v1011 = vmul.f32 %v991, %v1010
      %v1012 = vadd.f32 %v900, %v1011
      %v1013 = vld [vmem:[%s457 + $0x6] sm:$0x1]
      %v1014 = vlaneseq
      %v1015 = vshrl.u32 %v1014, 7
      %v1016 = vsub.s32 0, %v1015
      %v1017 = vrot.slane %v1013, %v1016
      %v1018 = vmul.f32 %v991, %v1017
      %v1019 = vadd.f32 %v915, %v1018
      %v1020 = vld [vmem:[%s469 + $0x6] sm:$0x1]
      %v1021 = vlaneseq
      %v1022 = vshrl.u32 %v1021, 7
      %v1023 = vsub.s32 0, %v1022
      %v1024 = vrot.slane %v1020, %v1023
      %v1025 = vmul.f32 %v991, %v1024
      %v1026 = vadd.f32 %v930, %v1025
      %v1027 = vld [vmem:[%s481 + $0x6] sm:$0x1]
      %v1028 = vlaneseq
      %v1029 = vshrl.u32 %v1028, 7
      %v1030 = vsub.s32 0, %v1029
      %v1031 = vrot.slane %v1027, %v1030
      %v1032 = vmul.f32 %v991, %v1031
      %v1033 = vadd.f32 %v945, %v1032
      %v1034 = vld [vmem:[%s493 + $0x6] sm:$0x1]
      %v1035 = vlaneseq
      %v1036 = vshrl.u32 %v1035, 7
      %v1037 = vsub.s32 0, %v1036
      %v1038 = vrot.slane %v1034, %v1037
      %v1039 = vmul.f32 %v991, %v1038
      %v1040 = vadd.f32 %v960, %v1039
      %v1041 = vld [vmem:[%s505 + $0x6] sm:$0x1]
      %v1042 = vlaneseq
      %v1043 = vshrl.u32 %v1042, 7
      %v1044 = vsub.s32 0, %v1043
      %v1045 = vrot.slane %v1041, %v1044
      %v1046 = vmul.f32 %v991, %v1045
      %v1047 = vadd.f32 %v975, %v1046
      %v1048 = vld [vmem:[%s517 + $0x6] sm:$0x1]
      %v1049 = vlaneseq
      %v1050 = vshrl.u32 %v1049, 7
      %v1051 = vsub.s32 0, %v1050
      %v1052 = vrot.slane %v1048, %v1051
      %v1053 = vmul.f32 %v991, %v1052
      %v1054 = vadd.f32 %v990, %v1053
      %v1055 = vld [vmem:[%s357 + $0x1] sm:$0xff]
      %v1056 = vld [vmem:[%s3 + $0x7] sm:$0x1]
      %v1057 = vlaneseq
      %v1058 = vshrl.u32 %v1057, 7
      %v1059 = vsub.s32 0, %v1058
      %v1060 = vrot.slane %v1056, %v1059
      %v1061 = vmul.f32 %v1055, %v1060
      %v1062 = vadd.f32 %v998, %v1061
      %v1063 = vld [vmem:[%s433 + $0x7] sm:$0x1]
      %v1064 = vlaneseq
      %v1065 = vshrl.u32 %v1064, 7
      %v1066 = vsub.s32 0, %v1065
      %v1067 = vrot.slane %v1063, %v1066
      %v1068 = vmul.f32 %v1055, %v1067
      %v1069 = vadd.f32 %v1005, %v1068
      %v1070 = vld [vmem:[%s445 + $0x7] sm:$0x1]
      %v1071 = vlaneseq
      %v1072 = vshrl.u32 %v1071, 7
      %v1073 = vsub.s32 0, %v1072
      %v1074 = vrot.slane %v1070, %v1073
      %v1075 = vmul.f32 %v1055, %v1074
      %v1076 = vadd.f32 %v1012, %v1075
      %v1077 = vld [vmem:[%s457 + $0x7] sm:$0x1]
      %v1078 = vlaneseq
      %v1079 = vshrl.u32 %v1078, 7
      %v1080 = vsub.s32 0, %v1079
      %v1081 = vrot.slane %v1077, %v1080
      %v1082 = vmul.f32 %v1055, %v1081
      %v1083 = vadd.f32 %v1019, %v1082
      %v1084 = vld [vmem:[%s469 + $0x7] sm:$0x1]
      %v1085 = vlaneseq
      %v1086 = vshrl.u32 %v1085, 7
      %v1087 = vsub.s32 0, %v1086
      %v1088 = vrot.slane %v1084, %v1087
      %v1089 = vmul.f32 %v1055, %v1088
      %v1090 = vadd.f32 %v1026, %v1089
      %v1091 = vld [vmem:[%s481 + $0x7] sm:$0x1]
      %v1092 = vlaneseq
      %v1093 = vshrl.u32 %v1092, 7
      %v1094 = vsub.s32 0, %v1093
      %v1095 = vrot.slane %v1091, %v1094
      %v1096 = vmul.f32 %v1055, %v1095
      %v1097 = vadd.f32 %v1033, %v1096
      %v1098 = vld [vmem:[%s493 + $0x7] sm:$0x1]
      %v1099 = vlaneseq
      %v1100 = vshrl.u32 %v1099, 7
      %v1101 = vsub.s32 0, %v1100
      %v1102 = vrot.slane %v1098, %v1101
      %v1103 = vmul.f32 %v1055, %v1102
      %v1104 = vadd.f32 %v1040, %v1103
      %v1105 = vld [vmem:[%s505 + $0x7] sm:$0x1]
      %v1106 = vlaneseq
      %v1107 = vshrl.u32 %v1106, 7
      %v1108 = vsub.s32 0, %v1107
      %v1109 = vrot.slane %v1105, %v1108
      %v1110 = vmul.f32 %v1055, %v1109
      %v1111 = vadd.f32 %v1047, %v1110
      %v1112 = vld [vmem:[%s517 + $0x7] sm:$0x1]
      %v1113 = vlaneseq
      %v1114 = vshrl.u32 %v1113, 7
      %v1115 = vsub.s32 0, %v1114
      %v1116 = vrot.slane %v1112, %v1115
      %v1117 = vmul.f32 %v1055, %v1116
      %v1118 = vadd.f32 %v1054, %v1117
      %v1119 = vld [vmem:[%s3 + $0x8] sm:$0x1]
      %v1120 = vlaneseq
      %v1121 = vshrl.u32 %v1120, 7
      %v1122 = vsub.s32 0, %v1121
      %v1123 = vrot.slane %v1119, %v1122
      %1125 = vrot.lane.b32.xlu0 %v1123, 8
      %v1126 = vpop.permute.xlu0 %1125
      %v1128 = vmul.f32 %v991, %v1126
      %1130 = vrot.lane.b32.xlu0 %v1128, 120
      %v1131 = vpop.permute.xlu0 %1130
      %v1133 = vadd.f32 %v1062, %v1131
      %v1134 = vld [vmem:[%s433 + $0x8] sm:$0x1]
      %v1135 = vlaneseq
      %v1136 = vshrl.u32 %v1135, 7
      %v1137 = vsub.s32 0, %v1136
      %v1138 = vrot.slane %v1134, %v1137
      %1140 = vrot.lane.b32.xlu0 %v1138, 8
      %v1141 = vpop.permute.xlu0 %1140
      %v1143 = vmul.f32 %v991, %v1141
      %1145 = vrot.lane.b32.xlu0 %v1143, 120
      %v1146 = vpop.permute.xlu0 %1145
      %v1148 = vadd.f32 %v1069, %v1146
      %v1149 = vld [vmem:[%s445 + $0x8] sm:$0x1]
      %v1150 = vlaneseq
      %v1151 = vshrl.u32 %v1150, 7
      %v1152 = vsub.s32 0, %v1151
      %v1153 = vrot.slane %v1149, %v1152
      %1155 = vrot.lane.b32.xlu0 %v1153, 8
      %v1156 = vpop.permute.xlu0 %1155
      %v1158 = vmul.f32 %v991, %v1156
      %1160 = vrot.lane.b32.xlu0 %v1158, 120
      %v1161 = vpop.permute.xlu0 %1160
      %v1163 = vadd.f32 %v1076, %v1161
      %v1164 = vld [vmem:[%s457 + $0x8] sm:$0x1]
      %v1165 = vlaneseq
      %v1166 = vshrl.u32 %v1165, 7
      %v1167 = vsub.s32 0, %v1166
      %v1168 = vrot.slane %v1164, %v1167
      %1170 = vrot.lane.b32.xlu0 %v1168, 8
      %v1171 = vpop.permute.xlu0 %1170
      %v1173 = vmul.f32 %v991, %v1171
      %1175 = vrot.lane.b32.xlu0 %v1173, 120
      %v1176 = vpop.permute.xlu0 %1175
      %v1178 = vadd.f32 %v1083, %v1176
      %v1179 = vld [vmem:[%s469 + $0x8] sm:$0x1]
      %v1180 = vlaneseq
      %v1181 = vshrl.u32 %v1180, 7
      %v1182 = vsub.s32 0, %v1181
      %v1183 = vrot.slane %v1179, %v1182
      %1185 = vrot.lane.b32.xlu0 %v1183, 8
      %v1186 = vpop.permute.xlu0 %1185
      %v1188 = vmul.f32 %v991, %v1186
      %1190 = vrot.lane.b32.xlu0 %v1188, 120
      %v1191 = vpop.permute.xlu0 %1190
      %v1193 = vadd.f32 %v1090, %v1191
      %v1194 = vld [vmem:[%s481 + $0x8] sm:$0x1]
      %v1195 = vlaneseq
      %v1196 = vshrl.u32 %v1195, 7
      %v1197 = vsub.s32 0, %v1196
      %v1198 = vrot.slane %v1194, %v1197
      %1200 = vrot.lane.b32.xlu0 %v1198, 8
      %v1201 = vpop.permute.xlu0 %1200
      %v1203 = vmul.f32 %v991, %v1201
      %1205 = vrot.lane.b32.xlu0 %v1203, 120
      %v1206 = vpop.permute.xlu0 %1205
      %v1208 = vadd.f32 %v1097, %v1206
      %v1209 = vld [vmem:[%s493 + $0x8] sm:$0x1]
      %v1210 = vlaneseq
      %v1211 = vshrl.u32 %v1210, 7
      %v1212 = vsub.s32 0, %v1211
      %v1213 = vrot.slane %v1209, %v1212
      %1215 = vrot.lane.b32.xlu0 %v1213, 8
      %v1216 = vpop.permute.xlu0 %1215
      %v1218 = vmul.f32 %v991, %v1216
      %1220 = vrot.lane.b32.xlu0 %v1218, 120
      %v1221 = vpop.permute.xlu0 %1220
      %v1223 = vadd.f32 %v1104, %v1221
      %v1224 = vld [vmem:[%s505 + $0x8] sm:$0x1]
      %v1225 = vlaneseq
      %v1226 = vshrl.u32 %v1225, 7
      %v1227 = vsub.s32 0, %v1226
      %v1228 = vrot.slane %v1224, %v1227
      %1230 = vrot.lane.b32.xlu0 %v1228, 8
      %v1231 = vpop.permute.xlu0 %1230
      %v1233 = vmul.f32 %v991, %v1231
      %1235 = vrot.lane.b32.xlu0 %v1233, 120
      %v1236 = vpop.permute.xlu0 %1235
      %v1238 = vadd.f32 %v1111, %v1236
      %v1239 = vld [vmem:[%s517 + $0x8] sm:$0x1]
      %v1240 = vlaneseq
      %v1241 = vshrl.u32 %v1240, 7
      %v1242 = vsub.s32 0, %v1241
      %v1243 = vrot.slane %v1239, %v1242
      %1245 = vrot.lane.b32.xlu0 %v1243, 8
      %v1246 = vpop.permute.xlu0 %1245
      %v1248 = vmul.f32 %v991, %v1246
      %1250 = vrot.lane.b32.xlu0 %v1248, 120
      %v1251 = vpop.permute.xlu0 %1250
      %v1253 = vadd.f32 %v1118, %v1251
      %v1254 = vmul.f32 %v405, %v1133
      %v1255 = vmul.f32 %v1148, %v1208
      %v1256 = vmul.f32 %v1163, %v1223
      %v1257 = vadd.f32 %v1255, %v1256
      %v1258 = vmul.f32 %v1178, %v1238
      %v1259 = vmul.f32 %v1193, %v1253
      %v1260 = vadd.f32 %v1258, %v1259
      %vm1261 = vcmask 647168
      %1262 = vst.msk [vmem:[#allocation3] sm:$0x1] %vm1261, 0.0
      %1263 = vst.msk [vmem:[#allocation3 + $0x9] sm:$0x1] %vm1261, 0.0
      %1264 = vst.msk [vmem:[#allocation3 + $0x1] sm:$0xff] %vm359, 0.0
      %vm1265 = vcmask 654912
      %1266 = vst.msk [vmem:[#allocation3 + $0x1] sm:$0xff] %vm1265, 0.0
      %1268 = vrot.lane.b32.xlu0 %v1257, 8
      %v1269 = vpop.permute.xlu0 %1268
      %1271 = vst.msk [vmem:[#allocation3 + $0x1] sm:$0xff] %vm372, %v1269
      %s1272 = scalar_lea.vmem [#allocation3], 16
      %1273 = vst.msk [vmem:[%s1272] sm:$0x1] %vm1261, 0.0
      %1274 = vst.msk [vmem:[%s1272 + $0x9] sm:$0x1] %vm1261, 0.0
      %1275 = vst.msk [vmem:[%s1272 + $0x1] sm:$0xff] %vm359, 0.0
      %1276 = vst.msk [vmem:[%s1272 + $0x1] sm:$0xff] %vm1265, 0.0
      %1278 = vrot.lane.b32.xlu0 %v1260, 8
      %v1279 = vpop.permute.xlu0 %1278
      %1281 = vst.msk [vmem:[%s1272 + $0x1] sm:$0xff] %vm372, %v1279
      %v1282 = vld [vmem:[%s4 + $0x9] sm:$0x1]
      %v1283 = vld [vmem:[%s4 + $0xa] sm:$0x1]
      %v1284 = vld [vmem:[#allocation3] sm:$0xff]
      %s1285 = scalar_lea.vmem %s3, 144
      %v1286 = vld [vmem:[%s1285] sm:$0x1]
      %v1287 = vlaneseq
      %v1288 = vshrl.u32 %v1287, 7
      %v1289 = vsub.s32 0, %v1288
      %v1290 = vrot.slane %v1286, %v1289
      %v1291 = vmul.f32 %v1284, %v1290
      %v1292 = vlaneseq
      %v1293 = vshrl.u32 %v1292, 7
      %v1294 = vsub.s32 0, %v1293
      %v1295 = vrot.slane %v1282, %v1294
      %v1296 = vadd.f32 %v1295, %v1291
      %v1297 = vld [vmem:[%s1272] sm:$0xff]
      %s1298 = scalar_lea.vmem %s3, 160
      %v1299 = vld [vmem:[%s1298] sm:$0x1]
      %v1300 = vlaneseq
      %v1301 = vshrl.u32 %v1300, 7
      %v1302 = vsub.s32 0, %v1301
      %v1303 = vrot.slane %v1299, %v1302
      %v1304 = vmul.f32 %v1297, %v1303
      %v1305 = vlaneseq
      %v1306 = vshrl.u32 %v1305, 7
      %v1307 = vsub.s32 0, %v1306
      %v1308 = vrot.slane %v1283, %v1307
      %v1309 = vadd.f32 %v1308, %v1304
      %v1310 = vld [vmem:[%s1285 + $0x1] sm:$0x1]
      %v1311 = vlaneseq
      %v1312 = vshrl.u32 %v1311, 7
      %v1313 = vsub.s32 0, %v1312
      %v1314 = vrot.slane %v1310, %v1313
      %1316 = vrot.lane.b32.xlu0 %v1314, 8
      %v1317 = vpop.permute.xlu0 %1316
      %v1319 = vmul.f32 %v1284, %v1317
      %1321 = vrot.lane.b32.xlu0 %v1319, 120
      %v1322 = vpop.permute.xlu0 %1321
      %v1324 = vadd.f32 %v1296, %v1322
      %v1325 = vld [vmem:[%s1298 + $0x1] sm:$0x1]
      %v1326 = vlaneseq
      %v1327 = vshrl.u32 %v1326, 7
      %v1328 = vsub.s32 0, %v1327
      %v1329 = vrot.slane %v1325, %v1328
      %1331 = vrot.lane.b32.xlu0 %v1329, 8
      %v1332 = vpop.permute.xlu0 %1331
      %v1334 = vmul.f32 %v1297, %v1332
      %1336 = vrot.lane.b32.xlu0 %v1334, 120
      %v1337 = vpop.permute.xlu0 %1336
      %v1339 = vadd.f32 %v1309, %v1337
      %v1340 = vld [vmem:[%s1285 + $0x2] sm:$0x1]
      %v1341 = vlaneseq
      %v1342 = vshrl.u32 %v1341, 7
      %v1343 = vsub.s32 0, %v1342
      %v1344 = vrot.slane %v1340, %v1343
      %1346 = vrot.lane.b32.xlu0 %v1344, 16
      %v1347 = vpop.permute.xlu0 %1346
      %v1349 = vmul.f32 %v1284, %v1347
      %1351 = vrot.lane.b32.xlu0 %v1349, 112
      %v1352 = vpop.permute.xlu0 %1351
      %v1354 = vadd.f32 %v1324, %v1352
      %v1355 = vld [vmem:[%s1298 + $0x2] sm:$0x1]
      %v1356 = vlaneseq
      %v1357 = vshrl.u32 %v1356, 7
      %v1358 = vsub.s32 0, %v1357
      %v1359 = vrot.slane %v1355, %v1358
      %1361 = vrot.lane.b32.xlu0 %v1359, 16
      %v1362 = vpop.permute.xlu0 %1361
      %v1364 = vmul.f32 %v1297, %v1362
      %1366 = vrot.lane.b32.xlu0 %v1364, 112
      %v1367 = vpop.permute.xlu0 %1366
      %v1369 = vadd.f32 %v1339, %v1367
      %v1370 = vld [vmem:[#allocation3 + $0x1] sm:$0xff]
      %v1371 = vld [vmem:[%s1285 + $0x3] sm:$0x1]
      %v1372 = vlaneseq
      %v1373 = vshrl.u32 %v1372, 7
      %v1374 = vsub.s32 0, %v1373
      %v1375 = vrot.slane %v1371, %v1374
      %v1376 = vmul.f32 %v1370, %v1375
      %v1377 = vadd.f32 %v1354, %v1376
      %v1378 = vld [vmem:[%s1272 + $0x1] sm:$0xff]
      %v1379 = vld [vmem:[%s1298 + $0x3] sm:$0x1]
      %v1380 = vlaneseq
      %v1381 = vshrl.u32 %v1380, 7
      %v1382 = vsub.s32 0, %v1381
      %v1383 = vrot.slane %v1379, %v1382
      %v1384 = vmul.f32 %v1378, %v1383
      %v1385 = vadd.f32 %v1369, %v1384
      %v1386 = vld [vmem:[%s1285 + $0x4] sm:$0x1]
      %v1387 = vlaneseq
      %v1388 = vshrl.u32 %v1387, 7
      %v1389 = vsub.s32 0, %v1388
      %v1390 = vrot.slane %v1386, %v1389
      %1392 = vrot.lane.b32.xlu0 %v1390, 8
      %v1393 = vpop.permute.xlu0 %1392
      %v1395 = vmul.f32 %v1370, %v1393
      %1397 = vrot.lane.b32.xlu0 %v1395, 120
      %v1398 = vpop.permute.xlu0 %1397
      %v1400 = vadd.f32 %v1377, %v1398
      %v1401 = vld [vmem:[%s1298 + $0x4] sm:$0x1]
      %v1402 = vlaneseq
      %v1403 = vshrl.u32 %v1402, 7
      %v1404 = vsub.s32 0, %v1403
      %v1405 = vrot.slane %v1401, %v1404
      %1407 = vrot.lane.b32.xlu0 %v1405, 8
      %v1408 = vpop.permute.xlu0 %1407
      %v1410 = vmul.f32 %v1378, %v1408
      %1412 = vrot.lane.b32.xlu0 %v1410, 120
      %v1413 = vpop.permute.xlu0 %1412
      %v1415 = vadd.f32 %v1385, %v1413
      %v1416 = vld [vmem:[%s1285 + $0x5] sm:$0x1]
      %v1417 = vlaneseq
      %v1418 = vshrl.u32 %v1417, 7
      %v1419 = vsub.s32 0, %v1418
      %v1420 = vrot.slane %v1416, %v1419
      %1422 = vrot.lane.b32.xlu0 %v1420, 16
      %v1423 = vpop.permute.xlu0 %1422
      %v1425 = vmul.f32 %v1370, %v1423
      %1427 = vrot.lane.b32.xlu0 %v1425, 112
      %v1428 = vpop.permute.xlu0 %1427
      %v1430 = vadd.f32 %v1400, %v1428
      %v1431 = vld [vmem:[%s1298 + $0x5] sm:$0x1]
      %v1432 = vlaneseq
      %v1433 = vshrl.u32 %v1432, 7
      %v1434 = vsub.s32 0, %v1433
      %v1435 = vrot.slane %v1431, %v1434
      %1437 = vrot.lane.b32.xlu0 %v1435, 16
      %v1438 = vpop.permute.xlu0 %1437
      %v1440 = vmul.f32 %v1378, %v1438
      %1442 = vrot.lane.b32.xlu0 %v1440, 112
      %v1443 = vpop.permute.xlu0 %1442
      %v1445 = vadd.f32 %v1415, %v1443
      %v1446 = vld [vmem:[#allocation3 + $0x2] sm:$0xff]
      %v1447 = vld [vmem:[%s1285 + $0x6] sm:$0x1]
      %v1448 = vlaneseq
      %v1449 = vshrl.u32 %v1448, 7
      %v1450 = vsub.s32 0, %v1449
      %v1451 = vrot.slane %v1447, %v1450
      %v1452 = vmul.f32 %v1446, %v1451
      %v1453 = vadd.f32 %v1430, %v1452
      %v1454 = vld [vmem:[%s1272 + $0x2] sm:$0xff]
      %v1455 = vld [vmem:[%s1298 + $0x6] sm:$0x1]
      %v1456 = vlaneseq
      %v1457 = vshrl.u32 %v1456, 7
      %v1458 = vsub.s32 0, %v1457
      %v1459 = vrot.slane %v1455, %v1458
      %v1460 = vmul.f32 %v1454, %v1459
      %v1461 = vadd.f32 %v1445, %v1460
      %v1462 = vld [vmem:[%s1285 + $0x7] sm:$0x1]
      %v1463 = vlaneseq
      %v1464 = vshrl.u32 %v1463, 7
      %v1465 = vsub.s32 0, %v1464
      %v1466 = vrot.slane %v1462, %v1465
      %1468 = vrot.lane.b32.xlu0 %v1466, 8
      %v1469 = vpop.permute.xlu0 %1468
      %v1471 = vmul.f32 %v1446, %v1469
      %1473 = vrot.lane.b32.xlu0 %v1471, 120
      %v1474 = vpop.permute.xlu0 %1473
      %v1476 = vadd.f32 %v1453, %v1474
      %v1477 = vld [vmem:[%s1298 + $0x7] sm:$0x1]
      %v1478 = vlaneseq
      %v1479 = vshrl.u32 %v1478, 7
      %v1480 = vsub.s32 0, %v1479
      %v1481 = vrot.slane %v1477, %v1480
      %1483 = vrot.lane.b32.xlu0 %v1481, 8
      %v1484 = vpop.permute.xlu0 %1483
      %v1486 = vmul.f32 %v1454, %v1484
      %1488 = vrot.lane.b32.xlu0 %v1486, 120
      %v1489 = vpop.permute.xlu0 %1488
      %v1491 = vadd.f32 %v1461, %v1489
      %v1492 = vld [vmem:[%s1285 + $0x8] sm:$0x1]
      %v1493 = vlaneseq
      %v1494 = vshrl.u32 %v1493, 7
      %v1495 = vsub.s32 0, %v1494
      %v1496 = vrot.slane %v1492, %v1495
      %1498 = vrot.lane.b32.xlu0 %v1496, 16
      %v1499 = vpop.permute.xlu0 %1498
      %v1501 = vmul.f32 %v1446, %v1499
      %1503 = vrot.lane.b32.xlu0 %v1501, 112
      %v1504 = vpop.permute.xlu0 %1503
      %v1506 = vadd.f32 %v1476, %v1504
      %v1507 = vld [vmem:[%s1298 + $0x8] sm:$0x1]
      %v1508 = vlaneseq
      %v1509 = vshrl.u32 %v1508, 7
      %v1510 = vsub.s32 0, %v1509
      %v1511 = vrot.slane %v1507, %v1510
      %1513 = vrot.lane.b32.xlu0 %v1511, 16
      %v1514 = vpop.permute.xlu0 %1513
      %v1516 = vmul.f32 %v1454, %v1514
      %1518 = vrot.lane.b32.xlu0 %v1516, 112
      %v1519 = vpop.permute.xlu0 %1518
      %v1521 = vadd.f32 %v1491, %v1519
      %v1522 = vmul.f32 %v1257, %v1506
      %v1523 = vadd.f32 %v1254, %v1522
      %v1524 = vmul.f32 %v1260, %v1521
      %v1525 = vadd.f32 %v1523, %v1524
      %1526 = vst.msk [vmem:[%s222] sm:$0xff] %vm257, %v1525
      %p1527 = scmp.lt.s32.totalorder %s16, 1
      %s1528 = scalar_select %p1527, %s16, 1
      %s1529 = smul.addr %s1528, 8
      %s1530 = scalar_lea.vmem %s5, %s1529
      // Predicated region
      $region41: #{_lambda_.1} parent=39 // pred_check
        %p1531 = pneg %p144
      $region42: #{_lambda_.1} parent=39 // pred_check_branch
        %1533 = sbr.rel (%p1531) target = $region44
      $region43: #{_lambda_.1} parent=39 // pred_region
        _
      $region44: #{_lambda_.1} parent=39 // pred_fallthru
        _
    $region40: #{_lambda_.1} parent=5 // pred_fallthru
      _
    %p1534 = scmp.le.s32.totalorder 2, %s11
    // Predicated region
    $region45: #{_lambda_.1} parent=5 // pred_check
      %p1535 = pneg %p1534
    $region46: #{_lambda_.1} parent=5 // pred_check_branch
      %1537 = sbr.rel (%p1535) target = $region48
    $region47: #{_lambda_.1} parent=5 // pred_region
      %s1538 = ssub.s32 %s11, 2
      // Predicated region
      $region49: #{_lambda_.1} parent=47 // pred_check
        %p1539 = pneg %p150
      $region50: #{_lambda_.1} parent=47 // pred_check_branch
        %1541 = sbr.rel (%p1539) target = $region52
      $region51: #{_lambda_.1} parent=47 // pred_region
        %p1542 = scmp.lt.s32.totalorder %s17, 1
        %s1543 = scalar_select %p1542, %s17, 1
        %s1544 = smul.addr %s1543, 8
        %s1545 = scalar_lea.vmem %s5, %s1544
      $region52: #{_lambda_.1} parent=47 // pred_fallthru
        _
    $region48: #{_lambda_.1} parent=5 // pred_fallthru
      _
  $region6: #{_lambda_.1} parent=0 // loop_footer
    %s15 = sadd.s32 1, %s11
  $region7: #{_lambda_.1} parent=0 // loop_footer_branch
    %10 = sbr.rel target = $region3
  $region8: #{_lambda_.1} parent=0 // loop_exit
    _

</llo_original>
